<compile_context>
chip_gen: v5e
topology: v5e:2x2
jax: 0.10.0
libtpu: 0.0.40
codegen_flags: <defaults>
</compile_context>

<pallas_src>
import math

import jax
import jax.numpy as jnp
from jax.experimental import pallas as pl
from jax.experimental.pallas import tpu as pltpu


# ----------------------------------------------------------------------------
# In-kernel exact GELU (erf-based, matches torch.nn.functional.gelu default)
# ----------------------------------------------------------------------------
_INV_SQRT2 = 0.7071067811865475


def _gelu_exact(x):
    # erf via Abramowitz & Stegun 7.1.26 rational approximation (|err|<=1.5e-7)
    z = x * _INV_SQRT2
    az = jnp.abs(z)
    t = 1.0 / (1.0 + 0.3275911 * az)
    poly = t * (0.254829592
                + t * (-0.284496736
                       + t * (1.421413741
                              + t * (-1.453152027
                                     + t * 1.061405429))))
    erf_abs = 1.0 - poly * jnp.exp(-az * az)
    erf = jnp.where(z >= 0.0, erf_abs, -erf_abs)
    return 0.5 * x * (1.0 + erf)


# ----------------------------------------------------------------------------
# Fused FFN kernel: grid = (row_tiles, ff_tiles); ff axis is a reduction.
#   x_ref : (TM, Dp)    w1_ref: (Dp, TF)    b1_ref: (1, TF)
#   w2_ref: (TF, Dp)    b2_ref: (1, Dp)     o_ref : (TM, Dp)   acc: (TM, Dp) f32
# ----------------------------------------------------------------------------
def _ffn_kernel(x_ref, w1_ref, b1_ref, w2_ref, b2_ref, o_ref, acc_ref):
    j = pl.program_id(1)

    @pl.when(j == 0)
    def _init():
        acc_ref[...] = jnp.zeros_like(acc_ref)

    x = x_ref[...].astype(jnp.float32)
    h = jnp.dot(x, w1_ref[...].astype(jnp.float32),
                preferred_element_type=jnp.float32)
    h = h + b1_ref[...].astype(jnp.float32)
    h = _gelu_exact(h)
    acc_ref[...] += jnp.dot(h, w2_ref[...].astype(jnp.float32),
                            preferred_element_type=jnp.float32)

    @pl.when(j == pl.num_programs(1) - 1)
    def _finalize():
        o_ref[...] = (acc_ref[...]
                      + b2_ref[...].astype(jnp.float32)).astype(o_ref.dtype)


# ----------------------------------------------------------------------------
# Wrapper: PyTorch nn.Linear layout (weight = (out, in), y = x @ W.T + b)
# ----------------------------------------------------------------------------
def _round_up(x, m):
    return (x + m - 1) // m * m


def position_wise_feed_forward(x, w1, b1, w2, b2, *, tm=256, tf=256):
    """y = fc2(gelu(fc1(x))), fc1: (dim->ff_dim), fc2: (ff_dim->dim)."""
    D = x.shape[-1]
    FF = w1.shape[0]
    assert w1.shape == (FF, D) and b1.shape == (FF,)
    assert w2.shape == (D, FF) and b2.shape == (D,)

    lead = x.shape[:-1]
    M = int(math.prod(lead)) if lead else 1
    x2 = x.reshape(M, D)

    # Lane-dense padding: features -> multiples of 128, rows -> multiple of TM.
    Dp = _round_up(D, 128)
    tf = min(tf, _round_up(FF, 128))
    FFp = _round_up(FF, tf)
    tm = min(tm, _round_up(M, 8))
    Mp = _round_up(M, tm)

    xp = jnp.pad(x2, ((0, Mp - M), (0, Dp - D)))
    w1p = jnp.pad(w1.T, ((0, Dp - D), (0, FFp - FF)))      # (Dp, FFp)
    b1p = jnp.pad(b1, (0, FFp - FF)).reshape(1, FFp)
    w2p = jnp.pad(w2.T, ((0, FFp - FF), (0, Dp - D)))      # (FFp, Dp)
    b2p = jnp.pad(b2, (0, Dp - D)).reshape(1, Dp)
    # (Zero-padded feature columns / ff rows contribute exactly 0: gelu(0)=0.)

    grid = (Mp // tm, FFp // tf)

    yp = pl.pallas_call(
        _ffn_kernel,
        out_shape=jax.ShapeDtypeStruct((Mp, Dp), x.dtype),
        grid=grid,
        in_specs=[
            pl.BlockSpec((tm, Dp), lambda i, j: (i, 0)),   # x rows (resident over j)
            pl.BlockSpec((Dp, tf), lambda i, j: (0, j)),   # fc1 weight chunk
            pl.BlockSpec((1, tf), lambda i, j: (0, j)),    # fc1 bias chunk
            pl.BlockSpec((tf, Dp), lambda i, j: (j, 0)),   # fc2 weight chunk
            pl.BlockSpec((1, Dp), lambda i, j: (0, 0)),    # fc2 bias
        ],
        out_specs=pl.BlockSpec((tm, Dp), lambda i, j: (i, 0)),
        scratch_shapes=[pltpu.VMEM((tm, Dp), jnp.float32)],
        compiler_params=pltpu.CompilerParams(
            dimension_semantics=("parallel", "arbitrary")),
    )(xp, w1p, b1p, w2p, b2p)

    return yp[:M, :D].reshape(*lead, D)


# ----------------------------------------------------------------------------
# Pure-JAX reference (mirrors the PyTorch module exactly)
# ----------------------------------------------------------------------------
def _reference_ffn(x, w1, b1, w2, b2):
    h = jax.nn.gelu(x @ w1.T + b1, approximate=False)
    return h @ w2.T + b2


# ----------------------------------------------------------------------------
if __name__ == "__main__":
    # Small ViT-like shapes: batch=2, seq=256 tokens, dim=128, ff_dim=512.
    B, S, dim, ff_dim = 2, 256, 128, 512

    key = jax.random.PRNGKey(0)
    kx, k1w, k1b, k2w, k2b = jax.random.split(key, 5)

    x = jax.random.normal(kx, (B, S, dim), jnp.float32)

    # nn.Linear default init: U(-1/sqrt(fan_in), 1/sqrt(fan_in)).
    lim1 = 1.0 / math.sqrt(dim)
    lim2 = 1.0 / math.sqrt(ff_dim)
    w1 = jax.random.uniform(k1w, (ff_dim, dim), jnp.float32, -lim1, lim1)
    b1 = jax.random.uniform(k1b, (ff_dim,), jnp.float32, -lim1, lim1)
    w2 = jax.random.uniform(k2w, (dim, ff_dim), jnp.float32, -lim2, lim2)
    b2 = jax.random.uniform(k2b, (dim,), jnp.float32, -lim2, lim2)

    out = position_wise_feed_forward(x, w1, b1, w2, b2)
    out = jax.block_until_ready(out)

    assert out.shape == (B, S, dim), out.shape
    assert bool(jnp.all(jnp.isfinite(out)))

    ref = _reference_ffn(x, w1, b1, w2, b2)
    assert bool(jnp.allclose(out, ref, rtol=1e-3, atol=1e-3)), (
        float(jnp.max(jnp.abs(out - ref))))

    print("KERNEL_OK")
</pallas_src>

<mosaic_0001>
module attributes {stable_mosaic.version = 11 : i64} {
  func.func @_ffn_kernel(%arg0: i32, %arg1: i32, %arg2: memref<256x128xf32, #tpu.memory_space<vmem>>, %arg3: memref<128x256xf32, #tpu.memory_space<vmem>>, %arg4: memref<1x256xf32, #tpu.memory_space<vmem>>, %arg5: memref<256x128xf32, #tpu.memory_space<vmem>>, %arg6: memref<1x128xf32, #tpu.memory_space<vmem>>, %arg7: memref<256x128xf32, #tpu.memory_space<vmem>>, %arg8: memref<256x128xf32, #tpu.memory_space<vmem>>) attributes {dimension_semantics = [#tpu.dimension_semantics<parallel>, #tpu.dimension_semantics<arbitrary>], iteration_bounds = array<i64: 2, 2>, scalar_prefetch = 0 : i64, scratch_operands = 1 : i64, tpu.core_type = #tpu.core_type<tc>, window_params = [{transform_indices = @transform_0, window_bounds = array<i64: 256, 128>}, {transform_indices = @transform_1, window_bounds = array<i64: 128, 256>}, {transform_indices = @transform_2, window_bounds = array<i64: 1, 256>}, {transform_indices = @transform_3, window_bounds = array<i64: 256, 128>}, {pipeline_mode = #tpu.pipeline_mode<synchronous>, transform_indices = @transform_4, window_bounds = array<i64: 1, 128>}, {transform_indices = @transform_5, window_bounds = array<i64: 256, 128>}]} {
    %c0_i32 = arith.constant 0 : i32
    %0 = arith.cmpi eq, %arg1, %c0_i32 : i32
    %1 = arith.extui %0 : i1 to i32
    %c0_i32_0 = arith.constant 0 : i32
    %2 = arith.cmpi ne, %1, %c0_i32_0 : i32
    scf.if %2 {
      %cst_29 = arith.constant 0.000000e+00 : f32
      %57 = vector.broadcast %cst_29 : f32 to vector<256x128xf32>
      %c0_30 = arith.constant 0 : index
      %c0_31 = arith.constant 0 : index
      %58 = vector.load %arg8[%c0_30, %c0_31] : memref<256x128xf32, #tpu.memory_space<vmem>>, vector<256x128xf32>
      tpu.vector_store %arg8[%c0_30, %c0_31], %57 {strides = array<i32>} : memref<256x128xf32, #tpu.memory_space<vmem>>, vector<256x128xf32>,
    } else {
    }
    %c0 = arith.constant 0 : index
    %c0_1 = arith.constant 0 : index
    %3 = vector.load %arg2[%c0, %c0_1] : memref<256x128xf32, #tpu.memory_space<vmem>>, vector<256x128xf32>
    %c0_2 = arith.constant 0 : index
    %c0_3 = arith.constant 0 : index
    %4 = vector.load %arg3[%c0_2, %c0_3] : memref<128x256xf32, #tpu.memory_space<vmem>>, vector<128x256xf32>
    %cst = arith.constant dense<0.000000e+00> : vector<256x256xf32>
    %5 = tpu.matmul %3, %4, %cst {dimension_numbers = #tpu.dot_dimension_numbers<[1], [0], [0], [1], [0, 0, 1, 1], [], []>} : vector<256x128xf32>, vector<128x256xf32>, vector<256x256xf32> -> vector<256x256xf32>
    %c0_4 = arith.constant 0 : index
    %c0_5 = arith.constant 0 : index
    %6 = vector.load %arg4[%c0_4, %c0_5] : memref<1x256xf32, #tpu.memory_space<vmem>>, vector<1x256xf32>
    %7 = vector.broadcast %6 : vector<1x256xf32> to vector<256x256xf32>
    %8 = arith.addf %5, %7 : vector<256x256xf32>
    %cst_6 = arith.constant 0.707106769 : f32
    %9 = vector.broadcast %cst_6 : f32 to vector<256x256xf32>
    %10 = arith.mulf %8, %9 : vector<256x256xf32>
    %11 = math.absf %10 : vector<256x256xf32>
    %cst_7 = arith.constant 0.327591091 : f32
    %12 = vector.broadcast %cst_7 : f32 to vector<256x256xf32>
    %13 = arith.mulf %12, %11 : vector<256x256xf32>
    %cst_8 = arith.constant 1.000000e+00 : f32
    %14 = vector.broadcast %cst_8 : f32 to vector<256x256xf32>
    %15 = arith.addf %14, %13 : vector<256x256xf32>
    %cst_9 = arith.constant 1.000000e+00 : f32
    %16 = vector.broadcast %cst_9 : f32 to vector<256x256xf32>
    %17 = arith.divf %16, %15 : vector<256x256xf32>
    %cst_10 = arith.constant 1.06140542 : f32
    %18 = vector.broadcast %cst_10 : f32 to vector<256x256xf32>
    %19 = arith.mulf %17, %18 : vector<256x256xf32>
    %cst_11 = arith.constant -1.45315206 : f32
    %20 = vector.broadcast %cst_11 : f32 to vector<256x256xf32>
    %21 = arith.addf %20, %19 : vector<256x256xf32>
    %22 = arith.mulf %17, %21 : vector<256x256xf32>
    %cst_12 = arith.constant 1.42141378 : f32
    %23 = vector.broadcast %cst_12 : f32 to vector<256x256xf32>
    %24 = arith.addf %23, %22 : vector<256x256xf32>
    %25 = arith.mulf %17, %24 : vector<256x256xf32>
    %cst_13 = arith.constant -0.284496725 : f32
    %26 = vector.broadcast %cst_13 : f32 to vector<256x256xf32>
    %27 = arith.addf %26, %25 : vector<256x256xf32>
    %28 = arith.mulf %17, %27 : vector<256x256xf32>
    %cst_14 = arith.constant 0.254829586 : f32
    %29 = vector.broadcast %cst_14 : f32 to vector<256x256xf32>
    %30 = arith.addf %29, %28 : vector<256x256xf32>
    %31 = arith.mulf %17, %30 : vector<256x256xf32>
    %cst_15 = arith.constant 0.000000e+00 : f32
    %32 = vector.broadcast %cst_15 : f32 to vector<256x256xf32>
    %33 = arith.subf %32, %11 : vector<256x256xf32>
    %34 = arith.mulf %33, %11 : vector<256x256xf32>
    %35 = math.exp %34 : vector<256x256xf32>
    %36 = arith.mulf %31, %35 : vector<256x256xf32>
    %cst_16 = arith.constant 1.000000e+00 : f32
    %37 = vector.broadcast %cst_16 : f32 to vector<256x256xf32>
    %38 = arith.subf %37, %36 : vector<256x256xf32>
    %cst_17 = arith.constant 0.000000e+00 : f32
    %39 = vector.broadcast %cst_17 : f32 to vector<256x256xf32>
    %40 = arith.cmpf oge, %10, %39 : vector<256x256xf32>
    %cst_18 = arith.constant 0.000000e+00 : f32
    %41 = vector.broadcast %cst_18 : f32 to vector<256x256xf32>
    %42 = arith.subf %41, %38 : vector<256x256xf32>
    %43 = arith.select %40, %38, %42 : vector<256x256xi1>, vector<256x256xf32>
    %cst_19 = arith.constant 5.000000e-01 : f32
    %44 = vector.broadcast %cst_19 : f32 to vector<256x256xf32>
    %45 = arith.mulf %44, %8 : vector<256x256xf32>
    %cst_20 = arith.constant 1.000000e+00 : f32
    %46 = vector.broadcast %cst_20 : f32 to vector<256x256xf32>
    %47 = arith.addf %46, %43 : vector<256x256xf32>
    %48 = arith.mulf %45, %47 : vector<256x256xf32>
    %c0_21 = arith.constant 0 : index
    %c0_22 = arith.constant 0 : index
    %49 = vector.load %arg8[%c0_21, %c0_22] : memref<256x128xf32, #tpu.memory_space<vmem>>, vector<256x128xf32>
    %c0_23 = arith.constant 0 : index
    %c0_24 = arith.constant 0 : index
    %50 = vector.load %arg5[%c0_23, %c0_24] : memref<256x128xf32, #tpu.memory_space<vmem>>, vector<256x128xf32>
    %cst_25 = arith.constant dense<0.000000e+00> : vector<256x128xf32>
    %51 = tpu.matmul %48, %50, %cst_25 {dimension_numbers = #tpu.dot_dimension_numbers<[1], [0], [0], [1], [0, 0, 1, 1], [], []>} : vector<256x256xf32>, vector<256x128xf32>, vector<256x128xf32> -> vector<256x128xf32>
    %52 = arith.addf %49, %51 : vector<256x128xf32>
    %c0_26 = arith.constant 0 : index
    %c0_27 = arith.constant 0 : index
    %53 = vector.load %arg8[%c0_26, %c0_27] : memref<256x128xf32, #tpu.memory_space<vmem>>, vector<256x128xf32>
    tpu.vector_store %arg8[%c0_26, %c0_27], %52 {strides = array<i32>} : memref<256x128xf32, #tpu.memory_space<vmem>>, vector<256x128xf32>,
    %c1_i32 = arith.constant 1 : i32
    %54 = arith.cmpi eq, %arg1, %c1_i32 : i32
    %55 = arith.extui %54 : i1 to i32
    %c0_i32_28 = arith.constant 0 : i32
    %56 = arith.cmpi ne, %55, %c0_i32_28 : i32
    scf.if %56 {
      %c0_29 = arith.constant 0 : index
      %c0_30 = arith.constant 0 : index
      %57 = vector.load %arg8[%c0_29, %c0_30] : memref<256x128xf32, #tpu.memory_space<vmem>>, vector<256x128xf32>
      %c0_31 = arith.constant 0 : index
      %c0_32 = arith.constant 0 : index
      %58 = vector.load %arg6[%c0_31, %c0_32] : memref<1x128xf32, #tpu.memory_space<vmem>>, vector<1x128xf32>
      %59 = vector.broadcast %58 : vector<1x128xf32> to vector<256x128xf32>
      %60 = arith.addf %57, %59 : vector<256x128xf32>
      %c0_33 = arith.constant 0 : index
      %c0_34 = arith.constant 0 : index
      %61 = vector.load %arg7[%c0_33, %c0_34] : memref<256x128xf32, #tpu.memory_space<vmem>>, vector<256x128xf32>
      tpu.vector_store %arg7[%c0_33, %c0_34], %60 {strides = array<i32>} : memref<256x128xf32, #tpu.memory_space<vmem>>, vector<256x128xf32>,
    } else {
    }
    return
  }
  func.func @transform_0(%arg0: i32, %arg1: i32) -> (i32, i32) {
    %c0_i32 = arith.constant 0 : i32
    %c0_i32_0 = arith.constant 0 : i32
    return %arg0, %c0_i32 : i32, i32
  }
  func.func @transform_1(%arg0: i32, %arg1: i32) -> (i32, i32) {
    %c0_i32 = arith.constant 0 : i32
    %c0_i32_0 = arith.constant 0 : i32
    return %c0_i32, %arg1 : i32, i32
  }
  func.func @transform_2(%arg0: i32, %arg1: i32) -> (i32, i32) {
    %c0_i32 = arith.constant 0 : i32
    %c0_i32_0 = arith.constant 0 : i32
    return %c0_i32, %arg1 : i32, i32
  }
  func.func @transform_3(%arg0: i32, %arg1: i32) -> (i32, i32) {
    %c0_i32 = arith.constant 0 : i32
    %c0_i32_0 = arith.constant 0 : i32
    return %arg1, %c0_i32 : i32, i32
  }
  func.func @transform_4(%arg0: i32, %arg1: i32) -> (i32, i32) {
    %c0_i32 = arith.constant 0 : i32
    %c0_i32_0 = arith.constant 0 : i32
    %c0_i32_1 = arith.constant 0 : i32
    return %c0_i32, %c0_i32_0 : i32, i32
  }
  func.func @transform_5(%arg0: i32, %arg1: i32) -> (i32, i32) {
    %c0_i32 = arith.constant 0 : i32
    %c0_i32_0 = arith.constant 0 : i32
    return %arg0, %c0_i32 : i32, i32
  }
}

</mosaic_0001>

<llo_original>
// kernel: tpu_custom_call.1
$region0: #{tpu_custom_call.1}
  #allocation0 [shape = 'u32[]', space=smem, size = 0x4, offset = 0x4, fixed_abs, tag = 'smem constant byte address 0x4 - core index']
  #allocation1 [shape = 'u32[72,128]{1,0:T(1,128)}', space=vmem, size = 0x9000, scoped, tag = 'internal scratch']
  #allocation2 [shape = 'f32[256,128]{1,0:T(8,128)}', space=vmem, size = 0x20000, scoped, tag = 'scratch operand']
  %s0 = inlined_call_operand.hbm [shape: f32[512,128], index: 0, kind: input, shape index: {}]
  %s1 = inlined_call_operand.hbm [shape: f32[128,512], index: 1, kind: input, shape index: {}]
  %s2 = inlined_call_operand.hbm [shape: f32[1,512], index: 2, kind: input, shape index: {}]
  %s3 = inlined_call_operand.hbm [shape: f32[512,128], index: 3, kind: input, shape index: {}]
  %s4 = inlined_call_operand.vmem [shape: f32[1,128], index: 4, kind: input, shape index: {}]
  %s5 = inlined_call_operand.hbm [shape: f32[512,128], index: 5, kind: output, shape index: {}]
  %s6 = sld [smem:[#allocation0]]
  $region77: #{tpu_custom_call.1} parent=0
    _
  %s8 = ssub.s32 1, %s6
  %s9 = scalar_select 0, %s8, %s6
  $region1: #{tpu_custom_call.1} parent=0
    #allocation3 [shape = 'u8[262144]{0}', space=vmem, size = 0x40000, scoped, tag = 'input window, operand 0']
    #allocation4 [shape = 's32[2]{0}', space=sflag, size = 0x8, scoped, tag = 'scoped memory for tpu_custom_call.1']
    #allocation5 [shape = 's32[2]{0}', space=sflag, size = 0x8, scoped, tag = 'scoped memory for tpu_custom_call.1']
    #allocation6 [shape = 'u8[262144]{0}', space=vmem, size = 0x40000, scoped, tag = 'input window, operand 1']
    #allocation7 [shape = 's32[2]{0}', space=sflag, size = 0x8, scoped, tag = 'scoped memory for tpu_custom_call.1']
    #allocation8 [shape = 'u8[2048]{0}', space=vmem, size = 0x800, scoped, tag = 'input window, operand 2']
    #allocation9 [shape = 'u8[262144]{0}', space=vmem, size = 0x40000, scoped, tag = 'input window, operand 3']
    #allocation10 [shape = 's32[2]{0}', space=sflag, size = 0x8, scoped, tag = 'scoped memory for tpu_custom_call.1']
    #allocation11 [shape = 'u8[262144]{0}', space=vmem, size = 0x40000, scoped, tag = 'output window, operand 0']
    %10 = vsyncpa [#allocation4], 0
    %s11 = scalar_lea.sflag [#allocation4], 1
    %12 = vsyncpa %s11, 0
    %13 = vsyncpa [#allocation7], 0
    %s14 = scalar_lea.sflag [#allocation7], 1
    %15 = vsyncpa %s14, 0
    %16 = vsyncpa [#allocation10], 0
    %s17 = scalar_lea.sflag [#allocation10], 1
    %18 = vsyncpa %s17, 0
    %19 = vsyncpa [#allocation5], 0
    %s20 = scalar_lea.sflag [#allocation5], 1
    %21 = vsyncpa %s20, 0
    loop: start=0, step=1, limit=6
    $region2: #{tpu_custom_call.1} parent=1 // loop_pre_header
      _
    $region3: #{tpu_custom_call.1} parent=1 // loop_header
      %s23 = sphi 0, %s27
      %p24 = scmp.ge.s32.totalorder %s23, 6
      %s30 = sphi 0, %s42
      %s31 = sphi 0, %s38
      %s32 = sphi 0, %s30
      %s33 = sphi 0, %s31
      %s34 = sphi 0, %s32
      %s35 = sphi 0, %s33
      %s45 = sphi 0, %s47
      %s48 = sphi 0, %s45
      %s49 = sphi 0, %s48
      %s65 = sphi 0, %s49
      %s71 = sphi 0, %s73
      %s74 = sphi 0, %s71
      %s75 = sphi 0, %s74
      %s91 = sphi 0, %s75
      %s97 = sphi 0, %s99
      %s100 = sphi 0, %s97
      %s101 = sphi 0, %s100
      %s117 = sphi 0, %s101
      %s123 = sphi 0, %s125
      %s126 = sphi 0, %s123
      %s127 = sphi 0, %s126
      %s143 = sphi 0, %s127
      %s147 = sphi 0, %s147
      %s149 = sphi 0, %s147
      %s150 = sphi 0, %s149
      %s164 = sphi 0, %s150
      %s170 = sphi 0, %s172
      %s173 = sphi 0, %s170
      %s174 = sphi 0, %s173
      %s190 = sphi 0, %s174
    $region4: #{tpu_custom_call.1} parent=1 // loop_header_branch
      %26 = sbr.rel (%p24) target = $region8
    $region5: #{tpu_custom_call.1} parent=1 // loop_body
      %s28 = ssub.s32 %s23, 1
      %s29 = ssub.s32 %s23, 2
      %s36 = sadd.s32 1, %s31
      %p37 = scmp.ge.s32.totalorder %s36, 2
      %s38 = scalar_select %p37, 0, %s36
      %s39 = sadd.s32 1, %s30
      %s40 = scalar_select %p37, %s39, %s30
      %p41 = scmp.ge.s32.totalorder %s40, 2
      %s42 = scalar_select %p41, 0, %s40
      %s43 = ssub.s32 %s30, %s42
      %p44 = scmp.eq.s32.totalorder %s43, 0
      %s46 = sadd.s32 %s45, 1
      %s47 = scalar_select %p44, %s45, %s46
      %p50 = pneg %p44
      %p51 = scmp.eq.s32.totalorder %s23, 3
      %p52 = por %p50, %p51
      %p53 = scmp.ne.s32.totalorder %s45, %s48
      %p54 = scmp.eq.s32.totalorder %s23, 0
      %p55 = por %p53, %p54
      %p56 = scmp.ne.s32.totalorder %s45, %s48
      %p57 = scmp.eq.s32.totalorder %s28, 3
      %p58 = por %p56, %p57
      %p59 = scmp.ne.s32.totalorder %s48, %s49
      %p60 = scmp.eq.s32.totalorder %s28, 0
      %p61 = por %p59, %p60
      %p62 = scmp.ne.s32.totalorder %s48, %s49
      %p63 = scmp.eq.s32.totalorder %s29, 3
      %p64 = por %p62, %p63
      %p66 = scmp.ne.s32.totalorder %s49, %s65
      %p67 = scmp.eq.s32.totalorder %s29, 0
      %p68 = por %p66, %p67
      %s69 = ssub.s32 %s31, %s38
      %p70 = scmp.eq.s32.totalorder %s69, 0
      %s72 = sadd.s32 %s71, 1
      %s73 = scalar_select %p70, %s71, %s72
      %p76 = pneg %p70
      %p77 = scmp.eq.s32.totalorder %s23, 3
      %p78 = por %p76, %p77
      %p79 = scmp.ne.s32.totalorder %s71, %s74
      %p80 = scmp.eq.s32.totalorder %s23, 0
      %p81 = por %p79, %p80
      %p82 = scmp.ne.s32.totalorder %s71, %s74
      %p83 = scmp.eq.s32.totalorder %s28, 3
      %p84 = por %p82, %p83
      %p85 = scmp.ne.s32.totalorder %s74, %s75
      %p86 = scmp.eq.s32.totalorder %s28, 0
      %p87 = por %p85, %p86
      %p88 = scmp.ne.s32.totalorder %s74, %s75
      %p89 = scmp.eq.s32.totalorder %s29, 3
      %p90 = por %p88, %p89
      %p92 = scmp.ne.s32.totalorder %s75, %s91
      %p93 = scmp.eq.s32.totalorder %s29, 0
      %p94 = por %p92, %p93
      %s95 = ssub.s32 %s31, %s38
      %p96 = scmp.eq.s32.totalorder %s95, 0
      %s98 = sadd.s32 %s97, 1
      %s99 = scalar_select %p96, %s97, %s98
      %p102 = pneg %p96
      %p103 = scmp.eq.s32.totalorder %s23, 3
      %p104 = por %p102, %p103
      %p105 = scmp.ne.s32.totalorder %s97, %s100
      %p106 = scmp.eq.s32.totalorder %s23, 0
      %p107 = por %p105, %p106
      %p108 = scmp.ne.s32.totalorder %s97, %s100
      %p109 = scmp.eq.s32.totalorder %s28, 3
      %p110 = por %p108, %p109
      %p111 = scmp.ne.s32.totalorder %s100, %s101
      %p112 = scmp.eq.s32.totalorder %s28, 0
      %p113 = por %p111, %p112
      %p114 = scmp.ne.s32.totalorder %s100, %s101
      %p115 = scmp.eq.s32.totalorder %s29, 3
      %p116 = por %p114, %p115
      %p118 = scmp.ne.s32.totalorder %s101, %s117
      %p119 = scmp.eq.s32.totalorder %s29, 0
      %p120 = por %p118, %p119
      %s121 = ssub.s32 %s31, %s38
      %p122 = scmp.eq.s32.totalorder %s121, 0
      %s124 = sadd.s32 %s123, 1
      %s125 = scalar_select %p122, %s123, %s124
      %p128 = pneg %p122
      %p129 = scmp.eq.s32.totalorder %s23, 3
      %p130 = por %p128, %p129
      %p131 = scmp.ne.s32.totalorder %s123, %s126
      %p132 = scmp.eq.s32.totalorder %s23, 0
      %p133 = por %p131, %p132
      %p134 = scmp.ne.s32.totalorder %s123, %s126
      %p135 = scmp.eq.s32.totalorder %s28, 3
      %p136 = por %p134, %p135
      %p137 = scmp.ne.s32.totalorder %s126, %s127
      %p138 = scmp.eq.s32.totalorder %s28, 0
      %p139 = por %p137, %p138
      %p140 = scmp.ne.s32.totalorder %s126, %s127
      %p141 = scmp.eq.s32.totalorder %s29, 3
      %p142 = por %p140, %p141
      %p144 = scmp.ne.s32.totalorder %s127, %s143
      %p145 = scmp.eq.s32.totalorder %s29, 0
      %p146 = por %p144, %p145
      %s148 = sadd.s32 %s147, 1
      %p151 = scmp.eq.s32.totalorder %s23, 3
      %p152 = scmp.ne.s32.totalorder %s147, %s149
      %p153 = scmp.eq.s32.totalorder %s23, 0
      %p154 = por %p152, %p153
      %p155 = scmp.ne.s32.totalorder %s147, %s149
      %p156 = scmp.eq.s32.totalorder %s28, 3
      %p157 = por %p155, %p156
      %p158 = scmp.ne.s32.totalorder %s149, %s150
      %p159 = scmp.eq.s32.totalorder %s28, 0
      %p160 = por %p158, %p159
      %p161 = scmp.ne.s32.totalorder %s149, %s150
      %p162 = scmp.eq.s32.totalorder %s29, 3
      %p163 = por %p161, %p162
      %p165 = scmp.ne.s32.totalorder %s150, %s164
      %p166 = scmp.eq.s32.totalorder %s29, 0
      %p167 = por %p165, %p166
      %s168 = ssub.s32 %s30, %s42
      %p169 = scmp.eq.s32.totalorder %s168, 0
      %s171 = sadd.s32 %s170, 1
      %s172 = scalar_select %p169, %s170, %s171
      %p175 = pneg %p169
      %p176 = scmp.eq.s32.totalorder %s23, 3
      %p177 = por %p175, %p176
      %p178 = scmp.ne.s32.totalorder %s170, %s173
      %p179 = scmp.eq.s32.totalorder %s23, 0
      %p180 = por %p178, %p179
      %p181 = scmp.ne.s32.totalorder %s170, %s173
      %p182 = scmp.eq.s32.totalorder %s28, 3
      %p183 = por %p181, %p182
      %p184 = scmp.ne.s32.totalorder %s173, %s174
      %p185 = scmp.eq.s32.totalorder %s28, 0
      %p186 = por %p184, %p185
      %p187 = scmp.ne.s32.totalorder %s173, %s174
      %p188 = scmp.eq.s32.totalorder %s29, 3
      %p189 = por %p187, %p188
      %p191 = scmp.ne.s32.totalorder %s174, %s190
      %p192 = scmp.eq.s32.totalorder %s29, 0
      %p193 = por %p191, %p192
      %p194 = scmp.le.s32.totalorder 1, %s23
      %p195 = scmp.lt.s32.totalorder %s23, 5
      %p196 = pnand %p194, %p195
      %p197 = pneg %p196
      // Predicated region
      $region9: #{tpu_custom_call.1} parent=5 // pred_check
        _
      $region10: #{tpu_custom_call.1} parent=5 // pred_check_branch
        %199 = sbr.rel (%p196) target = $region12
      $region11: #{tpu_custom_call.1} parent=5 // pred_region
        %s200 = ssub.s32 %s23, 1
        // Predicated region
        $region13: #{tpu_custom_call.1} parent=11 // pred_check
          %p201 = pneg %p160
        $region14: #{tpu_custom_call.1} parent=11 // pred_check_branch
          %203 = sbr.rel (%p201) target = $region16
        $region15: #{tpu_custom_call.1} parent=11 // pred_region
          _
        $region16: #{tpu_custom_call.1} parent=11 // pred_fallthru
          _
      $region12: #{tpu_custom_call.1} parent=5 // pred_fallthru
        _
      %p204 = scmp.lt.s32.totalorder %s23, 4
      // Predicated region
      $region17: #{tpu_custom_call.1} parent=5 // pred_check
        %p205 = pneg %p204
      $region18: #{tpu_custom_call.1} parent=5 // pred_check_branch
        %207 = sbr.rel (%p205) target = $region20
      $region19: #{tpu_custom_call.1} parent=5 // pred_region
        // Predicated region
        $region21: #{tpu_custom_call.1} parent=19 // pred_check
          %p208 = pneg %p55
        $region22: #{tpu_custom_call.1} parent=19 // pred_check_branch
          %210 = sbr.rel (%p208) target = $region24
        $region23: #{tpu_custom_call.1} parent=19 // pred_region
          %s211 = sand.u32 %s45, 1
          %s212 = scalar_lea.sflag [#allocation4], %s211
          %s213 = sand.u32 %s45, 1
          %s214 = smul.addr %s213, 256
          %s215 = scalar_lea.vmem [#allocation3], %s214
          %s216 = smul.u32 32, %s30
          %218 = vsyncadd %s212, 0
          %s219 = smul.addr %s216, 8
          %s220 = scalar_lea.hbm %s0, %s219
          %s221 = sshll.u32 %s220, 4
          %s222 = int_to_ptr.hbm [resolvable:$true] %s221
          %s223 = sshll.u32 %s215, 4
          %s224 = int_to_ptr.vmem [resolvable:$true] %s223
          %229 = dma.hbm_to_vmem [thread:$0]  %s222, 4096, %s224, %s212, 128, 128, 8
        $region24: #{tpu_custom_call.1} parent=19 // pred_fallthru
          _
        // Predicated region
        $region25: #{tpu_custom_call.1} parent=19 // pred_check
          %p230 = pneg %p81
        $region26: #{tpu_custom_call.1} parent=19 // pred_check_branch
          %232 = sbr.rel (%p230) target = $region28
        $region27: #{tpu_custom_call.1} parent=19 // pred_region
          %s233 = sand.u32 %s23, 1
          %s234 = scalar_lea.sflag [#allocation7], %s233
          %s235 = sand.u32 %s71, 1
          %s236 = smul.addr %s235, 256
          %s237 = scalar_lea.vmem [#allocation6], %s236
          %s238 = smul.u32 2, %s31
          %240 = vsyncadd %s234, 0
          %s241 = smul.addr %s238, 8
          %s242 = scalar_lea.hbm %s1, %s241
          %s243 = sshll.u32 %s242, 4
          %s244 = int_to_ptr.hbm [resolvable:$true] %s243
          %s245 = sshll.u32 %s237, 4
          %s246 = int_to_ptr.vmem [resolvable:$true] %s245
          %251 = dma.hbm_to_vmem [thread:$0]  %s244, 4096, %s246, %s234, 512, 256, 16
        $region28: #{tpu_custom_call.1} parent=19 // pred_fallthru
          _
        // Predicated region
        $region29: #{tpu_custom_call.1} parent=19 // pred_check
          %p252 = pneg %p107
        $region30: #{tpu_custom_call.1} parent=19 // pred_check_branch
          %254 = sbr.rel (%p252) target = $region32
        $region31: #{tpu_custom_call.1} parent=19 // pred_region
          %s255 = sand.u32 %s23, 1
          %s256 = scalar_lea.sflag [#allocation7], %s255
          %s257 = sand.u32 %s97, 1
          %s258 = smul.addr %s257, 2
          %s259 = scalar_lea.vmem [#allocation8], %s258
          %s260 = smul.u32 2, %s31
          %262 = vsyncadd %s256, 0
          %s263 = scalar_lea.hbm %s2, %s260
          %s265 = sshll.u32 %s263, 4
          %s266 = int_to_ptr.hbm [resolvable:$true] %s265
          %s267 = sshll.u32 %s259, 4
          %s268 = int_to_ptr.vmem [resolvable:$true] %s267
          %270 = dma.hbm_to_vmem [thread:$0]  %s266, 32, %s268, %s256
        $region32: #{tpu_custom_call.1} parent=19 // pred_fallthru
          _
        // Predicated region
        $region33: #{tpu_custom_call.1} parent=19 // pred_check
          %p271 = pneg %p133
        $region34: #{tpu_custom_call.1} parent=19 // pred_check_branch
          %273 = sbr.rel (%p271) target = $region36
        $region35: #{tpu_custom_call.1} parent=19 // pred_region
          %s274 = sand.u32 %s123, 1
          %s275 = scalar_lea.sflag [#allocation10], %s274
          %s276 = sand.u32 %s123, 1
          %s277 = smul.addr %s276, 256
          %s278 = scalar_lea.vmem [#allocation9], %s277
          %s279 = smul.u32 32, %s31
          %281 = vsyncadd %s275, 0
          %s282 = smul.addr %s279, 8
          %s283 = scalar_lea.hbm %s3, %s282
          %s284 = sshll.u32 %s283, 4
          %s285 = int_to_ptr.hbm [resolvable:$true] %s284
          %s286 = sshll.u32 %s278, 4
          %s287 = int_to_ptr.vmem [resolvable:$true] %s286
          %292 = dma.hbm_to_vmem [thread:$0]  %s285, 4096, %s287, %s275, 128, 128, 8
        $region36: #{tpu_custom_call.1} parent=19 // pred_fallthru
          _
      $region20: #{tpu_custom_call.1} parent=5 // pred_fallthru
        _
      %p293 = scmp.le.s32.totalorder 1, %s23
      %p294 = scmp.lt.s32.totalorder %s23, 5
      %p295 = pnand %p293, %p294
      %p296 = pneg %p295
      // Predicated region
      $region37: #{tpu_custom_call.1} parent=5 // pred_check
        _
      $region38: #{tpu_custom_call.1} parent=5 // pred_check_branch
        %298 = sbr.rel (%p295) target = $region40
      $region39: #{tpu_custom_call.1} parent=5 // pred_region
        %s299 = ssub.s32 %s23, 1
        %s300 = sand.u32 %s48, 1
        %s301 = scalar_lea.sflag [#allocation4], %s300
        %s302 = sand.u32 %s48, 1
        %s303 = smul.addr %s302, 256
        %s304 = scalar_lea.vmem [#allocation3], %s303
        // Predicated region
        $region41: #{tpu_custom_call.1} parent=39 // pred_check
          %p305 = pneg %p61
        $region42: #{tpu_custom_call.1} parent=39 // pred_check_branch
          %307 = sbr.rel (%p305) target = $region44
        $region43: #{tpu_custom_call.1} parent=39 // pred_region
          %309 = dma.done %s301, 4096
        $region44: #{tpu_custom_call.1} parent=39 // pred_fallthru
          _
        %s310 = sand.u32 %s28, 1
        %s311 = scalar_lea.sflag [#allocation7], %s310
        %s312 = sand.u32 %s74, 1
        %s313 = smul.addr %s312, 256
        %s314 = scalar_lea.vmem [#allocation6], %s313
        // Predicated region
        $region45: #{tpu_custom_call.1} parent=39 // pred_check
          %p315 = pneg %p87
        $region46: #{tpu_custom_call.1} parent=39 // pred_check_branch
          %317 = sbr.rel (%p315) target = $region48
        $region47: #{tpu_custom_call.1} parent=39 // pred_region
          %319 = dma.done %s311, 4096
        $region48: #{tpu_custom_call.1} parent=39 // pred_fallthru
          _
        %s320 = sand.u32 %s28, 1
        %s321 = scalar_lea.sflag [#allocation7], %s320
        %s322 = sand.u32 %s100, 1
        %s323 = smul.addr %s322, 2
        %s324 = scalar_lea.vmem [#allocation8], %s323
        // Predicated region
        $region49: #{tpu_custom_call.1} parent=39 // pred_check
          %p325 = pneg %p113
        $region50: #{tpu_custom_call.1} parent=39 // pred_check_branch
          %327 = sbr.rel (%p325) target = $region52
        $region51: #{tpu_custom_call.1} parent=39 // pred_region
          %329 = dma.done %s321, 32
        $region52: #{tpu_custom_call.1} parent=39 // pred_fallthru
          _
        %s330 = sand.u32 %s126, 1
        %s331 = scalar_lea.sflag [#allocation10], %s330
        %s332 = sand.u32 %s126, 1
        %s333 = smul.addr %s332, 256
        %s334 = scalar_lea.vmem [#allocation9], %s333
        // Predicated region
        $region53: #{tpu_custom_call.1} parent=39 // pred_check
          %p335 = pneg %p139
        $region54: #{tpu_custom_call.1} parent=39 // pred_check_branch
          %337 = sbr.rel (%p335) target = $region56
        $region55: #{tpu_custom_call.1} parent=39 // pred_region
          %339 = dma.done %s331, 4096
        $region56: #{tpu_custom_call.1} parent=39 // pred_fallthru
          _
        %s340 = sand.u32 %s48, 1
        %s341 = scalar_lea.sflag [#allocation4], %s340
        %s342 = sand.u32 %s48, 1
        %s343 = smul.addr %s342, 256
        %s344 = scalar_lea.vmem [#allocation3], %s343
        %p345 = pneg %p61
        %p346 = pneg %p58
        %s347 = sand.u32 %s28, 1
        %s348 = scalar_lea.sflag [#allocation7], %s347
        %s349 = sand.u32 %s74, 1
        %s350 = smul.addr %s349, 256
        %s351 = scalar_lea.vmem [#allocation6], %s350
        %p352 = pneg %p87
        %p353 = pneg %p84
        %s354 = sand.u32 %s28, 1
        %s355 = scalar_lea.sflag [#allocation7], %s354
        %s356 = sand.u32 %s100, 1
        %s357 = smul.addr %s356, 2
        %s358 = scalar_lea.vmem [#allocation8], %s357
        %p359 = pneg %p113
        %p360 = pneg %p110
        %s361 = sand.u32 %s126, 1
        %s362 = scalar_lea.sflag [#allocation10], %s361
        %s363 = sand.u32 %s126, 1
        %s364 = smul.addr %s363, 256
        %s365 = scalar_lea.vmem [#allocation9], %s364
        %p366 = pneg %p139
        %p367 = pneg %p136
        %p368 = pneg %p160
        %p369 = pneg %p157
        %p370 = pneg %p186
        %p371 = pneg %p183
        %s372 = sand.u32 %s173, 1
        %s373 = scalar_lea.sflag [#allocation5], %s372
        %s374 = sand.u32 %s173, 1
        %s375 = smul.addr %s374, 256
        %s376 = scalar_lea.vmem [#allocation11], %s375
        %s377 = smul.u32 32, %s32
        %s378 = smul.u32 2, %s33
        %s379 = smul.u32 2, %s33
        %s380 = smul.u32 32, %s33
        %s381 = smul.u32 32, %s32
        %p382 = scmp.eq.s32.totalorder %s33, 0
        // Predicated region
        $region57: #{tpu_custom_call.1} parent=39 // pred_check
          %p383 = pneg %p382
        $region58: #{tpu_custom_call.1} parent=39 // pred_check_branch
          %385 = sbr.rel (%p383) target = $region60
        $region59: #{tpu_custom_call.1} parent=39 // pred_region
          %386 = vst [vmem:[#allocation2] sm:$0xff] 0.0
          %387 = vst [vmem:[#allocation2 + $0x8] sm:$0xff] 0.0
          %388 = vst [vmem:[#allocation2 + $0x10] sm:$0xff] 0.0
          %389 = vst [vmem:[#allocation2 + $0x18] sm:$0xff] 0.0
          %390 = vst [vmem:[#allocation2 + $0x20] sm:$0xff] 0.0
          %391 = vst [vmem:[#allocation2 + $0x28] sm:$0xff] 0.0
          %392 = vst [vmem:[#allocation2 + $0x30] sm:$0xff] 0.0
          %393 = vst [vmem:[#allocation2 + $0x38] sm:$0xff] 0.0
          %394 = vst [vmem:[#allocation2 + $0x40] sm:$0xff] 0.0
          %395 = vst [vmem:[#allocation2 + $0x48] sm:$0xff] 0.0
          %396 = vst [vmem:[#allocation2 + $0x50] sm:$0xff] 0.0
          %397 = vst [vmem:[#allocation2 + $0x58] sm:$0xff] 0.0
          %398 = vst [vmem:[#allocation2 + $0x60] sm:$0xff] 0.0
          %399 = vst [vmem:[#allocation2 + $0x68] sm:$0xff] 0.0
          %400 = vst [vmem:[#allocation2 + $0x70] sm:$0xff] 0.0
          %401 = vst [vmem:[#allocation2 + $0x78] sm:$0xff] 0.0
          %402 = vst [vmem:[#allocation2 + $0x80] sm:$0xff] 0.0
          %403 = vst [vmem:[#allocation2 + $0x88] sm:$0xff] 0.0
          %404 = vst [vmem:[#allocation2 + $0x90] sm:$0xff] 0.0
          %405 = vst [vmem:[#allocation2 + $0x98] sm:$0xff] 0.0
          %406 = vst [vmem:[#allocation2 + $0xa0] sm:$0xff] 0.0
          %407 = vst [vmem:[#allocation2 + $0xa8] sm:$0xff] 0.0
          %408 = vst [vmem:[#allocation2 + $0xb0] sm:$0xff] 0.0
          %409 = vst [vmem:[#allocation2 + $0xb8] sm:$0xff] 0.0
          %410 = vst [vmem:[#allocation2 + $0xc0] sm:$0xff] 0.0
          %411 = vst [vmem:[#allocation2 + $0xc8] sm:$0xff] 0.0
          %412 = vst [vmem:[#allocation2 + $0xd0] sm:$0xff] 0.0
          %413 = vst [vmem:[#allocation2 + $0xd8] sm:$0xff] 0.0
          %414 = vst [vmem:[#allocation2 + $0xe0] sm:$0xff] 0.0
          %415 = vst [vmem:[#allocation2 + $0xe8] sm:$0xff] 0.0
          %416 = vst [vmem:[#allocation2 + $0xf0] sm:$0xff] 0.0
          %417 = vst [vmem:[#allocation2 + $0xf8] sm:$0xff] 0.0
        $region60: #{tpu_custom_call.1} parent=39 // pred_fallthru
          _
        %v418 = vld [vmem:[%s304] sm:$0xff]
        %v419 = vld [vmem:[%s304 + $0x8] sm:$0xff]
        %v420 = vld [vmem:[%s304 + $0x10] sm:$0xff]
        %v421 = vld [vmem:[%s304 + $0x18] sm:$0xff]
        %v422 = vld [vmem:[%s304 + $0x20] sm:$0xff]
        %v423 = vld [vmem:[%s304 + $0x28] sm:$0xff]
        %v424 = vld [vmem:[%s304 + $0x30] sm:$0xff]
        %v425 = vld [vmem:[%s304 + $0x38] sm:$0xff]
        %v426 = vld [vmem:[%s304 + $0x40] sm:$0xff]
        %v427 = vld [vmem:[%s304 + $0x48] sm:$0xff]
        %v428 = vld [vmem:[%s304 + $0x50] sm:$0xff]
        %v429 = vld [vmem:[%s304 + $0x58] sm:$0xff]
        %v430 = vld [vmem:[%s304 + $0x60] sm:$0xff]
        %v431 = vld [vmem:[%s304 + $0x68] sm:$0xff]
        %v432 = vld [vmem:[%s304 + $0x70] sm:$0xff]
        %v433 = vld [vmem:[%s304 + $0x78] sm:$0xff]
        %v434 = vld [vmem:[%s304 + $0x80] sm:$0xff]
        %v435 = vld [vmem:[%s304 + $0x88] sm:$0xff]
        %v436 = vld [vmem:[%s304 + $0x90] sm:$0xff]
        %v437 = vld [vmem:[%s304 + $0x98] sm:$0xff]
        %v438 = vld [vmem:[%s304 + $0xa0] sm:$0xff]
        %v439 = vld [vmem:[%s304 + $0xa8] sm:$0xff]
        %v440 = vld [vmem:[%s304 + $0xb0] sm:$0xff]
        %v441 = vld [vmem:[%s304 + $0xb8] sm:$0xff]
        %v442 = vld [vmem:[%s304 + $0xc0] sm:$0xff]
        %v443 = vld [vmem:[%s304 + $0xc8] sm:$0xff]
        %v444 = vld [vmem:[%s304 + $0xd0] sm:$0xff]
        %v445 = vld [vmem:[%s304 + $0xd8] sm:$0xff]
        %v446 = vld [vmem:[%s304 + $0xe0] sm:$0xff]
        %v447 = vld [vmem:[%s304 + $0xe8] sm:$0xff]
        %v448 = vld [vmem:[%s304 + $0xf0] sm:$0xff]
        %v449 = vld [vmem:[%s304 + $0xf8] sm:$0xff]
        %v450 = vld [vmem:[%s314] sm:$0xff]
        %v451 = vld [vmem:[%s314 + $0x8] sm:$0xff]
        %v452 = vld [vmem:[%s314 + $0x10] sm:$0xff]
        %v453 = vld [vmem:[%s314 + $0x18] sm:$0xff]
        %v454 = vld [vmem:[%s314 + $0x20] sm:$0xff]
        %v455 = vld [vmem:[%s314 + $0x28] sm:$0xff]
        %v456 = vld [vmem:[%s314 + $0x30] sm:$0xff]
        %v457 = vld [vmem:[%s314 + $0x38] sm:$0xff]
        %v458 = vld [vmem:[%s314 + $0x40] sm:$0xff]
        %v459 = vld [vmem:[%s314 + $0x48] sm:$0xff]
        %v460 = vld [vmem:[%s314 + $0x50] sm:$0xff]
        %v461 = vld [vmem:[%s314 + $0x58] sm:$0xff]
        %v462 = vld [vmem:[%s314 + $0x60] sm:$0xff]
        %v463 = vld [vmem:[%s314 + $0x68] sm:$0xff]
        %v464 = vld [vmem:[%s314 + $0x70] sm:$0xff]
        %v465 = vld [vmem:[%s314 + $0x78] sm:$0xff]
        %v466 = vld [vmem:[%s314 + $0x80] sm:$0xff]
        %v467 = vld [vmem:[%s314 + $0x88] sm:$0xff]
        %v468 = vld [vmem:[%s314 + $0x90] sm:$0xff]
        %v469 = vld [vmem:[%s314 + $0x98] sm:$0xff]
        %v470 = vld [vmem:[%s314 + $0xa0] sm:$0xff]
        %v471 = vld [vmem:[%s314 + $0xa8] sm:$0xff]
        %v472 = vld [vmem:[%s314 + $0xb0] sm:$0xff]
        %v473 = vld [vmem:[%s314 + $0xb8] sm:$0xff]
        %v474 = vld [vmem:[%s314 + $0xc0] sm:$0xff]
        %v475 = vld [vmem:[%s314 + $0xc8] sm:$0xff]
        %v476 = vld [vmem:[%s314 + $0xd0] sm:$0xff]
        %v477 = vld [vmem:[%s314 + $0xd8] sm:$0xff]
        %v478 = vld [vmem:[%s314 + $0xe0] sm:$0xff]
        %v479 = vld [vmem:[%s314 + $0xe8] sm:$0xff]
        %v480 = vld [vmem:[%s314 + $0xf0] sm:$0xff]
        %v481 = vld [vmem:[%s314 + $0xf8] sm:$0xff]
        %v482 = vld [vmem:[%s324] sm:$0x3]
        %v484 = vperm.slane %v482, 0
        %v485 = vperm.slane %v482, 1
        %488 = vmatpush.msra.mxu0 %v480
        %489 = vmatpush.msra.mxu0 %v478
        %490 = vmatpush.msra.mxu0 %v476
        %491 = vmatpush.msra.mxu0 %v474
        %492 = vmatpush.msra.mxu0 %v472
        %493 = vmatpush.msra.mxu0 %v470
        %494 = vmatpush.msra.mxu0 %v468
        %495 = vmatpush.msra.mxu0 %v466
        %496 = vmatpush.msra.mxu0 %v464
        %497 = vmatpush.msra.mxu0 %v462
        %498 = vmatpush.msra.mxu0 %v460
        %499 = vmatpush.msra.mxu0 %v458
        %500 = vmatpush.msra.mxu0 %v456
        %501 = vmatpush.msra.mxu0 %v454
        %502 = vmatpush.msra.mxu0 %v452
        %503 = vmatpush.msra.mxu0 %v450
        %504 = vmatmul.f32.gmra.mxu0 %v418
        %v505 = vpop.f32.mrf.mxu0
        %v506 = vadd.f32 %v484, %v505
        %507 = vmatmul.f32.gmra.mxu0 %v419
        %v508 = vpop.f32.mrf.mxu0
        %v509 = vadd.f32 %v484, %v508
        %510 = vmatmul.f32.gmra.mxu0 %v420
        %v511 = vpop.f32.mrf.mxu0
        %v512 = vadd.f32 %v484, %v511
        %513 = vmatmul.f32.gmra.mxu0 %v421
        %v514 = vpop.f32.mrf.mxu0
        %v515 = vadd.f32 %v484, %v514
        %516 = vmatmul.f32.gmra.mxu0 %v422
        %v517 = vpop.f32.mrf.mxu0
        %v518 = vadd.f32 %v484, %v517
        %519 = vmatmul.f32.gmra.mxu0 %v423
        %v520 = vpop.f32.mrf.mxu0
        %v521 = vadd.f32 %v484, %v520
        %522 = vmatmul.f32.gmra.mxu0 %v424
        %v523 = vpop.f32.mrf.mxu0
        %v524 = vadd.f32 %v484, %v523
        %525 = vmatmul.f32.gmra.mxu0 %v425
        %v526 = vpop.f32.mrf.mxu0
        %v527 = vadd.f32 %v484, %v526
        %528 = vmatmul.f32.gmra.mxu0 %v426
        %v529 = vpop.f32.mrf.mxu0
        %v530 = vadd.f32 %v484, %v529
        %531 = vmatmul.f32.gmra.mxu0 %v427
        %v532 = vpop.f32.mrf.mxu0
        %v533 = vadd.f32 %v484, %v532
        %534 = vmatmul.f32.gmra.mxu0 %v428
        %v535 = vpop.f32.mrf.mxu0
        %v536 = vadd.f32 %v484, %v535
        %537 = vmatmul.f32.gmra.mxu0 %v429
        %v538 = vpop.f32.mrf.mxu0
        %v539 = vadd.f32 %v484, %v538
        %540 = vmatmul.f32.gmra.mxu0 %v430
        %v541 = vpop.f32.mrf.mxu0
        %v542 = vadd.f32 %v484, %v541
        %543 = vmatmul.f32.gmra.mxu0 %v431
        %v544 = vpop.f32.mrf.mxu0
        %v545 = vadd.f32 %v484, %v544
        %546 = vmatmul.f32.gmra.mxu0 %v432
        %v547 = vpop.f32.mrf.mxu0
        %v548 = vadd.f32 %v484, %v547
        %549 = vmatmul.f32.gmra.mxu0 %v433
        %v550 = vpop.f32.mrf.mxu0
        %v551 = vadd.f32 %v484, %v550
        %552 = vmatmul.f32.gmra.mxu0 %v434
        %v553 = vpop.f32.mrf.mxu0
        %v554 = vadd.f32 %v484, %v553
        %555 = vmatmul.f32.gmra.mxu0 %v435
        %v556 = vpop.f32.mrf.mxu0
        %v557 = vadd.f32 %v484, %v556
        %558 = vmatmul.f32.gmra.mxu0 %v436
        %v559 = vpop.f32.mrf.mxu0
        %v560 = vadd.f32 %v484, %v559
        %561 = vmatmul.f32.gmra.mxu0 %v437
        %v562 = vpop.f32.mrf.mxu0
        %v563 = vadd.f32 %v484, %v562
        %564 = vmatmul.f32.gmra.mxu0 %v438
        %v565 = vpop.f32.mrf.mxu0
        %v566 = vadd.f32 %v484, %v565
        %567 = vmatmul.f32.gmra.mxu0 %v439
        %v568 = vpop.f32.mrf.mxu0
        %v569 = vadd.f32 %v484, %v568
        %570 = vmatmul.f32.gmra.mxu0 %v440
        %v571 = vpop.f32.mrf.mxu0
        %v572 = vadd.f32 %v484, %v571
        %573 = vmatmul.f32.gmra.mxu0 %v441
        %v574 = vpop.f32.mrf.mxu0
        %v575 = vadd.f32 %v484, %v574
        %576 = vmatmul.f32.gmra.mxu0 %v442
        %v577 = vpop.f32.mrf.mxu0
        %v578 = vadd.f32 %v484, %v577
        %579 = vmatmul.f32.gmra.mxu0 %v443
        %v580 = vpop.f32.mrf.mxu0
        %v581 = vadd.f32 %v484, %v580
        %582 = vmatmul.f32.gmra.mxu0 %v444
        %v583 = vpop.f32.mrf.mxu0
        %v584 = vadd.f32 %v484, %v583
        %585 = vmatmul.f32.gmra.mxu0 %v445
        %v586 = vpop.f32.mrf.mxu0
        %v587 = vadd.f32 %v484, %v586
        %588 = vmatmul.f32.gmra.mxu0 %v446
        %v589 = vpop.f32.mrf.mxu0
        %v590 = vadd.f32 %v484, %v589
        %591 = vmatmul.f32.gmra.mxu0 %v447
        %v592 = vpop.f32.mrf.mxu0
        %v593 = vadd.f32 %v484, %v592
        %594 = vmatmul.f32.gmra.mxu0 %v448
        %v595 = vpop.f32.mrf.mxu0
        %v596 = vadd.f32 %v484, %v595
        %597 = vmatmul.f32.gmra.mxu0 %v449
        %v598 = vpop.f32.mrf.mxu0
        %v599 = vadd.f32 %v484, %v598
        %600 = vdwg.mxu0
        %601 = vmatpush.msra.mxu0 %v481
        %602 = vmatpush.msra.mxu0 %v479
        %603 = vmatpush.msra.mxu0 %v477
        %604 = vmatpush.msra.mxu0 %v475
        %605 = vmatpush.msra.mxu0 %v473
        %606 = vmatpush.msra.mxu0 %v471
        %607 = vmatpush.msra.mxu0 %v469
        %608 = vmatpush.msra.mxu0 %v467
        %609 = vmatpush.msra.mxu0 %v465
        %610 = vmatpush.msra.mxu0 %v463
        %611 = vmatpush.msra.mxu0 %v461
        %612 = vmatpush.msra.mxu0 %v459
        %613 = vmatpush.msra.mxu0 %v457
        %614 = vmatpush.msra.mxu0 %v455
        %615 = vmatpush.msra.mxu0 %v453
        %616 = vmatpush.msra.mxu0 %v451
        %617 = vmatmul.f32.gmra.mxu0 %v418
        %v618 = vpop.f32.mrf.mxu0
        %v619 = vadd.f32 %v485, %v618
        %620 = vmatmul.f32.gmra.mxu0 %v419
        %v621 = vpop.f32.mrf.mxu0
        %v622 = vadd.f32 %v485, %v621
        %623 = vmatmul.f32.gmra.mxu0 %v420
        %v624 = vpop.f32.mrf.mxu0
        %v625 = vadd.f32 %v485, %v624
        %626 = vmatmul.f32.gmra.mxu0 %v421
        %v627 = vpop.f32.mrf.mxu0
        %v628 = vadd.f32 %v485, %v627
        %629 = vmatmul.f32.gmra.mxu0 %v422
        %v630 = vpop.f32.mrf.mxu0
        %v631 = vadd.f32 %v485, %v630
        %632 = vmatmul.f32.gmra.mxu0 %v423
        %v633 = vpop.f32.mrf.mxu0
        %v634 = vadd.f32 %v485, %v633
        %635 = vmatmul.f32.gmra.mxu0 %v424
        %v636 = vpop.f32.mrf.mxu0
        %v637 = vadd.f32 %v485, %v636
        %638 = vmatmul.f32.gmra.mxu0 %v425
        %v639 = vpop.f32.mrf.mxu0
        %v640 = vadd.f32 %v485, %v639
        %641 = vmatmul.f32.gmra.mxu0 %v426
        %v642 = vpop.f32.mrf.mxu0
        %v643 = vadd.f32 %v485, %v642
        %644 = vmatmul.f32.gmra.mxu0 %v427
        %v645 = vpop.f32.mrf.mxu0
        %v646 = vadd.f32 %v485, %v645
        %647 = vmatmul.f32.gmra.mxu0 %v428
        %v648 = vpop.f32.mrf.mxu0
        %v649 = vadd.f32 %v485, %v648
        %650 = vmatmul.f32.gmra.mxu0 %v429
        %v651 = vpop.f32.mrf.mxu0
        %v652 = vadd.f32 %v485, %v651
        %653 = vmatmul.f32.gmra.mxu0 %v430
        %v654 = vpop.f32.mrf.mxu0
        %v655 = vadd.f32 %v485, %v654
        %656 = vmatmul.f32.gmra.mxu0 %v431
        %v657 = vpop.f32.mrf.mxu0
        %v658 = vadd.f32 %v485, %v657
        %659 = vmatmul.f32.gmra.mxu0 %v432
        %v660 = vpop.f32.mrf.mxu0
        %v661 = vadd.f32 %v485, %v660
        %662 = vmatmul.f32.gmra.mxu0 %v433
        %v663 = vpop.f32.mrf.mxu0
        %v664 = vadd.f32 %v485, %v663
        %665 = vmatmul.f32.gmra.mxu0 %v434
        %v666 = vpop.f32.mrf.mxu0
        %v667 = vadd.f32 %v485, %v666
        %668 = vmatmul.f32.gmra.mxu0 %v435
        %v669 = vpop.f32.mrf.mxu0
        %v670 = vadd.f32 %v485, %v669
        %671 = vmatmul.f32.gmra.mxu0 %v436
        %v672 = vpop.f32.mrf.mxu0
        %v673 = vadd.f32 %v485, %v672
        %674 = vmatmul.f32.gmra.mxu0 %v437
        %v675 = vpop.f32.mrf.mxu0
        %v676 = vadd.f32 %v485, %v675
        %677 = vmatmul.f32.gmra.mxu0 %v438
        %v678 = vpop.f32.mrf.mxu0
        %v679 = vadd.f32 %v485, %v678
        %680 = vmatmul.f32.gmra.mxu0 %v439
        %v681 = vpop.f32.mrf.mxu0
        %v682 = vadd.f32 %v485, %v681
        %683 = vmatmul.f32.gmra.mxu0 %v440
        %v684 = vpop.f32.mrf.mxu0
        %v685 = vadd.f32 %v485, %v684
        %686 = vmatmul.f32.gmra.mxu0 %v441
        %v687 = vpop.f32.mrf.mxu0
        %v688 = vadd.f32 %v485, %v687
        %689 = vmatmul.f32.gmra.mxu0 %v442
        %v690 = vpop.f32.mrf.mxu0
        %v691 = vadd.f32 %v485, %v690
        %692 = vmatmul.f32.gmra.mxu0 %v443
        %v693 = vpop.f32.mrf.mxu0
        %v694 = vadd.f32 %v485, %v693
        %695 = vmatmul.f32.gmra.mxu0 %v444
        %v696 = vpop.f32.mrf.mxu0
        %v697 = vadd.f32 %v485, %v696
        %698 = vmatmul.f32.gmra.mxu0 %v445
        %v699 = vpop.f32.mrf.mxu0
        %v700 = vadd.f32 %v485, %v699
        %701 = vmatmul.f32.gmra.mxu0 %v446
        %v702 = vpop.f32.mrf.mxu0
        %v703 = vadd.f32 %v485, %v702
        %704 = vmatmul.f32.gmra.mxu0 %v447
        %v705 = vpop.f32.mrf.mxu0
        %v706 = vadd.f32 %v485, %v705
        %707 = vmatmul.f32.gmra.mxu0 %v448
        %v708 = vpop.f32.mrf.mxu0
        %v709 = vadd.f32 %v485, %v708
        %710 = vmatmul.f32.gmra.mxu0 %v449
        %v711 = vpop.f32.mrf.mxu0
        %v712 = vadd.f32 %v485, %v711
        %713 = vdwg.mxu0
        %v714 = vmul.f32 %v506, 0.70710677
        %v715 = vmul.f32 %v619, 0.70710677
        %v716 = vmul.f32 %v509, 0.70710677
        %v717 = vmul.f32 %v622, 0.70710677
        %v718 = vmul.f32 %v512, 0.70710677
        %v719 = vmul.f32 %v625, 0.70710677
        %v720 = vmul.f32 %v515, 0.70710677
        %v721 = vmul.f32 %v628, 0.70710677
        %v722 = vmul.f32 %v518, 0.70710677
        %v723 = vmul.f32 %v631, 0.70710677
        %v724 = vmul.f32 %v521, 0.70710677
        %v725 = vmul.f32 %v634, 0.70710677
        %v726 = vmul.f32 %v524, 0.70710677
        %v727 = vmul.f32 %v637, 0.70710677
        %v728 = vmul.f32 %v527, 0.70710677
        %v729 = vmul.f32 %v640, 0.70710677
        %v730 = vmul.f32 %v530, 0.70710677
        %v731 = vmul.f32 %v643, 0.70710677
        %v732 = vmul.f32 %v533, 0.70710677
        %v733 = vmul.f32 %v646, 0.70710677
        %v734 = vmul.f32 %v536, 0.70710677
        %v735 = vmul.f32 %v649, 0.70710677
        %v736 = vmul.f32 %v539, 0.70710677
        %v737 = vmul.f32 %v652, 0.70710677
        %v738 = vmul.f32 %v542, 0.70710677
        %v739 = vmul.f32 %v655, 0.70710677
        %v740 = vmul.f32 %v545, 0.70710677
        %v741 = vmul.f32 %v658, 0.70710677
        %v742 = vmul.f32 %v548, 0.70710677
        %v743 = vmul.f32 %v661, 0.70710677
        %v744 = vmul.f32 %v551, 0.70710677
        %v745 = vmul.f32 %v664, 0.70710677
        %v746 = vmul.f32 %v554, 0.70710677
        %v747 = vmul.f32 %v667, 0.70710677
        %v748 = vmul.f32 %v557, 0.70710677
        %v749 = vmul.f32 %v670, 0.70710677
        %v750 = vmul.f32 %v560, 0.70710677
        %v751 = vmul.f32 %v673, 0.70710677
        %v752 = vmul.f32 %v563, 0.70710677
        %v753 = vmul.f32 %v676, 0.70710677
        %v754 = vmul.f32 %v566, 0.70710677
        %v755 = vmul.f32 %v679, 0.70710677
        %v756 = vmul.f32 %v569, 0.70710677
        %v757 = vmul.f32 %v682, 0.70710677
        %v758 = vmul.f32 %v572, 0.70710677
        %v759 = vmul.f32 %v685, 0.70710677
        %v760 = vmul.f32 %v575, 0.70710677
        %v761 = vmul.f32 %v688, 0.70710677
        %v762 = vmul.f32 %v578, 0.70710677
        %v763 = vmul.f32 %v691, 0.70710677
        %v764 = vmul.f32 %v581, 0.70710677
        %v765 = vmul.f32 %v694, 0.70710677
        %v766 = vmul.f32 %v584, 0.70710677
        %v767 = vmul.f32 %v697, 0.70710677
        %v768 = vmul.f32 %v587, 0.70710677
        %v769 = vmul.f32 %v700, 0.70710677
        %v770 = vmul.f32 %v590, 0.70710677
        %v771 = vmul.f32 %v703, 0.70710677
        %v772 = vmul.f32 %v593, 0.70710677
        %v773 = vmul.f32 %v706, 0.70710677
        %v774 = vmul.f32 %v596, 0.70710677
        %v775 = vmul.f32 %v709, 0.70710677
        %v776 = vmul.f32 %v599, 0.70710677
        %v777 = vmul.f32 %v712, 0.70710677
        %v778 = vand.u32 2147483647, %v714
        %v779 = vand.u32 2147483647, %v715
        %v780 = vand.u32 2147483647, %v716
        %v781 = vand.u32 2147483647, %v717
        %v782 = vand.u32 2147483647, %v718
        %v783 = vand.u32 2147483647, %v719
        %v784 = vand.u32 2147483647, %v720
        %v785 = vand.u32 2147483647, %v721
        %v786 = vand.u32 2147483647, %v722
        %v787 = vand.u32 2147483647, %v723
        %v788 = vand.u32 2147483647, %v724
        %v789 = vand.u32 2147483647, %v725
        %v790 = vand.u32 2147483647, %v726
        %v791 = vand.u32 2147483647, %v727
        %v792 = vand.u32 2147483647, %v728
        %v793 = vand.u32 2147483647, %v729
        %v794 = vand.u32 2147483647, %v730
        %v795 = vand.u32 2147483647, %v731
        %v796 = vand.u32 2147483647, %v732
        %v797 = vand.u32 2147483647, %v733
        %v798 = vand.u32 2147483647, %v734
        %v799 = vand.u32 2147483647, %v735
        %v800 = vand.u32 2147483647, %v736
        %v801 = vand.u32 2147483647, %v737
        %v802 = vand.u32 2147483647, %v738
        %v803 = vand.u32 2147483647, %v739
        %v804 = vand.u32 2147483647, %v740
        %v805 = vand.u32 2147483647, %v741
        %v806 = vand.u32 2147483647, %v742
        %v807 = vand.u32 2147483647, %v743
        %v808 = vand.u32 2147483647, %v744
        %v809 = vand.u32 2147483647, %v745
        %v810 = vand.u32 2147483647, %v746
        %v811 = vand.u32 2147483647, %v747
        %v812 = vand.u32 2147483647, %v748
        %v813 = vand.u32 2147483647, %v749
        %v814 = vand.u32 2147483647, %v750
        %v815 = vand.u32 2147483647, %v751
        %v816 = vand.u32 2147483647, %v752
        %v817 = vand.u32 2147483647, %v753
        %v818 = vand.u32 2147483647, %v754
        %v819 = vand.u32 2147483647, %v755
        %v820 = vand.u32 2147483647, %v756
        %v821 = vand.u32 2147483647, %v757
        %v822 = vand.u32 2147483647, %v758
        %v823 = vand.u32 2147483647, %v759
        %v824 = vand.u32 2147483647, %v760
        %v825 = vand.u32 2147483647, %v761
        %v826 = vand.u32 2147483647, %v762
        %v827 = vand.u32 2147483647, %v763
        %v828 = vand.u32 2147483647, %v764
        %v829 = vand.u32 2147483647, %v765
        %v830 = vand.u32 2147483647, %v766
        %v831 = vand.u32 2147483647, %v767
        %v832 = vand.u32 2147483647, %v768
        %v833 = vand.u32 2147483647, %v769
        %v834 = vand.u32 2147483647, %v770
        %v835 = vand.u32 2147483647, %v771
        %v836 = vand.u32 2147483647, %v772
        %v837 = vand.u32 2147483647, %v773
        %v838 = vand.u32 2147483647, %v774
        %v839 = vand.u32 2147483647, %v775
        %v840 = vand.u32 2147483647, %v776
        %v841 = vand.u32 2147483647, %v777
        %v842 = vmul.f32 %v778, 0.3275911
        %v843 = vmul.f32 %v779, 0.3275911
        %v844 = vmul.f32 %v780, 0.3275911
        %v845 = vmul.f32 %v781, 0.3275911
        %v846 = vmul.f32 %v782, 0.3275911
        %v847 = vmul.f32 %v783, 0.3275911
        %v848 = vmul.f32 %v784, 0.3275911
        %v849 = vmul.f32 %v785, 0.3275911
        %v850 = vmul.f32 %v786, 0.3275911
        %v851 = vmul.f32 %v787, 0.3275911
        %v852 = vmul.f32 %v788, 0.3275911
        %v853 = vmul.f32 %v789, 0.3275911
        %v854 = vmul.f32 %v790, 0.3275911
        %v855 = vmul.f32 %v791, 0.3275911
        %v856 = vmul.f32 %v792, 0.3275911
        %v857 = vmul.f32 %v793, 0.3275911
        %v858 = vmul.f32 %v794, 0.3275911
        %v859 = vmul.f32 %v795, 0.3275911
        %v860 = vmul.f32 %v796, 0.3275911
        %v861 = vmul.f32 %v797, 0.3275911
        %v862 = vmul.f32 %v798, 0.3275911
        %v863 = vmul.f32 %v799, 0.3275911
        %v864 = vmul.f32 %v800, 0.3275911
        %v865 = vmul.f32 %v801, 0.3275911
        %v866 = vmul.f32 %v802, 0.3275911
        %v867 = vmul.f32 %v803, 0.3275911
        %v868 = vmul.f32 %v804, 0.3275911
        %v869 = vmul.f32 %v805, 0.3275911
        %v870 = vmul.f32 %v806, 0.3275911
        %v871 = vmul.f32 %v807, 0.3275911
        %v872 = vmul.f32 %v808, 0.3275911
        %v873 = vmul.f32 %v809, 0.3275911
        %v874 = vmul.f32 %v810, 0.3275911
        %v875 = vmul.f32 %v811, 0.3275911
        %v876 = vmul.f32 %v812, 0.3275911
        %v877 = vmul.f32 %v813, 0.3275911
        %v878 = vmul.f32 %v814, 0.3275911
        %v879 = vmul.f32 %v815, 0.3275911
        %v880 = vmul.f32 %v816, 0.3275911
        %v881 = vmul.f32 %v817, 0.3275911
        %v882 = vmul.f32 %v818, 0.3275911
        %v883 = vmul.f32 %v819, 0.3275911
        %v884 = vmul.f32 %v820, 0.3275911
        %v885 = vmul.f32 %v821, 0.3275911
        %v886 = vmul.f32 %v822, 0.3275911
        %v887 = vmul.f32 %v823, 0.3275911
        %v888 = vmul.f32 %v824, 0.3275911
        %v889 = vmul.f32 %v825, 0.3275911
        %v890 = vmul.f32 %v826, 0.3275911
        %v891 = vmul.f32 %v827, 0.3275911
        %v892 = vmul.f32 %v828, 0.3275911
        %v893 = vmul.f32 %v829, 0.3275911
        %v894 = vmul.f32 %v830, 0.3275911
        %v895 = vmul.f32 %v831, 0.3275911
        %v896 = vmul.f32 %v832, 0.3275911
        %v897 = vmul.f32 %v833, 0.3275911
        %v898 = vmul.f32 %v834, 0.3275911
        %v899 = vmul.f32 %v835, 0.3275911
        %v900 = vmul.f32 %v836, 0.3275911
        %v901 = vmul.f32 %v837, 0.3275911
        %v902 = vmul.f32 %v838, 0.3275911
        %v903 = vmul.f32 %v839, 0.3275911
        %v904 = vmul.f32 %v840, 0.3275911
        %v905 = vmul.f32 %v841, 0.3275911
        %v906 = vadd.f32 %v842, 1.0
        %v907 = vadd.f32 %v843, 1.0
        %v908 = vadd.f32 %v844, 1.0
        %v909 = vadd.f32 %v845, 1.0
        %v910 = vadd.f32 %v846, 1.0
        %v911 = vadd.f32 %v847, 1.0
        %v912 = vadd.f32 %v848, 1.0
        %v913 = vadd.f32 %v849, 1.0
        %v914 = vadd.f32 %v850, 1.0
        %v915 = vadd.f32 %v851, 1.0
        %v916 = vadd.f32 %v852, 1.0
        %v917 = vadd.f32 %v853, 1.0
        %v918 = vadd.f32 %v854, 1.0
        %v919 = vadd.f32 %v855, 1.0
        %v920 = vadd.f32 %v856, 1.0
        %v921 = vadd.f32 %v857, 1.0
        %v922 = vadd.f32 %v858, 1.0
        %v923 = vadd.f32 %v859, 1.0
        %v924 = vadd.f32 %v860, 1.0
        %v925 = vadd.f32 %v861, 1.0
        %v926 = vadd.f32 %v862, 1.0
        %v927 = vadd.f32 %v863, 1.0
        %v928 = vadd.f32 %v864, 1.0
        %v929 = vadd.f32 %v865, 1.0
        %v930 = vadd.f32 %v866, 1.0
        %v931 = vadd.f32 %v867, 1.0
        %v932 = vadd.f32 %v868, 1.0
        %v933 = vadd.f32 %v869, 1.0
        %v934 = vadd.f32 %v870, 1.0
        %v935 = vadd.f32 %v871, 1.0
        %v936 = vadd.f32 %v872, 1.0
        %v937 = vadd.f32 %v873, 1.0
        %v938 = vadd.f32 %v874, 1.0
        %v939 = vadd.f32 %v875, 1.0
        %v940 = vadd.f32 %v876, 1.0
        %v941 = vadd.f32 %v877, 1.0
        %v942 = vadd.f32 %v878, 1.0
        %v943 = vadd.f32 %v879, 1.0
        %v944 = vadd.f32 %v880, 1.0
        %v945 = vadd.f32 %v881, 1.0
        %v946 = vadd.f32 %v882, 1.0
        %v947 = vadd.f32 %v883, 1.0
        %v948 = vadd.f32 %v884, 1.0
        %v949 = vadd.f32 %v885, 1.0
        %v950 = vadd.f32 %v886, 1.0
        %v951 = vadd.f32 %v887, 1.0
        %v952 = vadd.f32 %v888, 1.0
        %v953 = vadd.f32 %v889, 1.0
        %v954 = vadd.f32 %v890, 1.0
        %v955 = vadd.f32 %v891, 1.0
        %v956 = vadd.f32 %v892, 1.0
        %v957 = vadd.f32 %v893, 1.0
        %v958 = vadd.f32 %v894, 1.0
        %v959 = vadd.f32 %v895, 1.0
        %v960 = vadd.f32 %v896, 1.0
        %v961 = vadd.f32 %v897, 1.0
        %v962 = vadd.f32 %v898, 1.0
        %v963 = vadd.f32 %v899, 1.0
        %v964 = vadd.f32 %v900, 1.0
        %v965 = vadd.f32 %v901, 1.0
        %v966 = vadd.f32 %v902, 1.0
        %v967 = vadd.f32 %v903, 1.0
        %v968 = vadd.f32 %v904, 1.0
        %v969 = vadd.f32 %v905, 1.0
        %v970 = vrcp.pop %v906
        %v971 = vmul.f32 %v906, %v970
        %v972 = vsub.f32 1.0, %v971
        %v973 = vmul.f32 %v970, %v972
        %v974 = vadd.f32 %v970, %v973
        %vm975 = vweird.f32 %v906
        %vm976 = vweird.f32 %v970
        %vm977 = vmor %vm975, %vm976
        %v978 = vsel %vm977, %v970, %v974
        %v979 = vand.u32 2147483647, %v906
        %vm980 = vcmp.eq.f32.partialorder %v979, 8.507059e+37
        %v981 = vand.u32 %v906, 2147483648
        %v982 = vor.u32 1.1754944e-38, %v981
        %v983 = vsel %vm980, %v982, %v978
        %v984 = vmul.f32 1.0, %v983
        %v985 = vrcp.pop %v907
        %v986 = vmul.f32 %v907, %v985
        %v987 = vsub.f32 1.0, %v986
        %v988 = vmul.f32 %v985, %v987
        %v989 = vadd.f32 %v985, %v988
        %vm990 = vweird.f32 %v907
        %vm991 = vweird.f32 %v985
        %vm992 = vmor %vm990, %vm991
        %v993 = vsel %vm992, %v985, %v989
        %v994 = vand.u32 2147483647, %v907
        %vm995 = vcmp.eq.f32.partialorder %v994, 8.507059e+37
        %v996 = vand.u32 %v907, 2147483648
        %v997 = vor.u32 1.1754944e-38, %v996
        %v998 = vsel %vm995, %v997, %v993
        %v999 = vmul.f32 1.0, %v998
        %v1000 = vrcp.pop %v908
        %v1001 = vmul.f32 %v908, %v1000
        %v1002 = vsub.f32 1.0, %v1001
        %v1003 = vmul.f32 %v1000, %v1002
        %v1004 = vadd.f32 %v1000, %v1003
        %vm1005 = vweird.f32 %v908
        %vm1006 = vweird.f32 %v1000
        %vm1007 = vmor %vm1005, %vm1006
        %v1008 = vsel %vm1007, %v1000, %v1004
        %v1009 = vand.u32 2147483647, %v908
        %vm1010 = vcmp.eq.f32.partialorder %v1009, 8.507059e+37
        %v1011 = vand.u32 %v908, 2147483648
        %v1012 = vor.u32 1.1754944e-38, %v1011
        %v1013 = vsel %vm1010, %v1012, %v1008
        %v1014 = vmul.f32 1.0, %v1013
        %v1015 = vrcp.pop %v909
        %v1016 = vmul.f32 %v909, %v1015
        %v1017 = vsub.f32 1.0, %v1016
        %v1018 = vmul.f32 %v1015, %v1017
        %v1019 = vadd.f32 %v1015, %v1018
        %vm1020 = vweird.f32 %v909
        %vm1021 = vweird.f32 %v1015
        %vm1022 = vmor %vm1020, %vm1021
        %v1023 = vsel %vm1022, %v1015, %v1019
        %v1024 = vand.u32 2147483647, %v909
        %vm1025 = vcmp.eq.f32.partialorder %v1024, 8.507059e+37
        %v1026 = vand.u32 %v909, 2147483648
        %v1027 = vor.u32 1.1754944e-38, %v1026
        %v1028 = vsel %vm1025, %v1027, %v1023
        %v1029 = vmul.f32 1.0, %v1028
        %v1030 = vrcp.pop %v910
        %v1031 = vmul.f32 %v910, %v1030
        %v1032 = vsub.f32 1.0, %v1031
        %v1033 = vmul.f32 %v1030, %v1032
        %v1034 = vadd.f32 %v1030, %v1033
        %vm1035 = vweird.f32 %v910
        %vm1036 = vweird.f32 %v1030
        %vm1037 = vmor %vm1035, %vm1036
        %v1038 = vsel %vm1037, %v1030, %v1034
        %v1039 = vand.u32 2147483647, %v910
        %vm1040 = vcmp.eq.f32.partialorder %v1039, 8.507059e+37
        %v1041 = vand.u32 %v910, 2147483648
        %v1042 = vor.u32 1.1754944e-38, %v1041
        %v1043 = vsel %vm1040, %v1042, %v1038
        %v1044 = vmul.f32 1.0, %v1043
        %v1045 = vrcp.pop %v911
        %v1046 = vmul.f32 %v911, %v1045
        %v1047 = vsub.f32 1.0, %v1046
        %v1048 = vmul.f32 %v1045, %v1047
        %v1049 = vadd.f32 %v1045, %v1048
        %vm1050 = vweird.f32 %v911
        %vm1051 = vweird.f32 %v1045
        %vm1052 = vmor %vm1050, %vm1051
        %v1053 = vsel %vm1052, %v1045, %v1049
        %v1054 = vand.u32 2147483647, %v911
        %vm1055 = vcmp.eq.f32.partialorder %v1054, 8.507059e+37
        %v1056 = vand.u32 %v911, 2147483648
        %v1057 = vor.u32 1.1754944e-38, %v1056
        %v1058 = vsel %vm1055, %v1057, %v1053
        %v1059 = vmul.f32 1.0, %v1058
        %v1060 = vrcp.pop %v912
        %v1061 = vmul.f32 %v912, %v1060
        %v1062 = vsub.f32 1.0, %v1061
        %v1063 = vmul.f32 %v1060, %v1062
        %v1064 = vadd.f32 %v1060, %v1063
        %vm1065 = vweird.f32 %v912
        %vm1066 = vweird.f32 %v1060
        %vm1067 = vmor %vm1065, %vm1066
        %v1068 = vsel %vm1067, %v1060, %v1064
        %v1069 = vand.u32 2147483647, %v912
        %vm1070 = vcmp.eq.f32.partialorder %v1069, 8.507059e+37
        %v1071 = vand.u32 %v912, 2147483648
        %v1072 = vor.u32 1.1754944e-38, %v1071
        %v1073 = vsel %vm1070, %v1072, %v1068
        %v1074 = vmul.f32 1.0, %v1073
        %v1075 = vrcp.pop %v913
        %v1076 = vmul.f32 %v913, %v1075
        %v1077 = vsub.f32 1.0, %v1076
        %v1078 = vmul.f32 %v1075, %v1077
        %v1079 = vadd.f32 %v1075, %v1078
        %vm1080 = vweird.f32 %v913
        %vm1081 = vweird.f32 %v1075
        %vm1082 = vmor %vm1080, %vm1081
        %v1083 = vsel %vm1082, %v1075, %v1079
        %v1084 = vand.u32 2147483647, %v913
        %vm1085 = vcmp.eq.f32.partialorder %v1084, 8.507059e+37
        %v1086 = vand.u32 %v913, 2147483648
        %v1087 = vor.u32 1.1754944e-38, %v1086
        %v1088 = vsel %vm1085, %v1087, %v1083
        %v1089 = vmul.f32 1.0, %v1088
        %v1090 = vrcp.pop %v914
        %v1091 = vmul.f32 %v914, %v1090
        %v1092 = vsub.f32 1.0, %v1091
        %v1093 = vmul.f32 %v1090, %v1092
        %v1094 = vadd.f32 %v1090, %v1093
        %vm1095 = vweird.f32 %v914
        %vm1096 = vweird.f32 %v1090
        %vm1097 = vmor %vm1095, %vm1096
        %v1098 = vsel %vm1097, %v1090, %v1094
        %v1099 = vand.u32 2147483647, %v914
        %vm1100 = vcmp.eq.f32.partialorder %v1099, 8.507059e+37
        %v1101 = vand.u32 %v914, 2147483648
        %v1102 = vor.u32 1.1754944e-38, %v1101
        %v1103 = vsel %vm1100, %v1102, %v1098
        %v1104 = vmul.f32 1.0, %v1103
        %v1105 = vrcp.pop %v915
        %v1106 = vmul.f32 %v915, %v1105
        %v1107 = vsub.f32 1.0, %v1106
        %v1108 = vmul.f32 %v1105, %v1107
        %v1109 = vadd.f32 %v1105, %v1108
        %vm1110 = vweird.f32 %v915
        %vm1111 = vweird.f32 %v1105
        %vm1112 = vmor %vm1110, %vm1111
        %v1113 = vsel %vm1112, %v1105, %v1109
        %v1114 = vand.u32 2147483647, %v915
        %vm1115 = vcmp.eq.f32.partialorder %v1114, 8.507059e+37
        %v1116 = vand.u32 %v915, 2147483648
        %v1117 = vor.u32 1.1754944e-38, %v1116
        %v1118 = vsel %vm1115, %v1117, %v1113
        %v1119 = vmul.f32 1.0, %v1118
        %v1120 = vrcp.pop %v916
        %v1121 = vmul.f32 %v916, %v1120
        %v1122 = vsub.f32 1.0, %v1121
        %v1123 = vmul.f32 %v1120, %v1122
        %v1124 = vadd.f32 %v1120, %v1123
        %vm1125 = vweird.f32 %v916
        %vm1126 = vweird.f32 %v1120
        %vm1127 = vmor %vm1125, %vm1126
        %v1128 = vsel %vm1127, %v1120, %v1124
        %v1129 = vand.u32 2147483647, %v916
        %vm1130 = vcmp.eq.f32.partialorder %v1129, 8.507059e+37
        %v1131 = vand.u32 %v916, 2147483648
        %v1132 = vor.u32 1.1754944e-38, %v1131
        %v1133 = vsel %vm1130, %v1132, %v1128
        %v1134 = vmul.f32 1.0, %v1133
        %v1135 = vrcp.pop %v917
        %v1136 = vmul.f32 %v917, %v1135
        %v1137 = vsub.f32 1.0, %v1136
        %v1138 = vmul.f32 %v1135, %v1137
        %v1139 = vadd.f32 %v1135, %v1138
        %vm1140 = vweird.f32 %v917
        %vm1141 = vweird.f32 %v1135
        %vm1142 = vmor %vm1140, %vm1141
        %v1143 = vsel %vm1142, %v1135, %v1139
        %v1144 = vand.u32 2147483647, %v917
        %vm1145 = vcmp.eq.f32.partialorder %v1144, 8.507059e+37
        %v1146 = vand.u32 %v917, 2147483648
        %v1147 = vor.u32 1.1754944e-38, %v1146
        %v1148 = vsel %vm1145, %v1147, %v1143
        %v1149 = vmul.f32 1.0, %v1148
        %v1150 = vrcp.pop %v918
        %v1151 = vmul.f32 %v918, %v1150
        %v1152 = vsub.f32 1.0, %v1151
        %v1153 = vmul.f32 %v1150, %v1152
        %v1154 = vadd.f32 %v1150, %v1153
        %vm1155 = vweird.f32 %v918
        %vm1156 = vweird.f32 %v1150
        %vm1157 = vmor %vm1155, %vm1156
        %v1158 = vsel %vm1157, %v1150, %v1154
        %v1159 = vand.u32 2147483647, %v918
        %vm1160 = vcmp.eq.f32.partialorder %v1159, 8.507059e+37
        %v1161 = vand.u32 %v918, 2147483648
        %v1162 = vor.u32 1.1754944e-38, %v1161
        %v1163 = vsel %vm1160, %v1162, %v1158
        %v1164 = vmul.f32 1.0, %v1163
        %v1165 = vrcp.pop %v919
        %v1166 = vmul.f32 %v919, %v1165
        %v1167 = vsub.f32 1.0, %v1166
        %v1168 = vmul.f32 %v1165, %v1167
        %v1169 = vadd.f32 %v1165, %v1168
        %vm1170 = vweird.f32 %v919
        %vm1171 = vweird.f32 %v1165
        %vm1172 = vmor %vm1170, %vm1171
        %v1173 = vsel %vm1172, %v1165, %v1169
        %v1174 = vand.u32 2147483647, %v919
        %vm1175 = vcmp.eq.f32.partialorder %v1174, 8.507059e+37
        %v1176 = vand.u32 %v919, 2147483648
        %v1177 = vor.u32 1.1754944e-38, %v1176
        %v1178 = vsel %vm1175, %v1177, %v1173
        %v1179 = vmul.f32 1.0, %v1178
        %v1180 = vrcp.pop %v920
        %v1181 = vmul.f32 %v920, %v1180
        %v1182 = vsub.f32 1.0, %v1181
        %v1183 = vmul.f32 %v1180, %v1182
        %v1184 = vadd.f32 %v1180, %v1183
        %vm1185 = vweird.f32 %v920
        %vm1186 = vweird.f32 %v1180
        %vm1187 = vmor %vm1185, %vm1186
        %v1188 = vsel %vm1187, %v1180, %v1184
        %v1189 = vand.u32 2147483647, %v920
        %vm1190 = vcmp.eq.f32.partialorder %v1189, 8.507059e+37
        %v1191 = vand.u32 %v920, 2147483648
        %v1192 = vor.u32 1.1754944e-38, %v1191
        %v1193 = vsel %vm1190, %v1192, %v1188
        %v1194 = vmul.f32 1.0, %v1193
        %v1195 = vrcp.pop %v921
        %v1196 = vmul.f32 %v921, %v1195
        %v1197 = vsub.f32 1.0, %v1196
        %v1198 = vmul.f32 %v1195, %v1197
        %v1199 = vadd.f32 %v1195, %v1198
        %vm1200 = vweird.f32 %v921
        %vm1201 = vweird.f32 %v1195
        %vm1202 = vmor %vm1200, %vm1201
        %v1203 = vsel %vm1202, %v1195, %v1199
        %v1204 = vand.u32 2147483647, %v921
        %vm1205 = vcmp.eq.f32.partialorder %v1204, 8.507059e+37
        %v1206 = vand.u32 %v921, 2147483648
        %v1207 = vor.u32 1.1754944e-38, %v1206
        %v1208 = vsel %vm1205, %v1207, %v1203
        %v1209 = vmul.f32 1.0, %v1208
        %v1210 = vrcp.pop %v922
        %v1211 = vmul.f32 %v922, %v1210
        %v1212 = vsub.f32 1.0, %v1211
        %v1213 = vmul.f32 %v1210, %v1212
        %v1214 = vadd.f32 %v1210, %v1213
        %vm1215 = vweird.f32 %v922
        %vm1216 = vweird.f32 %v1210
        %vm1217 = vmor %vm1215, %vm1216
        %v1218 = vsel %vm1217, %v1210, %v1214
        %v1219 = vand.u32 2147483647, %v922
        %vm1220 = vcmp.eq.f32.partialorder %v1219, 8.507059e+37
        %v1221 = vand.u32 %v922, 2147483648
        %v1222 = vor.u32 1.1754944e-38, %v1221
        %v1223 = vsel %vm1220, %v1222, %v1218
        %v1224 = vmul.f32 1.0, %v1223
        %v1225 = vrcp.pop %v923
        %v1226 = vmul.f32 %v923, %v1225
        %v1227 = vsub.f32 1.0, %v1226
        %v1228 = vmul.f32 %v1225, %v1227
        %v1229 = vadd.f32 %v1225, %v1228
        %vm1230 = vweird.f32 %v923
        %vm1231 = vweird.f32 %v1225
        %vm1232 = vmor %vm1230, %vm1231
        %v1233 = vsel %vm1232, %v1225, %v1229
        %v1234 = vand.u32 2147483647, %v923
        %vm1235 = vcmp.eq.f32.partialorder %v1234, 8.507059e+37
        %v1236 = vand.u32 %v923, 2147483648
        %v1237 = vor.u32 1.1754944e-38, %v1236
        %v1238 = vsel %vm1235, %v1237, %v1233
        %v1239 = vmul.f32 1.0, %v1238
        %v1240 = vrcp.pop %v924
        %v1241 = vmul.f32 %v924, %v1240
        %v1242 = vsub.f32 1.0, %v1241
        %v1243 = vmul.f32 %v1240, %v1242
        %v1244 = vadd.f32 %v1240, %v1243
        %vm1245 = vweird.f32 %v924
        %vm1246 = vweird.f32 %v1240
        %vm1247 = vmor %vm1245, %vm1246
        %v1248 = vsel %vm1247, %v1240, %v1244
        %v1249 = vand.u32 2147483647, %v924
        %vm1250 = vcmp.eq.f32.partialorder %v1249, 8.507059e+37
        %v1251 = vand.u32 %v924, 2147483648
        %v1252 = vor.u32 1.1754944e-38, %v1251
        %v1253 = vsel %vm1250, %v1252, %v1248
        %v1254 = vmul.f32 1.0, %v1253
        %v1255 = vrcp.pop %v925
        %v1256 = vmul.f32 %v925, %v1255
        %v1257 = vsub.f32 1.0, %v1256
        %v1258 = vmul.f32 %v1255, %v1257
        %v1259 = vadd.f32 %v1255, %v1258
        %vm1260 = vweird.f32 %v925
        %vm1261 = vweird.f32 %v1255
        %vm1262 = vmor %vm1260, %vm1261
        %v1263 = vsel %vm1262, %v1255, %v1259
        %v1264 = vand.u32 2147483647, %v925
        %vm1265 = vcmp.eq.f32.partialorder %v1264, 8.507059e+37
        %v1266 = vand.u32 %v925, 2147483648
        %v1267 = vor.u32 1.1754944e-38, %v1266
        %v1268 = vsel %vm1265, %v1267, %v1263
        %v1269 = vmul.f32 1.0, %v1268
        %v1270 = vrcp.pop %v926
        %v1271 = vmul.f32 %v926, %v1270
        %v1272 = vsub.f32 1.0, %v1271
        %v1273 = vmul.f32 %v1270, %v1272
        %v1274 = vadd.f32 %v1270, %v1273
        %vm1275 = vweird.f32 %v926
        %vm1276 = vweird.f32 %v1270
        %vm1277 = vmor %vm1275, %vm1276
        %v1278 = vsel %vm1277, %v1270, %v1274
        %v1279 = vand.u32 2147483647, %v926
        %vm1280 = vcmp.eq.f32.partialorder %v1279, 8.507059e+37
        %v1281 = vand.u32 %v926, 2147483648
        %v1282 = vor.u32 1.1754944e-38, %v1281
        %v1283 = vsel %vm1280, %v1282, %v1278
        %v1284 = vmul.f32 1.0, %v1283
        %v1285 = vrcp.pop %v927
        %v1286 = vmul.f32 %v927, %v1285
        %v1287 = vsub.f32 1.0, %v1286
        %v1288 = vmul.f32 %v1285, %v1287
        %v1289 = vadd.f32 %v1285, %v1288
        %vm1290 = vweird.f32 %v927
        %vm1291 = vweird.f32 %v1285
        %vm1292 = vmor %vm1290, %vm1291
        %v1293 = vsel %vm1292, %v1285, %v1289
        %v1294 = vand.u32 2147483647, %v927
        %vm1295 = vcmp.eq.f32.partialorder %v1294, 8.507059e+37
        %v1296 = vand.u32 %v927, 2147483648
        %v1297 = vor.u32 1.1754944e-38, %v1296
        %v1298 = vsel %vm1295, %v1297, %v1293
        %v1299 = vmul.f32 1.0, %v1298
        %v1300 = vrcp.pop %v928
        %v1301 = vmul.f32 %v928, %v1300
        %v1302 = vsub.f32 1.0, %v1301
        %v1303 = vmul.f32 %v1300, %v1302
        %v1304 = vadd.f32 %v1300, %v1303
        %vm1305 = vweird.f32 %v928
        %vm1306 = vweird.f32 %v1300
        %vm1307 = vmor %vm1305, %vm1306
        %v1308 = vsel %vm1307, %v1300, %v1304
        %v1309 = vand.u32 2147483647, %v928
        %vm1310 = vcmp.eq.f32.partialorder %v1309, 8.507059e+37
        %v1311 = vand.u32 %v928, 2147483648
        %v1312 = vor.u32 1.1754944e-38, %v1311
        %v1313 = vsel %vm1310, %v1312, %v1308
        %v1314 = vmul.f32 1.0, %v1313
        %v1315 = vrcp.pop %v929
        %v1316 = vmul.f32 %v929, %v1315
        %v1317 = vsub.f32 1.0, %v1316
        %v1318 = vmul.f32 %v1315, %v1317
        %v1319 = vadd.f32 %v1315, %v1318
        %vm1320 = vweird.f32 %v929
        %vm1321 = vweird.f32 %v1315
        %vm1322 = vmor %vm1320, %vm1321
        %v1323 = vsel %vm1322, %v1315, %v1319
        %v1324 = vand.u32 2147483647, %v929
        %vm1325 = vcmp.eq.f32.partialorder %v1324, 8.507059e+37
        %v1326 = vand.u32 %v929, 2147483648
        %v1327 = vor.u32 1.1754944e-38, %v1326
        %v1328 = vsel %vm1325, %v1327, %v1323
        %v1329 = vmul.f32 1.0, %v1328
        %v1330 = vrcp.pop %v930
        %v1331 = vmul.f32 %v930, %v1330
        %v1332 = vsub.f32 1.0, %v1331
        %v1333 = vmul.f32 %v1330, %v1332
        %v1334 = vadd.f32 %v1330, %v1333
        %vm1335 = vweird.f32 %v930
        %vm1336 = vweird.f32 %v1330
        %vm1337 = vmor %vm1335, %vm1336
        %v1338 = vsel %vm1337, %v1330, %v1334
        %v1339 = vand.u32 2147483647, %v930
        %vm1340 = vcmp.eq.f32.partialorder %v1339, 8.507059e+37
        %v1341 = vand.u32 %v930, 2147483648
        %v1342 = vor.u32 1.1754944e-38, %v1341
        %v1343 = vsel %vm1340, %v1342, %v1338
        %v1344 = vmul.f32 1.0, %v1343
        %v1345 = vrcp.pop %v931
        %v1346 = vmul.f32 %v931, %v1345
        %v1347 = vsub.f32 1.0, %v1346
        %v1348 = vmul.f32 %v1345, %v1347
        %v1349 = vadd.f32 %v1345, %v1348
        %vm1350 = vweird.f32 %v931
        %vm1351 = vweird.f32 %v1345
        %vm1352 = vmor %vm1350, %vm1351
        %v1353 = vsel %vm1352, %v1345, %v1349
        %v1354 = vand.u32 2147483647, %v931
        %vm1355 = vcmp.eq.f32.partialorder %v1354, 8.507059e+37
        %v1356 = vand.u32 %v931, 2147483648
        %v1357 = vor.u32 1.1754944e-38, %v1356
        %v1358 = vsel %vm1355, %v1357, %v1353
        %v1359 = vmul.f32 1.0, %v1358
        %v1360 = vrcp.pop %v932
        %v1361 = vmul.f32 %v932, %v1360
        %v1362 = vsub.f32 1.0, %v1361
        %v1363 = vmul.f32 %v1360, %v1362
        %v1364 = vadd.f32 %v1360, %v1363
        %vm1365 = vweird.f32 %v932
        %vm1366 = vweird.f32 %v1360
        %vm1367 = vmor %vm1365, %vm1366
        %v1368 = vsel %vm1367, %v1360, %v1364
        %v1369 = vand.u32 2147483647, %v932
        %vm1370 = vcmp.eq.f32.partialorder %v1369, 8.507059e+37
        %v1371 = vand.u32 %v932, 2147483648
        %v1372 = vor.u32 1.1754944e-38, %v1371
        %v1373 = vsel %vm1370, %v1372, %v1368
        %v1374 = vmul.f32 1.0, %v1373
        %v1375 = vrcp.pop %v933
        %v1376 = vmul.f32 %v933, %v1375
        %v1377 = vsub.f32 1.0, %v1376
        %v1378 = vmul.f32 %v1375, %v1377
        %v1379 = vadd.f32 %v1375, %v1378
        %vm1380 = vweird.f32 %v933
        %vm1381 = vweird.f32 %v1375
        %vm1382 = vmor %vm1380, %vm1381
        %v1383 = vsel %vm1382, %v1375, %v1379
        %v1384 = vand.u32 2147483647, %v933
        %vm1385 = vcmp.eq.f32.partialorder %v1384, 8.507059e+37
        %v1386 = vand.u32 %v933, 2147483648
        %v1387 = vor.u32 1.1754944e-38, %v1386
        %v1388 = vsel %vm1385, %v1387, %v1383
        %v1389 = vmul.f32 1.0, %v1388
        %v1390 = vrcp.pop %v934
        %v1391 = vmul.f32 %v934, %v1390
        %v1392 = vsub.f32 1.0, %v1391
        %v1393 = vmul.f32 %v1390, %v1392
        %v1394 = vadd.f32 %v1390, %v1393
        %vm1395 = vweird.f32 %v934
        %vm1396 = vweird.f32 %v1390
        %vm1397 = vmor %vm1395, %vm1396
        %v1398 = vsel %vm1397, %v1390, %v1394
        %v1399 = vand.u32 2147483647, %v934
        %vm1400 = vcmp.eq.f32.partialorder %v1399, 8.507059e+37
        %v1401 = vand.u32 %v934, 2147483648
        %v1402 = vor.u32 1.1754944e-38, %v1401
        %v1403 = vsel %vm1400, %v1402, %v1398
        %v1404 = vmul.f32 1.0, %v1403
        %v1405 = vrcp.pop %v935
        %v1406 = vmul.f32 %v935, %v1405
        %v1407 = vsub.f32 1.0, %v1406
        %v1408 = vmul.f32 %v1405, %v1407
        %v1409 = vadd.f32 %v1405, %v1408
        %vm1410 = vweird.f32 %v935
        %vm1411 = vweird.f32 %v1405
        %vm1412 = vmor %vm1410, %vm1411
        %v1413 = vsel %vm1412, %v1405, %v1409
        %v1414 = vand.u32 2147483647, %v935
        %vm1415 = vcmp.eq.f32.partialorder %v1414, 8.507059e+37
        %v1416 = vand.u32 %v935, 2147483648
        %v1417 = vor.u32 1.1754944e-38, %v1416
        %v1418 = vsel %vm1415, %v1417, %v1413
        %v1419 = vmul.f32 1.0, %v1418
        %v1420 = vrcp.pop %v936
        %v1421 = vmul.f32 %v936, %v1420
        %v1422 = vsub.f32 1.0, %v1421
        %v1423 = vmul.f32 %v1420, %v1422
        %v1424 = vadd.f32 %v1420, %v1423
        %vm1425 = vweird.f32 %v936
        %vm1426 = vweird.f32 %v1420
        %vm1427 = vmor %vm1425, %vm1426
        %v1428 = vsel %vm1427, %v1420, %v1424
        %v1429 = vand.u32 2147483647, %v936
        %vm1430 = vcmp.eq.f32.partialorder %v1429, 8.507059e+37
        %v1431 = vand.u32 %v936, 2147483648
        %v1432 = vor.u32 1.1754944e-38, %v1431
        %v1433 = vsel %vm1430, %v1432, %v1428
        %v1434 = vmul.f32 1.0, %v1433
        %v1435 = vrcp.pop %v937
        %v1436 = vmul.f32 %v937, %v1435
        %v1437 = vsub.f32 1.0, %v1436
        %v1438 = vmul.f32 %v1435, %v1437
        %v1439 = vadd.f32 %v1435, %v1438
        %vm1440 = vweird.f32 %v937
        %vm1441 = vweird.f32 %v1435
        %vm1442 = vmor %vm1440, %vm1441
        %v1443 = vsel %vm1442, %v1435, %v1439
        %v1444 = vand.u32 2147483647, %v937
        %vm1445 = vcmp.eq.f32.partialorder %v1444, 8.507059e+37
        %v1446 = vand.u32 %v937, 2147483648
        %v1447 = vor.u32 1.1754944e-38, %v1446
        %v1448 = vsel %vm1445, %v1447, %v1443
        %v1449 = vmul.f32 1.0, %v1448
        %v1450 = vrcp.pop %v938
        %v1451 = vmul.f32 %v938, %v1450
        %v1452 = vsub.f32 1.0, %v1451
        %v1453 = vmul.f32 %v1450, %v1452
        %v1454 = vadd.f32 %v1450, %v1453
        %vm1455 = vweird.f32 %v938
        %vm1456 = vweird.f32 %v1450
        %vm1457 = vmor %vm1455, %vm1456
        %v1458 = vsel %vm1457, %v1450, %v1454
        %v1459 = vand.u32 2147483647, %v938
        %vm1460 = vcmp.eq.f32.partialorder %v1459, 8.507059e+37
        %v1461 = vand.u32 %v938, 2147483648
        %v1462 = vor.u32 1.1754944e-38, %v1461
        %v1463 = vsel %vm1460, %v1462, %v1458
        %v1464 = vmul.f32 1.0, %v1463
        %v1465 = vrcp.pop %v939
        %v1466 = vmul.f32 %v939, %v1465
        %v1467 = vsub.f32 1.0, %v1466
        %v1468 = vmul.f32 %v1465, %v1467
        %v1469 = vadd.f32 %v1465, %v1468
        %vm1470 = vweird.f32 %v939
        %vm1471 = vweird.f32 %v1465
        %vm1472 = vmor %vm1470, %vm1471
        %v1473 = vsel %vm1472, %v1465, %v1469
        %v1474 = vand.u32 2147483647, %v939
        %vm1475 = vcmp.eq.f32.partialorder %v1474, 8.507059e+37
        %v1476 = vand.u32 %v939, 2147483648
        %v1477 = vor.u32 1.1754944e-38, %v1476
        %v1478 = vsel %vm1475, %v1477, %v1473
        %v1479 = vmul.f32 1.0, %v1478
        %v1480 = vrcp.pop %v940
        %v1481 = vmul.f32 %v940, %v1480
        %v1482 = vsub.f32 1.0, %v1481
        %v1483 = vmul.f32 %v1480, %v1482
        %v1484 = vadd.f32 %v1480, %v1483
        %vm1485 = vweird.f32 %v940
        %vm1486 = vweird.f32 %v1480
        %vm1487 = vmor %vm1485, %vm1486
        %v1488 = vsel %vm1487, %v1480, %v1484
        %v1489 = vand.u32 2147483647, %v940
        %vm1490 = vcmp.eq.f32.partialorder %v1489, 8.507059e+37
        %v1491 = vand.u32 %v940, 2147483648
        %v1492 = vor.u32 1.1754944e-38, %v1491
        %v1493 = vsel %vm1490, %v1492, %v1488
        %v1494 = vmul.f32 1.0, %v1493
        %v1495 = vrcp.pop %v941
        %v1496 = vmul.f32 %v941, %v1495
        %v1497 = vsub.f32 1.0, %v1496
        %v1498 = vmul.f32 %v1495, %v1497
        %v1499 = vadd.f32 %v1495, %v1498
        %vm1500 = vweird.f32 %v941
        %vm1501 = vweird.f32 %v1495
        %vm1502 = vmor %vm1500, %vm1501
        %v1503 = vsel %vm1502, %v1495, %v1499
        %v1504 = vand.u32 2147483647, %v941
        %vm1505 = vcmp.eq.f32.partialorder %v1504, 8.507059e+37
        %v1506 = vand.u32 %v941, 2147483648
        %v1507 = vor.u32 1.1754944e-38, %v1506
        %v1508 = vsel %vm1505, %v1507, %v1503
        %v1509 = vmul.f32 1.0, %v1508
        %v1510 = vrcp.pop %v942
        %v1511 = vmul.f32 %v942, %v1510
        %v1512 = vsub.f32 1.0, %v1511
        %v1513 = vmul.f32 %v1510, %v1512
        %v1514 = vadd.f32 %v1510, %v1513
        %vm1515 = vweird.f32 %v942
        %vm1516 = vweird.f32 %v1510
        %vm1517 = vmor %vm1515, %vm1516
        %v1518 = vsel %vm1517, %v1510, %v1514
        %v1519 = vand.u32 2147483647, %v942
        %vm1520 = vcmp.eq.f32.partialorder %v1519, 8.507059e+37
        %v1521 = vand.u32 %v942, 2147483648
        %v1522 = vor.u32 1.1754944e-38, %v1521
        %v1523 = vsel %vm1520, %v1522, %v1518
        %v1524 = vmul.f32 1.0, %v1523
        %v1525 = vrcp.pop %v943
        %v1526 = vmul.f32 %v943, %v1525
        %v1527 = vsub.f32 1.0, %v1526
        %v1528 = vmul.f32 %v1525, %v1527
        %v1529 = vadd.f32 %v1525, %v1528
        %vm1530 = vweird.f32 %v943
        %vm1531 = vweird.f32 %v1525
        %vm1532 = vmor %vm1530, %vm1531
        %v1533 = vsel %vm1532, %v1525, %v1529
        %v1534 = vand.u32 2147483647, %v943
        %vm1535 = vcmp.eq.f32.partialorder %v1534, 8.507059e+37
        %v1536 = vand.u32 %v943, 2147483648
        %v1537 = vor.u32 1.1754944e-38, %v1536
        %v1538 = vsel %vm1535, %v1537, %v1533
        %v1539 = vmul.f32 1.0, %v1538
        %v1540 = vrcp.pop %v944
        %v1541 = vmul.f32 %v944, %v1540
        %v1542 = vsub.f32 1.0, %v1541
        %v1543 = vmul.f32 %v1540, %v1542
        %v1544 = vadd.f32 %v1540, %v1543
        %vm1545 = vweird.f32 %v944
        %vm1546 = vweird.f32 %v1540
        %vm1547 = vmor %vm1545, %vm1546
        %v1548 = vsel %vm1547, %v1540, %v1544
        %v1549 = vand.u32 2147483647, %v944
        %vm1550 = vcmp.eq.f32.partialorder %v1549, 8.507059e+37
        %v1551 = vand.u32 %v944, 2147483648
        %v1552 = vor.u32 1.1754944e-38, %v1551
        %v1553 = vsel %vm1550, %v1552, %v1548
        %v1554 = vmul.f32 1.0, %v1553
        %v1555 = vrcp.pop %v945
        %v1556 = vmul.f32 %v945, %v1555
        %v1557 = vsub.f32 1.0, %v1556
        %v1558 = vmul.f32 %v1555, %v1557
        %v1559 = vadd.f32 %v1555, %v1558
        %vm1560 = vweird.f32 %v945
        %vm1561 = vweird.f32 %v1555
        %vm1562 = vmor %vm1560, %vm1561
        %v1563 = vsel %vm1562, %v1555, %v1559
        %v1564 = vand.u32 2147483647, %v945
        %vm1565 = vcmp.eq.f32.partialorder %v1564, 8.507059e+37
        %v1566 = vand.u32 %v945, 2147483648
        %v1567 = vor.u32 1.1754944e-38, %v1566
        %v1568 = vsel %vm1565, %v1567, %v1563
        %v1569 = vmul.f32 1.0, %v1568
        %v1570 = vrcp.pop %v946
        %v1571 = vmul.f32 %v946, %v1570
        %v1572 = vsub.f32 1.0, %v1571
        %v1573 = vmul.f32 %v1570, %v1572
        %v1574 = vadd.f32 %v1570, %v1573
        %vm1575 = vweird.f32 %v946
        %vm1576 = vweird.f32 %v1570
        %vm1577 = vmor %vm1575, %vm1576
        %v1578 = vsel %vm1577, %v1570, %v1574
        %v1579 = vand.u32 2147483647, %v946
        %vm1580 = vcmp.eq.f32.partialorder %v1579, 8.507059e+37
        %v1581 = vand.u32 %v946, 2147483648
        %v1582 = vor.u32 1.1754944e-38, %v1581
        %v1583 = vsel %vm1580, %v1582, %v1578
        %v1584 = vmul.f32 1.0, %v1583
        %v1585 = vrcp.pop %v947
        %v1586 = vmul.f32 %v947, %v1585
        %v1587 = vsub.f32 1.0, %v1586
        %v1588 = vmul.f32 %v1585, %v1587
        %v1589 = vadd.f32 %v1585, %v1588
        %vm1590 = vweird.f32 %v947
        %vm1591 = vweird.f32 %v1585
        %vm1592 = vmor %vm1590, %vm1591
        %v1593 = vsel %vm1592, %v1585, %v1589
        %v1594 = vand.u32 2147483647, %v947
        %vm1595 = vcmp.eq.f32.partialorder %v1594, 8.507059e+37
        %v1596 = vand.u32 %v947, 2147483648
        %v1597 = vor.u32 1.1754944e-38, %v1596
        %v1598 = vsel %vm1595, %v1597, %v1593
        %v1599 = vmul.f32 1.0, %v1598
        %v1600 = vrcp.pop %v948
        %v1601 = vmul.f32 %v948, %v1600
        %v1602 = vsub.f32 1.0, %v1601
        %v1603 = vmul.f32 %v1600, %v1602
        %v1604 = vadd.f32 %v1600, %v1603
        %vm1605 = vweird.f32 %v948
        %vm1606 = vweird.f32 %v1600
        %vm1607 = vmor %vm1605, %vm1606
        %v1608 = vsel %vm1607, %v1600, %v1604
        %v1609 = vand.u32 2147483647, %v948
        %vm1610 = vcmp.eq.f32.partialorder %v1609, 8.507059e+37
        %v1611 = vand.u32 %v948, 2147483648
        %v1612 = vor.u32 1.1754944e-38, %v1611
        %v1613 = vsel %vm1610, %v1612, %v1608
        %v1614 = vmul.f32 1.0, %v1613
        %v1615 = vrcp.pop %v949
        %v1616 = vmul.f32 %v949, %v1615
        %v1617 = vsub.f32 1.0, %v1616
        %v1618 = vmul.f32 %v1615, %v1617
        %v1619 = vadd.f32 %v1615, %v1618
        %vm1620 = vweird.f32 %v949
        %vm1621 = vweird.f32 %v1615
        %vm1622 = vmor %vm1620, %vm1621
        %v1623 = vsel %vm1622, %v1615, %v1619
        %v1624 = vand.u32 2147483647, %v949
        %vm1625 = vcmp.eq.f32.partialorder %v1624, 8.507059e+37
        %v1626 = vand.u32 %v949, 2147483648
        %v1627 = vor.u32 1.1754944e-38, %v1626
        %v1628 = vsel %vm1625, %v1627, %v1623
        %v1629 = vmul.f32 1.0, %v1628
        %v1630 = vrcp.pop %v950
        %v1631 = vmul.f32 %v950, %v1630
        %v1632 = vsub.f32 1.0, %v1631
        %v1633 = vmul.f32 %v1630, %v1632
        %v1634 = vadd.f32 %v1630, %v1633
        %vm1635 = vweird.f32 %v950
        %vm1636 = vweird.f32 %v1630
        %vm1637 = vmor %vm1635, %vm1636
        %v1638 = vsel %vm1637, %v1630, %v1634
        %v1639 = vand.u32 2147483647, %v950
        %vm1640 = vcmp.eq.f32.partialorder %v1639, 8.507059e+37
        %v1641 = vand.u32 %v950, 2147483648
        %v1642 = vor.u32 1.1754944e-38, %v1641
        %v1643 = vsel %vm1640, %v1642, %v1638
        %v1644 = vmul.f32 1.0, %v1643
        %v1645 = vrcp.pop %v951
        %v1646 = vmul.f32 %v951, %v1645
        %v1647 = vsub.f32 1.0, %v1646
        %v1648 = vmul.f32 %v1645, %v1647
        %v1649 = vadd.f32 %v1645, %v1648
        %vm1650 = vweird.f32 %v951
        %vm1651 = vweird.f32 %v1645
        %vm1652 = vmor %vm1650, %vm1651
        %v1653 = vsel %vm1652, %v1645, %v1649
        %v1654 = vand.u32 2147483647, %v951
        %vm1655 = vcmp.eq.f32.partialorder %v1654, 8.507059e+37
        %v1656 = vand.u32 %v951, 2147483648
        %v1657 = vor.u32 1.1754944e-38, %v1656
        %v1658 = vsel %vm1655, %v1657, %v1653
        %v1659 = vmul.f32 1.0, %v1658
        %v1660 = vrcp.pop %v952
        %v1661 = vmul.f32 %v952, %v1660
        %v1662 = vsub.f32 1.0, %v1661
        %v1663 = vmul.f32 %v1660, %v1662
        %v1664 = vadd.f32 %v1660, %v1663
        %vm1665 = vweird.f32 %v952
        %vm1666 = vweird.f32 %v1660
        %vm1667 = vmor %vm1665, %vm1666
        %v1668 = vsel %vm1667, %v1660, %v1664
        %v1669 = vand.u32 2147483647, %v952
        %vm1670 = vcmp.eq.f32.partialorder %v1669, 8.507059e+37
        %v1671 = vand.u32 %v952, 2147483648
        %v1672 = vor.u32 1.1754944e-38, %v1671
        %v1673 = vsel %vm1670, %v1672, %v1668
        %v1674 = vmul.f32 1.0, %v1673
        %v1675 = vrcp.pop %v953
        %v1676 = vmul.f32 %v953, %v1675
        %v1677 = vsub.f32 1.0, %v1676
        %v1678 = vmul.f32 %v1675, %v1677
        %v1679 = vadd.f32 %v1675, %v1678
        %vm1680 = vweird.f32 %v953
        %vm1681 = vweird.f32 %v1675
        %vm1682 = vmor %vm1680, %vm1681
        %v1683 = vsel %vm1682, %v1675, %v1679
        %v1684 = vand.u32 2147483647, %v953
        %vm1685 = vcmp.eq.f32.partialorder %v1684, 8.507059e+37
        %v1686 = vand.u32 %v953, 2147483648
        %v1687 = vor.u32 1.1754944e-38, %v1686
        %v1688 = vsel %vm1685, %v1687, %v1683
        %v1689 = vmul.f32 1.0, %v1688
        %v1690 = vrcp.pop %v954
        %v1691 = vmul.f32 %v954, %v1690
        %v1692 = vsub.f32 1.0, %v1691
        %v1693 = vmul.f32 %v1690, %v1692
        %v1694 = vadd.f32 %v1690, %v1693
        %vm1695 = vweird.f32 %v954
        %vm1696 = vweird.f32 %v1690
        %vm1697 = vmor %vm1695, %vm1696
        %v1698 = vsel %vm1697, %v1690, %v1694
        %v1699 = vand.u32 2147483647, %v954
        %vm1700 = vcmp.eq.f32.partialorder %v1699, 8.507059e+37
        %v1701 = vand.u32 %v954, 2147483648
        %v1702 = vor.u32 1.1754944e-38, %v1701
        %v1703 = vsel %vm1700, %v1702, %v1698
        %v1704 = vmul.f32 1.0, %v1703
        %v1705 = vrcp.pop %v955
        %v1706 = vmul.f32 %v955, %v1705
        %v1707 = vsub.f32 1.0, %v1706
        %v1708 = vmul.f32 %v1705, %v1707
        %v1709 = vadd.f32 %v1705, %v1708
        %vm1710 = vweird.f32 %v955
        %vm1711 = vweird.f32 %v1705
        %vm1712 = vmor %vm1710, %vm1711
        %v1713 = vsel %vm1712, %v1705, %v1709
        %v1714 = vand.u32 2147483647, %v955
        %vm1715 = vcmp.eq.f32.partialorder %v1714, 8.507059e+37
        %v1716 = vand.u32 %v955, 2147483648
        %v1717 = vor.u32 1.1754944e-38, %v1716
        %v1718 = vsel %vm1715, %v1717, %v1713
        %v1719 = vmul.f32 1.0, %v1718
        %v1720 = vrcp.pop %v956
        %v1721 = vmul.f32 %v956, %v1720
        %v1722 = vsub.f32 1.0, %v1721
        %v1723 = vmul.f32 %v1720, %v1722
        %v1724 = vadd.f32 %v1720, %v1723
        %vm1725 = vweird.f32 %v956
        %vm1726 = vweird.f32 %v1720
        %vm1727 = vmor %vm1725, %vm1726
        %v1728 = vsel %vm1727, %v1720, %v1724
        %v1729 = vand.u32 2147483647, %v956
        %vm1730 = vcmp.eq.f32.partialorder %v1729, 8.507059e+37
        %v1731 = vand.u32 %v956, 2147483648
        %v1732 = vor.u32 1.1754944e-38, %v1731
        %v1733 = vsel %vm1730, %v1732, %v1728
        %v1734 = vmul.f32 1.0, %v1733
        %v1735 = vrcp.pop %v957
        %v1736 = vmul.f32 %v957, %v1735
        %v1737 = vsub.f32 1.0, %v1736
        %v1738 = vmul.f32 %v1735, %v1737
        %v1739 = vadd.f32 %v1735, %v1738
        %vm1740 = vweird.f32 %v957
        %vm1741 = vweird.f32 %v1735
        %vm1742 = vmor %vm1740, %vm1741
        %v1743 = vsel %vm1742, %v1735, %v1739
        %v1744 = vand.u32 2147483647, %v957
        %vm1745 = vcmp.eq.f32.partialorder %v1744, 8.507059e+37
        %v1746 = vand.u32 %v957, 2147483648
        %v1747 = vor.u32 1.1754944e-38, %v1746
        %v1748 = vsel %vm1745, %v1747, %v1743
        %v1749 = vmul.f32 1.0, %v1748
        %v1750 = vrcp.pop %v958
        %v1751 = vmul.f32 %v958, %v1750
        %v1752 = vsub.f32 1.0, %v1751
        %v1753 = vmul.f32 %v1750, %v1752
        %v1754 = vadd.f32 %v1750, %v1753
        %vm1755 = vweird.f32 %v958
        %vm1756 = vweird.f32 %v1750
        %vm1757 = vmor %vm1755, %vm1756
        %v1758 = vsel %vm1757, %v1750, %v1754
        %v1759 = vand.u32 2147483647, %v958
        %vm1760 = vcmp.eq.f32.partialorder %v1759, 8.507059e+37
        %v1761 = vand.u32 %v958, 2147483648
        %v1762 = vor.u32 1.1754944e-38, %v1761
        %v1763 = vsel %vm1760, %v1762, %v1758
        %v1764 = vmul.f32 1.0, %v1763
        %v1765 = vrcp.pop %v959
        %v1766 = vmul.f32 %v959, %v1765
        %v1767 = vsub.f32 1.0, %v1766
        %v1768 = vmul.f32 %v1765, %v1767
        %v1769 = vadd.f32 %v1765, %v1768
        %vm1770 = vweird.f32 %v959
        %vm1771 = vweird.f32 %v1765
        %vm1772 = vmor %vm1770, %vm1771
        %v1773 = vsel %vm1772, %v1765, %v1769
        %v1774 = vand.u32 2147483647, %v959
        %vm1775 = vcmp.eq.f32.partialorder %v1774, 8.507059e+37
        %v1776 = vand.u32 %v959, 2147483648
        %v1777 = vor.u32 1.1754944e-38, %v1776
        %v1778 = vsel %vm1775, %v1777, %v1773
        %v1779 = vmul.f32 1.0, %v1778
        %v1780 = vrcp.pop %v960
        %v1781 = vmul.f32 %v960, %v1780
        %v1782 = vsub.f32 1.0, %v1781
        %v1783 = vmul.f32 %v1780, %v1782
        %v1784 = vadd.f32 %v1780, %v1783
        %vm1785 = vweird.f32 %v960
        %vm1786 = vweird.f32 %v1780
        %vm1787 = vmor %vm1785, %vm1786
        %v1788 = vsel %vm1787, %v1780, %v1784
        %v1789 = vand.u32 2147483647, %v960
        %vm1790 = vcmp.eq.f32.partialorder %v1789, 8.507059e+37
        %v1791 = vand.u32 %v960, 2147483648
        %v1792 = vor.u32 1.1754944e-38, %v1791
        %v1793 = vsel %vm1790, %v1792, %v1788
        %v1794 = vmul.f32 1.0, %v1793
        %v1795 = vrcp.pop %v961
        %v1796 = vmul.f32 %v961, %v1795
        %v1797 = vsub.f32 1.0, %v1796
        %v1798 = vmul.f32 %v1795, %v1797
        %v1799 = vadd.f32 %v1795, %v1798
        %vm1800 = vweird.f32 %v961
        %vm1801 = vweird.f32 %v1795
        %vm1802 = vmor %vm1800, %vm1801
        %v1803 = vsel %vm1802, %v1795, %v1799
        %v1804 = vand.u32 2147483647, %v961
        %vm1805 = vcmp.eq.f32.partialorder %v1804, 8.507059e+37
        %v1806 = vand.u32 %v961, 2147483648
        %v1807 = vor.u32 1.1754944e-38, %v1806
        %v1808 = vsel %vm1805, %v1807, %v1803
        %v1809 = vmul.f32 1.0, %v1808
        %v1810 = vrcp.pop %v962
        %v1811 = vmul.f32 %v962, %v1810
        %v1812 = vsub.f32 1.0, %v1811
        %v1813 = vmul.f32 %v1810, %v1812
        %v1814 = vadd.f32 %v1810, %v1813
        %vm1815 = vweird.f32 %v962
        %vm1816 = vweird.f32 %v1810
        %vm1817 = vmor %vm1815, %vm1816
        %v1818 = vsel %vm1817, %v1810, %v1814
        %v1819 = vand.u32 2147483647, %v962
        %vm1820 = vcmp.eq.f32.partialorder %v1819, 8.507059e+37
        %v1821 = vand.u32 %v962, 2147483648
        %v1822 = vor.u32 1.1754944e-38, %v1821
        %v1823 = vsel %vm1820, %v1822, %v1818
        %v1824 = vmul.f32 1.0, %v1823
        %v1825 = vrcp.pop %v963
        %v1826 = vmul.f32 %v963, %v1825
        %v1827 = vsub.f32 1.0, %v1826
        %v1828 = vmul.f32 %v1825, %v1827
        %v1829 = vadd.f32 %v1825, %v1828
        %vm1830 = vweird.f32 %v963
        %vm1831 = vweird.f32 %v1825
        %vm1832 = vmor %vm1830, %vm1831
        %v1833 = vsel %vm1832, %v1825, %v1829
        %v1834 = vand.u32 2147483647, %v963
        %vm1835 = vcmp.eq.f32.partialorder %v1834, 8.507059e+37
        %v1836 = vand.u32 %v963, 2147483648
        %v1837 = vor.u32 1.1754944e-38, %v1836
        %v1838 = vsel %vm1835, %v1837, %v1833
        %v1839 = vmul.f32 1.0, %v1838
        %v1840 = vrcp.pop %v964
        %v1841 = vmul.f32 %v964, %v1840
        %v1842 = vsub.f32 1.0, %v1841
        %v1843 = vmul.f32 %v1840, %v1842
        %v1844 = vadd.f32 %v1840, %v1843
        %vm1845 = vweird.f32 %v964
        %vm1846 = vweird.f32 %v1840
        %vm1847 = vmor %vm1845, %vm1846
        %v1848 = vsel %vm1847, %v1840, %v1844
        %v1849 = vand.u32 2147483647, %v964
        %vm1850 = vcmp.eq.f32.partialorder %v1849, 8.507059e+37
        %v1851 = vand.u32 %v964, 2147483648
        %v1852 = vor.u32 1.1754944e-38, %v1851
        %v1853 = vsel %vm1850, %v1852, %v1848
        %v1854 = vmul.f32 1.0, %v1853
        %v1855 = vrcp.pop %v965
        %v1856 = vmul.f32 %v965, %v1855
        %v1857 = vsub.f32 1.0, %v1856
        %v1858 = vmul.f32 %v1855, %v1857
        %v1859 = vadd.f32 %v1855, %v1858
        %vm1860 = vweird.f32 %v965
        %vm1861 = vweird.f32 %v1855
        %vm1862 = vmor %vm1860, %vm1861
        %v1863 = vsel %vm1862, %v1855, %v1859
        %v1864 = vand.u32 2147483647, %v965
        %vm1865 = vcmp.eq.f32.partialorder %v1864, 8.507059e+37
        %v1866 = vand.u32 %v965, 2147483648
        %v1867 = vor.u32 1.1754944e-38, %v1866
        %v1868 = vsel %vm1865, %v1867, %v1863
        %v1869 = vmul.f32 1.0, %v1868
        %v1870 = vrcp.pop %v966
        %v1871 = vmul.f32 %v966, %v1870
        %v1872 = vsub.f32 1.0, %v1871
        %v1873 = vmul.f32 %v1870, %v1872
        %v1874 = vadd.f32 %v1870, %v1873
        %vm1875 = vweird.f32 %v966
        %vm1876 = vweird.f32 %v1870
        %vm1877 = vmor %vm1875, %vm1876
        %v1878 = vsel %vm1877, %v1870, %v1874
        %v1879 = vand.u32 2147483647, %v966
        %vm1880 = vcmp.eq.f32.partialorder %v1879, 8.507059e+37
        %v1881 = vand.u32 %v966, 2147483648
        %v1882 = vor.u32 1.1754944e-38, %v1881
        %v1883 = vsel %vm1880, %v1882, %v1878
        %v1884 = vmul.f32 1.0, %v1883
        %v1885 = vrcp.pop %v967
        %v1886 = vmul.f32 %v967, %v1885
        %v1887 = vsub.f32 1.0, %v1886
        %v1888 = vmul.f32 %v1885, %v1887
        %v1889 = vadd.f32 %v1885, %v1888
        %vm1890 = vweird.f32 %v967
        %vm1891 = vweird.f32 %v1885
        %vm1892 = vmor %vm1890, %vm1891
        %v1893 = vsel %vm1892, %v1885, %v1889
        %v1894 = vand.u32 2147483647, %v967
        %vm1895 = vcmp.eq.f32.partialorder %v1894, 8.507059e+37
        %v1896 = vand.u32 %v967, 2147483648
        %v1897 = vor.u32 1.1754944e-38, %v1896
        %v1898 = vsel %vm1895, %v1897, %v1893
        %v1899 = vmul.f32 1.0, %v1898
        %v1900 = vrcp.pop %v968
        %v1901 = vmul.f32 %v968, %v1900
        %v1902 = vsub.f32 1.0, %v1901
        %v1903 = vmul.f32 %v1900, %v1902
        %v1904 = vadd.f32 %v1900, %v1903
        %vm1905 = vweird.f32 %v968
        %vm1906 = vweird.f32 %v1900
        %vm1907 = vmor %vm1905, %vm1906
        %v1908 = vsel %vm1907, %v1900, %v1904
        %v1909 = vand.u32 2147483647, %v968
        %vm1910 = vcmp.eq.f32.partialorder %v1909, 8.507059e+37
        %v1911 = vand.u32 %v968, 2147483648
        %v1912 = vor.u32 1.1754944e-38, %v1911
        %v1913 = vsel %vm1910, %v1912, %v1908
        %v1914 = vmul.f32 1.0, %v1913
        %v1915 = vrcp.pop %v969
        %v1916 = vmul.f32 %v969, %v1915
        %v1917 = vsub.f32 1.0, %v1916
        %v1918 = vmul.f32 %v1915, %v1917
        %v1919 = vadd.f32 %v1915, %v1918
        %vm1920 = vweird.f32 %v969
        %vm1921 = vweird.f32 %v1915
        %vm1922 = vmor %vm1920, %vm1921
        %v1923 = vsel %vm1922, %v1915, %v1919
        %v1924 = vand.u32 2147483647, %v969
        %vm1925 = vcmp.eq.f32.partialorder %v1924, 8.507059e+37
        %v1926 = vand.u32 %v969, 2147483648
        %v1927 = vor.u32 1.1754944e-38, %v1926
        %v1928 = vsel %vm1925, %v1927, %v1923
        %v1929 = vmul.f32 1.0, %v1928
        %v1930 = vmul.f32 %v984, 1.0614054
        %v1931 = vmul.f32 %v999, 1.0614054
        %v1932 = vmul.f32 %v1014, 1.0614054
        %v1933 = vmul.f32 %v1029, 1.0614054
        %v1934 = vmul.f32 %v1044, 1.0614054
        %v1935 = vmul.f32 %v1059, 1.0614054
        %v1936 = vmul.f32 %v1074, 1.0614054
        %v1937 = vmul.f32 %v1089, 1.0614054
        %v1938 = vmul.f32 %v1104, 1.0614054
        %v1939 = vmul.f32 %v1119, 1.0614054
        %v1940 = vmul.f32 %v1134, 1.0614054
        %v1941 = vmul.f32 %v1149, 1.0614054
        %v1942 = vmul.f32 %v1164, 1.0614054
        %v1943 = vmul.f32 %v1179, 1.0614054
        %v1944 = vmul.f32 %v1194, 1.0614054
        %v1945 = vmul.f32 %v1209, 1.0614054
        %v1946 = vmul.f32 %v1224, 1.0614054
        %v1947 = vmul.f32 %v1239, 1.0614054
        %v1948 = vmul.f32 %v1254, 1.0614054
        %v1949 = vmul.f32 %v1269, 1.0614054
        %v1950 = vmul.f32 %v1284, 1.0614054
        %v1951 = vmul.f32 %v1299, 1.0614054
        %v1952 = vmul.f32 %v1314, 1.0614054
        %v1953 = vmul.f32 %v1329, 1.0614054
        %v1954 = vmul.f32 %v1344, 1.0614054
        %v1955 = vmul.f32 %v1359, 1.0614054
        %v1956 = vmul.f32 %v1374, 1.0614054
        %v1957 = vmul.f32 %v1389, 1.0614054
        %v1958 = vmul.f32 %v1404, 1.0614054
        %v1959 = vmul.f32 %v1419, 1.0614054
        %v1960 = vmul.f32 %v1434, 1.0614054
        %v1961 = vmul.f32 %v1449, 1.0614054
        %v1962 = vmul.f32 %v1464, 1.0614054
        %v1963 = vmul.f32 %v1479, 1.0614054
        %v1964 = vmul.f32 %v1494, 1.0614054
        %v1965 = vmul.f32 %v1509, 1.0614054
        %v1966 = vmul.f32 %v1524, 1.0614054
        %v1967 = vmul.f32 %v1539, 1.0614054
        %v1968 = vmul.f32 %v1554, 1.0614054
        %v1969 = vmul.f32 %v1569, 1.0614054
        %v1970 = vmul.f32 %v1584, 1.0614054
        %v1971 = vmul.f32 %v1599, 1.0614054
        %v1972 = vmul.f32 %v1614, 1.0614054
        %v1973 = vmul.f32 %v1629, 1.0614054
        %v1974 = vmul.f32 %v1644, 1.0614054
        %v1975 = vmul.f32 %v1659, 1.0614054
        %v1976 = vmul.f32 %v1674, 1.0614054
        %v1977 = vmul.f32 %v1689, 1.0614054
        %v1978 = vmul.f32 %v1704, 1.0614054
        %v1979 = vmul.f32 %v1719, 1.0614054
        %v1980 = vmul.f32 %v1734, 1.0614054
        %v1981 = vmul.f32 %v1749, 1.0614054
        %v1982 = vmul.f32 %v1764, 1.0614054
        %v1983 = vmul.f32 %v1779, 1.0614054
        %v1984 = vmul.f32 %v1794, 1.0614054
        %v1985 = vmul.f32 %v1809, 1.0614054
        %v1986 = vmul.f32 %v1824, 1.0614054
        %v1987 = vmul.f32 %v1839, 1.0614054
        %v1988 = vmul.f32 %v1854, 1.0614054
        %v1989 = vmul.f32 %v1869, 1.0614054
        %v1990 = vmul.f32 %v1884, 1.0614054
        %v1991 = vmul.f32 %v1899, 1.0614054
        %v1992 = vmul.f32 %v1914, 1.0614054
        %v1993 = vmul.f32 %v1929, 1.0614054
        %v1994 = vadd.f32 %v1930, -1.4531521
        %v1995 = vadd.f32 %v1931, -1.4531521
        %v1996 = vadd.f32 %v1932, -1.4531521
        %v1997 = vadd.f32 %v1933, -1.4531521
        %v1998 = vadd.f32 %v1934, -1.4531521
        %v1999 = vadd.f32 %v1935, -1.4531521
        %v2000 = vadd.f32 %v1936, -1.4531521
        %v2001 = vadd.f32 %v1937, -1.4531521
        %v2002 = vadd.f32 %v1938, -1.4531521
        %v2003 = vadd.f32 %v1939, -1.4531521
        %v2004 = vadd.f32 %v1940, -1.4531521
        %v2005 = vadd.f32 %v1941, -1.4531521
        %v2006 = vadd.f32 %v1942, -1.4531521
        %v2007 = vadd.f32 %v1943, -1.4531521
        %v2008 = vadd.f32 %v1944, -1.4531521
        %v2009 = vadd.f32 %v1945, -1.4531521
        %v2010 = vadd.f32 %v1946, -1.4531521
        %v2011 = vadd.f32 %v1947, -1.4531521
        %v2012 = vadd.f32 %v1948, -1.4531521
        %v2013 = vadd.f32 %v1949, -1.4531521
        %v2014 = vadd.f32 %v1950, -1.4531521
        %v2015 = vadd.f32 %v1951, -1.4531521
        %v2016 = vadd.f32 %v1952, -1.4531521
        %v2017 = vadd.f32 %v1953, -1.4531521
        %v2018 = vadd.f32 %v1954, -1.4531521
        %v2019 = vadd.f32 %v1955, -1.4531521
        %v2020 = vadd.f32 %v1956, -1.4531521
        %v2021 = vadd.f32 %v1957, -1.4531521
        %v2022 = vadd.f32 %v1958, -1.4531521
        %v2023 = vadd.f32 %v1959, -1.4531521
        %v2024 = vadd.f32 %v1960, -1.4531521
        %v2025 = vadd.f32 %v1961, -1.4531521
        %v2026 = vadd.f32 %v1962, -1.4531521
        %v2027 = vadd.f32 %v1963, -1.4531521
        %v2028 = vadd.f32 %v1964, -1.4531521
        %v2029 = vadd.f32 %v1965, -1.4531521
        %v2030 = vadd.f32 %v1966, -1.4531521
        %v2031 = vadd.f32 %v1967, -1.4531521
        %v2032 = vadd.f32 %v1968, -1.4531521
        %v2033 = vadd.f32 %v1969, -1.4531521
        %v2034 = vadd.f32 %v1970, -1.4531521
        %v2035 = vadd.f32 %v1971, -1.4531521
        %v2036 = vadd.f32 %v1972, -1.4531521
        %v2037 = vadd.f32 %v1973, -1.4531521
        %v2038 = vadd.f32 %v1974, -1.4531521
        %v2039 = vadd.f32 %v1975, -1.4531521
        %v2040 = vadd.f32 %v1976, -1.4531521
        %v2041 = vadd.f32 %v1977, -1.4531521
        %v2042 = vadd.f32 %v1978, -1.4531521
        %v2043 = vadd.f32 %v1979, -1.4531521
        %v2044 = vadd.f32 %v1980, -1.4531521
        %v2045 = vadd.f32 %v1981, -1.4531521
        %v2046 = vadd.f32 %v1982, -1.4531521
        %v2047 = vadd.f32 %v1983, -1.4531521
        %v2048 = vadd.f32 %v1984, -1.4531521
        %v2049 = vadd.f32 %v1985, -1.4531521
        %v2050 = vadd.f32 %v1986, -1.4531521
        %v2051 = vadd.f32 %v1987, -1.4531521
        %v2052 = vadd.f32 %v1988, -1.4531521
        %v2053 = vadd.f32 %v1989, -1.4531521
        %v2054 = vadd.f32 %v1990, -1.4531521
        %v2055 = vadd.f32 %v1991, -1.4531521
        %v2056 = vadd.f32 %v1992, -1.4531521
        %v2057 = vadd.f32 %v1993, -1.4531521
        %v2058 = vmul.f32 %v984, %v1994
        %v2059 = vmul.f32 %v999, %v1995
        %v2060 = vmul.f32 %v1014, %v1996
        %v2061 = vmul.f32 %v1029, %v1997
        %v2062 = vmul.f32 %v1044, %v1998
        %v2063 = vmul.f32 %v1059, %v1999
        %v2064 = vmul.f32 %v1074, %v2000
        %v2065 = vmul.f32 %v1089, %v2001
        %v2066 = vmul.f32 %v1104, %v2002
        %v2067 = vmul.f32 %v1119, %v2003
        %v2068 = vmul.f32 %v1134, %v2004
        %v2069 = vmul.f32 %v1149, %v2005
        %v2070 = vmul.f32 %v1164, %v2006
        %v2071 = vmul.f32 %v1179, %v2007
        %v2072 = vmul.f32 %v1194, %v2008
        %v2073 = vmul.f32 %v1209, %v2009
        %v2074 = vmul.f32 %v1224, %v2010
        %v2075 = vmul.f32 %v1239, %v2011
        %v2076 = vmul.f32 %v1254, %v2012
        %v2077 = vmul.f32 %v1269, %v2013
        %v2078 = vmul.f32 %v1284, %v2014
        %v2079 = vmul.f32 %v1299, %v2015
        %v2080 = vmul.f32 %v1314, %v2016
        %v2081 = vmul.f32 %v1329, %v2017
        %v2082 = vmul.f32 %v1344, %v2018
        %v2083 = vmul.f32 %v1359, %v2019
        %v2084 = vmul.f32 %v1374, %v2020
        %v2085 = vmul.f32 %v1389, %v2021
        %v2086 = vmul.f32 %v1404, %v2022
        %v2087 = vmul.f32 %v1419, %v2023
        %v2088 = vmul.f32 %v1434, %v2024
        %v2089 = vmul.f32 %v1449, %v2025
        %v2090 = vmul.f32 %v1464, %v2026
        %v2091 = vmul.f32 %v1479, %v2027
        %v2092 = vmul.f32 %v1494, %v2028
        %v2093 = vmul.f32 %v1509, %v2029
        %v2094 = vmul.f32 %v1524, %v2030
        %v2095 = vmul.f32 %v1539, %v2031
        %v2096 = vmul.f32 %v1554, %v2032
        %v2097 = vmul.f32 %v1569, %v2033
        %v2098 = vmul.f32 %v1584, %v2034
        %v2099 = vmul.f32 %v1599, %v2035
        %v2100 = vmul.f32 %v1614, %v2036
        %v2101 = vmul.f32 %v1629, %v2037
        %v2102 = vmul.f32 %v1644, %v2038
        %v2103 = vmul.f32 %v1659, %v2039
        %v2104 = vmul.f32 %v1674, %v2040
        %v2105 = vmul.f32 %v1689, %v2041
        %v2106 = vmul.f32 %v1704, %v2042
        %v2107 = vmul.f32 %v1719, %v2043
        %v2108 = vmul.f32 %v1734, %v2044
        %v2109 = vmul.f32 %v1749, %v2045
        %v2110 = vmul.f32 %v1764, %v2046
        %v2111 = vmul.f32 %v1779, %v2047
        %v2112 = vmul.f32 %v1794, %v2048
        %v2113 = vmul.f32 %v1809, %v2049
        %v2114 = vmul.f32 %v1824, %v2050
        %v2115 = vmul.f32 %v1839, %v2051
        %v2116 = vmul.f32 %v1854, %v2052
        %v2117 = vmul.f32 %v1869, %v2053
        %v2118 = vmul.f32 %v1884, %v2054
        %v2119 = vmul.f32 %v1899, %v2055
        %v2120 = vmul.f32 %v1914, %v2056
        %v2121 = vmul.f32 %v1929, %v2057
        %v2122 = vadd.f32 %v2058, 1.4214138
        %v2123 = vadd.f32 %v2059, 1.4214138
        %v2124 = vadd.f32 %v2060, 1.4214138
        %v2125 = vadd.f32 %v2061, 1.4214138
        %v2126 = vadd.f32 %v2062, 1.4214138
        %v2127 = vadd.f32 %v2063, 1.4214138
        %v2128 = vadd.f32 %v2064, 1.4214138
        %v2129 = vadd.f32 %v2065, 1.4214138
        %v2130 = vadd.f32 %v2066, 1.4214138
        %v2131 = vadd.f32 %v2067, 1.4214138
        %v2132 = vadd.f32 %v2068, 1.4214138
        %v2133 = vadd.f32 %v2069, 1.4214138
        %v2134 = vadd.f32 %v2070, 1.4214138
        %v2135 = vadd.f32 %v2071, 1.4214138
        %v2136 = vadd.f32 %v2072, 1.4214138
        %v2137 = vadd.f32 %v2073, 1.4214138
        %v2138 = vadd.f32 %v2074, 1.4214138
        %v2139 = vadd.f32 %v2075, 1.4214138
        %v2140 = vadd.f32 %v2076, 1.4214138
        %v2141 = vadd.f32 %v2077, 1.4214138
        %v2142 = vadd.f32 %v2078, 1.4214138
        %v2143 = vadd.f32 %v2079, 1.4214138
        %v2144 = vadd.f32 %v2080, 1.4214138
        %v2145 = vadd.f32 %v2081, 1.4214138
        %v2146 = vadd.f32 %v2082, 1.4214138
        %v2147 = vadd.f32 %v2083, 1.4214138
        %v2148 = vadd.f32 %v2084, 1.4214138
        %v2149 = vadd.f32 %v2085, 1.4214138
        %v2150 = vadd.f32 %v2086, 1.4214138
        %v2151 = vadd.f32 %v2087, 1.4214138
        %v2152 = vadd.f32 %v2088, 1.4214138
        %v2153 = vadd.f32 %v2089, 1.4214138
        %v2154 = vadd.f32 %v2090, 1.4214138
        %v2155 = vadd.f32 %v2091, 1.4214138
        %v2156 = vadd.f32 %v2092, 1.4214138
        %v2157 = vadd.f32 %v2093, 1.4214138
        %v2158 = vadd.f32 %v2094, 1.4214138
        %v2159 = vadd.f32 %v2095, 1.4214138
        %v2160 = vadd.f32 %v2096, 1.4214138
        %v2161 = vadd.f32 %v2097, 1.4214138
        %v2162 = vadd.f32 %v2098, 1.4214138
        %v2163 = vadd.f32 %v2099, 1.4214138
        %v2164 = vadd.f32 %v2100, 1.4214138
        %v2165 = vadd.f32 %v2101, 1.4214138
        %v2166 = vadd.f32 %v2102, 1.4214138
        %v2167 = vadd.f32 %v2103, 1.4214138
        %v2168 = vadd.f32 %v2104, 1.4214138
        %v2169 = vadd.f32 %v2105, 1.4214138
        %v2170 = vadd.f32 %v2106, 1.4214138
        %v2171 = vadd.f32 %v2107, 1.4214138
        %v2172 = vadd.f32 %v2108, 1.4214138
        %v2173 = vadd.f32 %v2109, 1.4214138
        %v2174 = vadd.f32 %v2110, 1.4214138
        %v2175 = vadd.f32 %v2111, 1.4214138
        %v2176 = vadd.f32 %v2112, 1.4214138
        %v2177 = vadd.f32 %v2113, 1.4214138
        %v2178 = vadd.f32 %v2114, 1.4214138
        %v2179 = vadd.f32 %v2115, 1.4214138
        %v2180 = vadd.f32 %v2116, 1.4214138
        %v2181 = vadd.f32 %v2117, 1.4214138
        %v2182 = vadd.f32 %v2118, 1.4214138
        %v2183 = vadd.f32 %v2119, 1.4214138
        %v2184 = vadd.f32 %v2120, 1.4214138
        %v2185 = vadd.f32 %v2121, 1.4214138
        %v2186 = vmul.f32 %v984, %v2122
        %v2187 = vmul.f32 %v999, %v2123
        %v2188 = vmul.f32 %v1014, %v2124
        %v2189 = vmul.f32 %v1029, %v2125
        %v2190 = vmul.f32 %v1044, %v2126
        %v2191 = vmul.f32 %v1059, %v2127
        %v2192 = vmul.f32 %v1074, %v2128
        %v2193 = vmul.f32 %v1089, %v2129
        %v2194 = vmul.f32 %v1104, %v2130
        %v2195 = vmul.f32 %v1119, %v2131
        %v2196 = vmul.f32 %v1134, %v2132
        %v2197 = vmul.f32 %v1149, %v2133
        %v2198 = vmul.f32 %v1164, %v2134
        %v2199 = vmul.f32 %v1179, %v2135
        %v2200 = vmul.f32 %v1194, %v2136
        %v2201 = vmul.f32 %v1209, %v2137
        %v2202 = vmul.f32 %v1224, %v2138
        %v2203 = vmul.f32 %v1239, %v2139
        %v2204 = vmul.f32 %v1254, %v2140
        %v2205 = vmul.f32 %v1269, %v2141
        %v2206 = vmul.f32 %v1284, %v2142
        %v2207 = vmul.f32 %v1299, %v2143
        %v2208 = vmul.f32 %v1314, %v2144
        %v2209 = vmul.f32 %v1329, %v2145
        %v2210 = vmul.f32 %v1344, %v2146
        %v2211 = vmul.f32 %v1359, %v2147
        %v2212 = vmul.f32 %v1374, %v2148
        %v2213 = vmul.f32 %v1389, %v2149
        %v2214 = vmul.f32 %v1404, %v2150
        %v2215 = vmul.f32 %v1419, %v2151
        %v2216 = vmul.f32 %v1434, %v2152
        %v2217 = vmul.f32 %v1449, %v2153
        %v2218 = vmul.f32 %v1464, %v2154
        %v2219 = vmul.f32 %v1479, %v2155
        %v2220 = vmul.f32 %v1494, %v2156
        %v2221 = vmul.f32 %v1509, %v2157
        %v2222 = vmul.f32 %v1524, %v2158
        %v2223 = vmul.f32 %v1539, %v2159
        %v2224 = vmul.f32 %v1554, %v2160
        %v2225 = vmul.f32 %v1569, %v2161
        %v2226 = vmul.f32 %v1584, %v2162
        %v2227 = vmul.f32 %v1599, %v2163
        %v2228 = vmul.f32 %v1614, %v2164
        %v2229 = vmul.f32 %v1629, %v2165
        %v2230 = vmul.f32 %v1644, %v2166
        %v2231 = vmul.f32 %v1659, %v2167
        %v2232 = vmul.f32 %v1674, %v2168
        %v2233 = vmul.f32 %v1689, %v2169
        %v2234 = vmul.f32 %v1704, %v2170
        %v2235 = vmul.f32 %v1719, %v2171
        %v2236 = vmul.f32 %v1734, %v2172
        %v2237 = vmul.f32 %v1749, %v2173
        %v2238 = vmul.f32 %v1764, %v2174
        %v2239 = vmul.f32 %v1779, %v2175
        %v2240 = vmul.f32 %v1794, %v2176
        %v2241 = vmul.f32 %v1809, %v2177
        %v2242 = vmul.f32 %v1824, %v2178
        %v2243 = vmul.f32 %v1839, %v2179
        %v2244 = vmul.f32 %v1854, %v2180
        %v2245 = vmul.f32 %v1869, %v2181
        %v2246 = vmul.f32 %v1884, %v2182
        %v2247 = vmul.f32 %v1899, %v2183
        %v2248 = vmul.f32 %v1914, %v2184
        %v2249 = vmul.f32 %v1929, %v2185
        %v2250 = vadd.f32 %v2186, -0.28449672
        %v2251 = vadd.f32 %v2187, -0.28449672
        %v2252 = vadd.f32 %v2188, -0.28449672
        %v2253 = vadd.f32 %v2189, -0.28449672
        %v2254 = vadd.f32 %v2190, -0.28449672
        %v2255 = vadd.f32 %v2191, -0.28449672
        %v2256 = vadd.f32 %v2192, -0.28449672
        %v2257 = vadd.f32 %v2193, -0.28449672
        %v2258 = vadd.f32 %v2194, -0.28449672
        %v2259 = vadd.f32 %v2195, -0.28449672
        %v2260 = vadd.f32 %v2196, -0.28449672
        %v2261 = vadd.f32 %v2197, -0.28449672
        %v2262 = vadd.f32 %v2198, -0.28449672
        %v2263 = vadd.f32 %v2199, -0.28449672
        %v2264 = vadd.f32 %v2200, -0.28449672
        %v2265 = vadd.f32 %v2201, -0.28449672
        %v2266 = vadd.f32 %v2202, -0.28449672
        %v2267 = vadd.f32 %v2203, -0.28449672
        %v2268 = vadd.f32 %v2204, -0.28449672
        %v2269 = vadd.f32 %v2205, -0.28449672
        %v2270 = vadd.f32 %v2206, -0.28449672
        %v2271 = vadd.f32 %v2207, -0.28449672
        %v2272 = vadd.f32 %v2208, -0.28449672
        %v2273 = vadd.f32 %v2209, -0.28449672
        %v2274 = vadd.f32 %v2210, -0.28449672
        %v2275 = vadd.f32 %v2211, -0.28449672
        %v2276 = vadd.f32 %v2212, -0.28449672
        %v2277 = vadd.f32 %v2213, -0.28449672
        %v2278 = vadd.f32 %v2214, -0.28449672
        %v2279 = vadd.f32 %v2215, -0.28449672
        %v2280 = vadd.f32 %v2216, -0.28449672
        %v2281 = vadd.f32 %v2217, -0.28449672
        %v2282 = vadd.f32 %v2218, -0.28449672
        %v2283 = vadd.f32 %v2219, -0.28449672
        %v2284 = vadd.f32 %v2220, -0.28449672
        %v2285 = vadd.f32 %v2221, -0.28449672
        %v2286 = vadd.f32 %v2222, -0.28449672
        %v2287 = vadd.f32 %v2223, -0.28449672
        %v2288 = vadd.f32 %v2224, -0.28449672
        %v2289 = vadd.f32 %v2225, -0.28449672
        %v2290 = vadd.f32 %v2226, -0.28449672
        %v2291 = vadd.f32 %v2227, -0.28449672
        %v2292 = vadd.f32 %v2228, -0.28449672
        %v2293 = vadd.f32 %v2229, -0.28449672
        %v2294 = vadd.f32 %v2230, -0.28449672
        %v2295 = vadd.f32 %v2231, -0.28449672
        %v2296 = vadd.f32 %v2232, -0.28449672
        %v2297 = vadd.f32 %v2233, -0.28449672
        %v2298 = vadd.f32 %v2234, -0.28449672
        %v2299 = vadd.f32 %v2235, -0.28449672
        %v2300 = vadd.f32 %v2236, -0.28449672
        %v2301 = vadd.f32 %v2237, -0.28449672
        %v2302 = vadd.f32 %v2238, -0.28449672
        %v2303 = vadd.f32 %v2239, -0.28449672
        %v2304 = vadd.f32 %v2240, -0.28449672
        %v2305 = vadd.f32 %v2241, -0.28449672
        %v2306 = vadd.f32 %v2242, -0.28449672
        %v2307 = vadd.f32 %v2243, -0.28449672
        %v2308 = vadd.f32 %v2244, -0.28449672
        %v2309 = vadd.f32 %v2245, -0.28449672
        %v2310 = vadd.f32 %v2246, -0.28449672
        %v2311 = vadd.f32 %v2247, -0.28449672
        %v2312 = vadd.f32 %v2248, -0.28449672
        %v2313 = vadd.f32 %v2249, -0.28449672
        %v2314 = vmul.f32 %v984, %v2250
        %v2315 = vmul.f32 %v999, %v2251
        %v2316 = vmul.f32 %v1014, %v2252
        %v2317 = vmul.f32 %v1029, %v2253
        %v2318 = vmul.f32 %v1044, %v2254
        %v2319 = vmul.f32 %v1059, %v2255
        %v2320 = vmul.f32 %v1074, %v2256
        %v2321 = vmul.f32 %v1089, %v2257
        %v2322 = vmul.f32 %v1104, %v2258
        %v2323 = vmul.f32 %v1119, %v2259
        %v2324 = vmul.f32 %v1134, %v2260
        %v2325 = vmul.f32 %v1149, %v2261
        %v2326 = vmul.f32 %v1164, %v2262
        %v2327 = vmul.f32 %v1179, %v2263
        %v2328 = vmul.f32 %v1194, %v2264
        %v2329 = vmul.f32 %v1209, %v2265
        %v2330 = vmul.f32 %v1224, %v2266
        %v2331 = vmul.f32 %v1239, %v2267
        %v2332 = vmul.f32 %v1254, %v2268
        %v2333 = vmul.f32 %v1269, %v2269
        %v2334 = vmul.f32 %v1284, %v2270
        %v2335 = vmul.f32 %v1299, %v2271
        %v2336 = vmul.f32 %v1314, %v2272
        %v2337 = vmul.f32 %v1329, %v2273
        %v2338 = vmul.f32 %v1344, %v2274
        %v2339 = vmul.f32 %v1359, %v2275
        %v2340 = vmul.f32 %v1374, %v2276
        %v2341 = vmul.f32 %v1389, %v2277
        %v2342 = vmul.f32 %v1404, %v2278
        %v2343 = vmul.f32 %v1419, %v2279
        %v2344 = vmul.f32 %v1434, %v2280
        %v2345 = vmul.f32 %v1449, %v2281
        %v2346 = vmul.f32 %v1464, %v2282
        %v2347 = vmul.f32 %v1479, %v2283
        %v2348 = vmul.f32 %v1494, %v2284
        %v2349 = vmul.f32 %v1509, %v2285
        %v2350 = vmul.f32 %v1524, %v2286
        %v2351 = vmul.f32 %v1539, %v2287
        %v2352 = vmul.f32 %v1554, %v2288
        %v2353 = vmul.f32 %v1569, %v2289
        %v2354 = vmul.f32 %v1584, %v2290
        %v2355 = vmul.f32 %v1599, %v2291
        %v2356 = vmul.f32 %v1614, %v2292
        %v2357 = vmul.f32 %v1629, %v2293
        %v2358 = vmul.f32 %v1644, %v2294
        %v2359 = vmul.f32 %v1659, %v2295
        %v2360 = vmul.f32 %v1674, %v2296
        %v2361 = vmul.f32 %v1689, %v2297
        %v2362 = vmul.f32 %v1704, %v2298
        %v2363 = vmul.f32 %v1719, %v2299
        %v2364 = vmul.f32 %v1734, %v2300
        %v2365 = vmul.f32 %v1749, %v2301
        %v2366 = vmul.f32 %v1764, %v2302
        %v2367 = vmul.f32 %v1779, %v2303
        %v2368 = vmul.f32 %v1794, %v2304
        %v2369 = vmul.f32 %v1809, %v2305
        %v2370 = vmul.f32 %v1824, %v2306
        %v2371 = vmul.f32 %v1839, %v2307
        %v2372 = vmul.f32 %v1854, %v2308
        %v2373 = vmul.f32 %v1869, %v2309
        %v2374 = vmul.f32 %v1884, %v2310
        %v2375 = vmul.f32 %v1899, %v2311
        %v2376 = vmul.f32 %v1914, %v2312
        %v2377 = vmul.f32 %v1929, %v2313
        %v2378 = vadd.f32 %v2314, 0.2548296
        %v2379 = vadd.f32 %v2315, 0.2548296
        %v2380 = vadd.f32 %v2316, 0.2548296
        %v2381 = vadd.f32 %v2317, 0.2548296
        %v2382 = vadd.f32 %v2318, 0.2548296
        %v2383 = vadd.f32 %v2319, 0.2548296
        %v2384 = vadd.f32 %v2320, 0.2548296
        %v2385 = vadd.f32 %v2321, 0.2548296
        %v2386 = vadd.f32 %v2322, 0.2548296
        %v2387 = vadd.f32 %v2323, 0.2548296
        %v2388 = vadd.f32 %v2324, 0.2548296
        %v2389 = vadd.f32 %v2325, 0.2548296
        %v2390 = vadd.f32 %v2326, 0.2548296
        %v2391 = vadd.f32 %v2327, 0.2548296
        %v2392 = vadd.f32 %v2328, 0.2548296
        %v2393 = vadd.f32 %v2329, 0.2548296
        %v2394 = vadd.f32 %v2330, 0.2548296
        %v2395 = vadd.f32 %v2331, 0.2548296
        %v2396 = vadd.f32 %v2332, 0.2548296
        %v2397 = vadd.f32 %v2333, 0.2548296
        %v2398 = vadd.f32 %v2334, 0.2548296
        %v2399 = vadd.f32 %v2335, 0.2548296
        %v2400 = vadd.f32 %v2336, 0.2548296
        %v2401 = vadd.f32 %v2337, 0.2548296
        %v2402 = vadd.f32 %v2338, 0.2548296
        %v2403 = vadd.f32 %v2339, 0.2548296
        %v2404 = vadd.f32 %v2340, 0.2548296
        %v2405 = vadd.f32 %v2341, 0.2548296
        %v2406 = vadd.f32 %v2342, 0.2548296
        %v2407 = vadd.f32 %v2343, 0.2548296
        %v2408 = vadd.f32 %v2344, 0.2548296
        %v2409 = vadd.f32 %v2345, 0.2548296
        %v2410 = vadd.f32 %v2346, 0.2548296
        %v2411 = vadd.f32 %v2347, 0.2548296
        %v2412 = vadd.f32 %v2348, 0.2548296
        %v2413 = vadd.f32 %v2349, 0.2548296
        %v2414 = vadd.f32 %v2350, 0.2548296
        %v2415 = vadd.f32 %v2351, 0.2548296
        %v2416 = vadd.f32 %v2352, 0.2548296
        %v2417 = vadd.f32 %v2353, 0.2548296
        %v2418 = vadd.f32 %v2354, 0.2548296
        %v2419 = vadd.f32 %v2355, 0.2548296
        %v2420 = vadd.f32 %v2356, 0.2548296
        %v2421 = vadd.f32 %v2357, 0.2548296
        %v2422 = vadd.f32 %v2358, 0.2548296
        %v2423 = vadd.f32 %v2359, 0.2548296
        %v2424 = vadd.f32 %v2360, 0.2548296
        %v2425 = vadd.f32 %v2361, 0.2548296
        %v2426 = vadd.f32 %v2362, 0.2548296
        %v2427 = vadd.f32 %v2363, 0.2548296
        %v2428 = vadd.f32 %v2364, 0.2548296
        %v2429 = vadd.f32 %v2365, 0.2548296
        %v2430 = vadd.f32 %v2366, 0.2548296
        %v2431 = vadd.f32 %v2367, 0.2548296
        %v2432 = vadd.f32 %v2368, 0.2548296
        %v2433 = vadd.f32 %v2369, 0.2548296
        %v2434 = vadd.f32 %v2370, 0.2548296
        %v2435 = vadd.f32 %v2371, 0.2548296
        %v2436 = vadd.f32 %v2372, 0.2548296
        %v2437 = vadd.f32 %v2373, 0.2548296
        %v2438 = vadd.f32 %v2374, 0.2548296
        %v2439 = vadd.f32 %v2375, 0.2548296
        %v2440 = vadd.f32 %v2376, 0.2548296
        %v2441 = vadd.f32 %v2377, 0.2548296
        %v2442 = vmul.f32 %v984, %v2378
        %v2443 = vmul.f32 %v999, %v2379
        %v2444 = vmul.f32 %v1014, %v2380
        %v2445 = vmul.f32 %v1029, %v2381
        %v2446 = vmul.f32 %v1044, %v2382
        %v2447 = vmul.f32 %v1059, %v2383
        %v2448 = vmul.f32 %v1074, %v2384
        %v2449 = vmul.f32 %v1089, %v2385
        %v2450 = vmul.f32 %v1104, %v2386
        %v2451 = vmul.f32 %v1119, %v2387
        %v2452 = vmul.f32 %v1134, %v2388
        %v2453 = vmul.f32 %v1149, %v2389
        %v2454 = vmul.f32 %v1164, %v2390
        %v2455 = vmul.f32 %v1179, %v2391
        %v2456 = vmul.f32 %v1194, %v2392
        %v2457 = vmul.f32 %v1209, %v2393
        %v2458 = vmul.f32 %v1224, %v2394
        %v2459 = vmul.f32 %v1239, %v2395
        %v2460 = vmul.f32 %v1254, %v2396
        %v2461 = vmul.f32 %v1269, %v2397
        %v2462 = vmul.f32 %v1284, %v2398
        %v2463 = vmul.f32 %v1299, %v2399
        %v2464 = vmul.f32 %v1314, %v2400
        %v2465 = vmul.f32 %v1329, %v2401
        %v2466 = vmul.f32 %v1344, %v2402
        %v2467 = vmul.f32 %v1359, %v2403
        %v2468 = vmul.f32 %v1374, %v2404
        %v2469 = vmul.f32 %v1389, %v2405
        %v2470 = vmul.f32 %v1404, %v2406
        %v2471 = vmul.f32 %v1419, %v2407
        %v2472 = vmul.f32 %v1434, %v2408
        %v2473 = vmul.f32 %v1449, %v2409
        %v2474 = vmul.f32 %v1464, %v2410
        %v2475 = vmul.f32 %v1479, %v2411
        %v2476 = vmul.f32 %v1494, %v2412
        %v2477 = vmul.f32 %v1509, %v2413
        %v2478 = vmul.f32 %v1524, %v2414
        %v2479 = vmul.f32 %v1539, %v2415
        %v2480 = vmul.f32 %v1554, %v2416
        %v2481 = vmul.f32 %v1569, %v2417
        %v2482 = vmul.f32 %v1584, %v2418
        %v2483 = vmul.f32 %v1599, %v2419
        %v2484 = vmul.f32 %v1614, %v2420
        %v2485 = vmul.f32 %v1629, %v2421
        %v2486 = vmul.f32 %v1644, %v2422
        %v2487 = vmul.f32 %v1659, %v2423
        %v2488 = vmul.f32 %v1674, %v2424
        %v2489 = vmul.f32 %v1689, %v2425
        %v2490 = vmul.f32 %v1704, %v2426
        %v2491 = vmul.f32 %v1719, %v2427
        %v2492 = vmul.f32 %v1734, %v2428
        %v2493 = vmul.f32 %v1749, %v2429
        %v2494 = vmul.f32 %v1764, %v2430
        %v2495 = vmul.f32 %v1779, %v2431
        %v2496 = vmul.f32 %v1794, %v2432
        %v2497 = vmul.f32 %v1809, %v2433
        %v2498 = vmul.f32 %v1824, %v2434
        %v2499 = vmul.f32 %v1839, %v2435
        %v2500 = vmul.f32 %v1854, %v2436
        %v2501 = vmul.f32 %v1869, %v2437
        %v2502 = vmul.f32 %v1884, %v2438
        %v2503 = vmul.f32 %v1899, %v2439
        %v2504 = vmul.f32 %v1914, %v2440
        %v2505 = vmul.f32 %v1929, %v2441
        %v2506 = vsub.f32 0.0, %v778
        %v2507 = vsub.f32 0.0, %v779
        %v2508 = vsub.f32 0.0, %v780
        %v2509 = vsub.f32 0.0, %v781
        %v2510 = vsub.f32 0.0, %v782
        %v2511 = vsub.f32 0.0, %v783
        %v2512 = vsub.f32 0.0, %v784
        %v2513 = vsub.f32 0.0, %v785
        %v2514 = vsub.f32 0.0, %v786
        %v2515 = vsub.f32 0.0, %v787
        %v2516 = vsub.f32 0.0, %v788
        %v2517 = vsub.f32 0.0, %v789
        %v2518 = vsub.f32 0.0, %v790
        %v2519 = vsub.f32 0.0, %v791
        %v2520 = vsub.f32 0.0, %v792
        %v2521 = vsub.f32 0.0, %v793
        %v2522 = vsub.f32 0.0, %v794
        %v2523 = vsub.f32 0.0, %v795
        %v2524 = vsub.f32 0.0, %v796
        %v2525 = vsub.f32 0.0, %v797
        %v2526 = vsub.f32 0.0, %v798
        %v2527 = vsub.f32 0.0, %v799
        %v2528 = vsub.f32 0.0, %v800
        %v2529 = vsub.f32 0.0, %v801
        %v2530 = vsub.f32 0.0, %v802
        %v2531 = vsub.f32 0.0, %v803
        %v2532 = vsub.f32 0.0, %v804
        %v2533 = vsub.f32 0.0, %v805
        %v2534 = vsub.f32 0.0, %v806
        %v2535 = vsub.f32 0.0, %v807
        %v2536 = vsub.f32 0.0, %v808
        %v2537 = vsub.f32 0.0, %v809
        %v2538 = vsub.f32 0.0, %v810
        %v2539 = vsub.f32 0.0, %v811
        %v2540 = vsub.f32 0.0, %v812
        %v2541 = vsub.f32 0.0, %v813
        %v2542 = vsub.f32 0.0, %v814
        %v2543 = vsub.f32 0.0, %v815
        %v2544 = vsub.f32 0.0, %v816
        %v2545 = vsub.f32 0.0, %v817
        %v2546 = vsub.f32 0.0, %v818
        %v2547 = vsub.f32 0.0, %v819
        %v2548 = vsub.f32 0.0, %v820
        %v2549 = vsub.f32 0.0, %v821
        %v2550 = vsub.f32 0.0, %v822
        %v2551 = vsub.f32 0.0, %v823
        %v2552 = vsub.f32 0.0, %v824
        %v2553 = vsub.f32 0.0, %v825
        %v2554 = vsub.f32 0.0, %v826
        %v2555 = vsub.f32 0.0, %v827
        %v2556 = vsub.f32 0.0, %v828
        %v2557 = vsub.f32 0.0, %v829
        %v2558 = vsub.f32 0.0, %v830
        %v2559 = vsub.f32 0.0, %v831
        %v2560 = vsub.f32 0.0, %v832
        %v2561 = vsub.f32 0.0, %v833
        %v2562 = vsub.f32 0.0, %v834
        %v2563 = vsub.f32 0.0, %v835
        %v2564 = vsub.f32 0.0, %v836
        %v2565 = vsub.f32 0.0, %v837
        %v2566 = vsub.f32 0.0, %v838
        %v2567 = vsub.f32 0.0, %v839
        %v2568 = vsub.f32 0.0, %v840
        %v2569 = vsub.f32 0.0, %v841
        %v2570 = vmul.f32 %v2506, %v778
        %v2571 = vmul.f32 %v2507, %v779
        %v2572 = vmul.f32 %v2508, %v780
        %v2573 = vmul.f32 %v2509, %v781
        %v2574 = vmul.f32 %v2510, %v782
        %v2575 = vmul.f32 %v2511, %v783
        %v2576 = vmul.f32 %v2512, %v784
        %v2577 = vmul.f32 %v2513, %v785
        %v2578 = vmul.f32 %v2514, %v786
        %v2579 = vmul.f32 %v2515, %v787
        %v2580 = vmul.f32 %v2516, %v788
        %v2581 = vmul.f32 %v2517, %v789
        %v2582 = vmul.f32 %v2518, %v790
        %v2583 = vmul.f32 %v2519, %v791
        %v2584 = vmul.f32 %v2520, %v792
        %v2585 = vmul.f32 %v2521, %v793
        %v2586 = vmul.f32 %v2522, %v794
        %v2587 = vmul.f32 %v2523, %v795
        %v2588 = vmul.f32 %v2524, %v796
        %v2589 = vmul.f32 %v2525, %v797
        %v2590 = vmul.f32 %v2526, %v798
        %v2591 = vmul.f32 %v2527, %v799
        %v2592 = vmul.f32 %v2528, %v800
        %v2593 = vmul.f32 %v2529, %v801
        %v2594 = vmul.f32 %v2530, %v802
        %v2595 = vmul.f32 %v2531, %v803
        %v2596 = vmul.f32 %v2532, %v804
        %v2597 = vmul.f32 %v2533, %v805
        %v2598 = vmul.f32 %v2534, %v806
        %v2599 = vmul.f32 %v2535, %v807
        %v2600 = vmul.f32 %v2536, %v808
        %v2601 = vmul.f32 %v2537, %v809
        %v2602 = vmul.f32 %v2538, %v810
        %v2603 = vmul.f32 %v2539, %v811
        %v2604 = vmul.f32 %v2540, %v812
        %v2605 = vmul.f32 %v2541, %v813
        %v2606 = vmul.f32 %v2542, %v814
        %v2607 = vmul.f32 %v2543, %v815
        %v2608 = vmul.f32 %v2544, %v816
        %v2609 = vmul.f32 %v2545, %v817
        %v2610 = vmul.f32 %v2546, %v818
        %v2611 = vmul.f32 %v2547, %v819
        %v2612 = vmul.f32 %v2548, %v820
        %v2613 = vmul.f32 %v2549, %v821
        %v2614 = vmul.f32 %v2550, %v822
        %v2615 = vmul.f32 %v2551, %v823
        %v2616 = vmul.f32 %v2552, %v824
        %v2617 = vmul.f32 %v2553, %v825
        %v2618 = vmul.f32 %v2554, %v826
        %v2619 = vmul.f32 %v2555, %v827
        %v2620 = vmul.f32 %v2556, %v828
        %v2621 = vmul.f32 %v2557, %v829
        %v2622 = vmul.f32 %v2558, %v830
        %v2623 = vmul.f32 %v2559, %v831
        %v2624 = vmul.f32 %v2560, %v832
        %v2625 = vmul.f32 %v2561, %v833
        %v2626 = vmul.f32 %v2562, %v834
        %v2627 = vmul.f32 %v2563, %v835
        %v2628 = vmul.f32 %v2564, %v836
        %v2629 = vmul.f32 %v2565, %v837
        %v2630 = vmul.f32 %v2566, %v838
        %v2631 = vmul.f32 %v2567, %v839
        %v2632 = vmul.f32 %v2568, %v840
        %v2633 = vmul.f32 %v2569, %v841
        %v2634 = vmul.f32 %v2570, 1.442695
        %v2635 = vpow.pop %v2634
        %v2636 = vmul.f32 %v2571, 1.442695
        %v2637 = vpow.pop %v2636
        %v2638 = vmul.f32 %v2572, 1.442695
        %v2639 = vpow.pop %v2638
        %v2640 = vmul.f32 %v2573, 1.442695
        %v2641 = vpow.pop %v2640
        %v2642 = vmul.f32 %v2574, 1.442695
        %v2643 = vpow.pop %v2642
        %v2644 = vmul.f32 %v2575, 1.442695
        %v2645 = vpow.pop %v2644
        %v2646 = vmul.f32 %v2576, 1.442695
        %v2647 = vpow.pop %v2646
        %v2648 = vmul.f32 %v2577, 1.442695
        %v2649 = vpow.pop %v2648
        %v2650 = vmul.f32 %v2578, 1.442695
        %v2651 = vpow.pop %v2650
        %v2652 = vmul.f32 %v2579, 1.442695
        %v2653 = vpow.pop %v2652
        %v2654 = vmul.f32 %v2580, 1.442695
        %v2655 = vpow.pop %v2654
        %v2656 = vmul.f32 %v2581, 1.442695
        %v2657 = vpow.pop %v2656
        %v2658 = vmul.f32 %v2582, 1.442695
        %v2659 = vpow.pop %v2658
        %v2660 = vmul.f32 %v2583, 1.442695
        %v2661 = vpow.pop %v2660
        %v2662 = vmul.f32 %v2584, 1.442695
        %v2663 = vpow.pop %v2662
        %v2664 = vmul.f32 %v2585, 1.442695
        %v2665 = vpow.pop %v2664
        %v2666 = vmul.f32 %v2586, 1.442695
        %v2667 = vpow.pop %v2666
        %v2668 = vmul.f32 %v2587, 1.442695
        %v2669 = vpow.pop %v2668
        %v2670 = vmul.f32 %v2588, 1.442695
        %v2671 = vpow.pop %v2670
        %v2672 = vmul.f32 %v2589, 1.442695
        %v2673 = vpow.pop %v2672
        %v2674 = vmul.f32 %v2590, 1.442695
        %v2675 = vpow.pop %v2674
        %v2676 = vmul.f32 %v2591, 1.442695
        %v2677 = vpow.pop %v2676
        %v2678 = vmul.f32 %v2592, 1.442695
        %v2679 = vpow.pop %v2678
        %v2680 = vmul.f32 %v2593, 1.442695
        %v2681 = vpow.pop %v2680
        %v2682 = vmul.f32 %v2594, 1.442695
        %v2683 = vpow.pop %v2682
        %v2684 = vmul.f32 %v2595, 1.442695
        %v2685 = vpow.pop %v2684
        %v2686 = vmul.f32 %v2596, 1.442695
        %v2687 = vpow.pop %v2686
        %v2688 = vmul.f32 %v2597, 1.442695
        %v2689 = vpow.pop %v2688
        %v2690 = vmul.f32 %v2598, 1.442695
        %v2691 = vpow.pop %v2690
        %v2692 = vmul.f32 %v2599, 1.442695
        %v2693 = vpow.pop %v2692
        %v2694 = vmul.f32 %v2600, 1.442695
        %v2695 = vpow.pop %v2694
        %v2696 = vmul.f32 %v2601, 1.442695
        %v2697 = vpow.pop %v2696
        %v2698 = vmul.f32 %v2602, 1.442695
        %v2699 = vpow.pop %v2698
        %v2700 = vmul.f32 %v2603, 1.442695
        %v2701 = vpow.pop %v2700
        %v2702 = vmul.f32 %v2604, 1.442695
        %v2703 = vpow.pop %v2702
        %v2704 = vmul.f32 %v2605, 1.442695
        %v2705 = vpow.pop %v2704
        %v2706 = vmul.f32 %v2606, 1.442695
        %v2707 = vpow.pop %v2706
        %v2708 = vmul.f32 %v2607, 1.442695
        %v2709 = vpow.pop %v2708
        %v2710 = vmul.f32 %v2608, 1.442695
        %v2711 = vpow.pop %v2710
        %v2712 = vmul.f32 %v2609, 1.442695
        %v2713 = vpow.pop %v2712
        %v2714 = vmul.f32 %v2610, 1.442695
        %v2715 = vpow.pop %v2714
        %v2716 = vmul.f32 %v2611, 1.442695
        %v2717 = vpow.pop %v2716
        %v2718 = vmul.f32 %v2612, 1.442695
        %v2719 = vpow.pop %v2718
        %v2720 = vmul.f32 %v2613, 1.442695
        %v2721 = vpow.pop %v2720
        %v2722 = vmul.f32 %v2614, 1.442695
        %v2723 = vpow.pop %v2722
        %v2724 = vmul.f32 %v2615, 1.442695
        %v2725 = vpow.pop %v2724
        %v2726 = vmul.f32 %v2616, 1.442695
        %v2727 = vpow.pop %v2726
        %v2728 = vmul.f32 %v2617, 1.442695
        %v2729 = vpow.pop %v2728
        %v2730 = vmul.f32 %v2618, 1.442695
        %v2731 = vpow.pop %v2730
        %v2732 = vmul.f32 %v2619, 1.442695
        %v2733 = vpow.pop %v2732
        %v2734 = vmul.f32 %v2620, 1.442695
        %v2735 = vpow.pop %v2734
        %v2736 = vmul.f32 %v2621, 1.442695
        %v2737 = vpow.pop %v2736
        %v2738 = vmul.f32 %v2622, 1.442695
        %v2739 = vpow.pop %v2738
        %v2740 = vmul.f32 %v2623, 1.442695
        %v2741 = vpow.pop %v2740
        %v2742 = vmul.f32 %v2624, 1.442695
        %v2743 = vpow.pop %v2742
        %v2744 = vmul.f32 %v2625, 1.442695
        %v2745 = vpow.pop %v2744
        %v2746 = vmul.f32 %v2626, 1.442695
        %v2747 = vpow.pop %v2746
        %v2748 = vmul.f32 %v2627, 1.442695
        %v2749 = vpow.pop %v2748
        %v2750 = vmul.f32 %v2628, 1.442695
        %v2751 = vpow.pop %v2750
        %v2752 = vmul.f32 %v2629, 1.442695
        %v2753 = vpow.pop %v2752
        %v2754 = vmul.f32 %v2630, 1.442695
        %v2755 = vpow.pop %v2754
        %v2756 = vmul.f32 %v2631, 1.442695
        %v2757 = vpow.pop %v2756
        %v2758 = vmul.f32 %v2632, 1.442695
        %v2759 = vpow.pop %v2758
        %v2760 = vmul.f32 %v2633, 1.442695
        %v2761 = vpow.pop %v2760
        %v2762 = vmul.f32 %v2442, %v2635
        %v2763 = vmul.f32 %v2443, %v2637
        %v2764 = vmul.f32 %v2444, %v2639
        %v2765 = vmul.f32 %v2445, %v2641
        %v2766 = vmul.f32 %v2446, %v2643
        %v2767 = vmul.f32 %v2447, %v2645
        %v2768 = vmul.f32 %v2448, %v2647
        %v2769 = vmul.f32 %v2449, %v2649
        %v2770 = vmul.f32 %v2450, %v2651
        %v2771 = vmul.f32 %v2451, %v2653
        %v2772 = vmul.f32 %v2452, %v2655
        %v2773 = vmul.f32 %v2453, %v2657
        %v2774 = vmul.f32 %v2454, %v2659
        %v2775 = vmul.f32 %v2455, %v2661
        %v2776 = vmul.f32 %v2456, %v2663
        %v2777 = vmul.f32 %v2457, %v2665
        %v2778 = vmul.f32 %v2458, %v2667
        %v2779 = vmul.f32 %v2459, %v2669
        %v2780 = vmul.f32 %v2460, %v2671
        %v2781 = vmul.f32 %v2461, %v2673
        %v2782 = vmul.f32 %v2462, %v2675
        %v2783 = vmul.f32 %v2463, %v2677
        %v2784 = vmul.f32 %v2464, %v2679
        %v2785 = vmul.f32 %v2465, %v2681
        %v2786 = vmul.f32 %v2466, %v2683
        %v2787 = vmul.f32 %v2467, %v2685
        %v2788 = vmul.f32 %v2468, %v2687
        %v2789 = vmul.f32 %v2469, %v2689
        %v2790 = vmul.f32 %v2470, %v2691
        %v2791 = vmul.f32 %v2471, %v2693
        %v2792 = vmul.f32 %v2472, %v2695
        %v2793 = vmul.f32 %v2473, %v2697
        %v2794 = vmul.f32 %v2474, %v2699
        %v2795 = vmul.f32 %v2475, %v2701
        %v2796 = vmul.f32 %v2476, %v2703
        %v2797 = vmul.f32 %v2477, %v2705
        %v2798 = vmul.f32 %v2478, %v2707
        %v2799 = vmul.f32 %v2479, %v2709
        %v2800 = vmul.f32 %v2480, %v2711
        %v2801 = vmul.f32 %v2481, %v2713
        %v2802 = vmul.f32 %v2482, %v2715
        %v2803 = vmul.f32 %v2483, %v2717
        %v2804 = vmul.f32 %v2484, %v2719
        %v2805 = vmul.f32 %v2485, %v2721
        %v2806 = vmul.f32 %v2486, %v2723
        %v2807 = vmul.f32 %v2487, %v2725
        %v2808 = vmul.f32 %v2488, %v2727
        %v2809 = vmul.f32 %v2489, %v2729
        %v2810 = vmul.f32 %v2490, %v2731
        %v2811 = vmul.f32 %v2491, %v2733
        %v2812 = vmul.f32 %v2492, %v2735
        %v2813 = vmul.f32 %v2493, %v2737
        %v2814 = vmul.f32 %v2494, %v2739
        %v2815 = vmul.f32 %v2495, %v2741
        %v2816 = vmul.f32 %v2496, %v2743
        %v2817 = vmul.f32 %v2497, %v2745
        %v2818 = vmul.f32 %v2498, %v2747
        %v2819 = vmul.f32 %v2499, %v2749
        %v2820 = vmul.f32 %v2500, %v2751
        %v2821 = vmul.f32 %v2501, %v2753
        %v2822 = vmul.f32 %v2502, %v2755
        %v2823 = vmul.f32 %v2503, %v2757
        %v2824 = vmul.f32 %v2504, %v2759
        %v2825 = vmul.f32 %v2505, %v2761
        %v2826 = vsub.f32 1.0, %v2762
        %v2827 = vsub.f32 1.0, %v2763
        %v2828 = vsub.f32 1.0, %v2764
        %v2829 = vsub.f32 1.0, %v2765
        %v2830 = vsub.f32 1.0, %v2766
        %v2831 = vsub.f32 1.0, %v2767
        %v2832 = vsub.f32 1.0, %v2768
        %v2833 = vsub.f32 1.0, %v2769
        %v2834 = vsub.f32 1.0, %v2770
        %v2835 = vsub.f32 1.0, %v2771
        %v2836 = vsub.f32 1.0, %v2772
        %v2837 = vsub.f32 1.0, %v2773
        %v2838 = vsub.f32 1.0, %v2774
        %v2839 = vsub.f32 1.0, %v2775
        %v2840 = vsub.f32 1.0, %v2776
        %v2841 = vsub.f32 1.0, %v2777
        %v2842 = vsub.f32 1.0, %v2778
        %v2843 = vsub.f32 1.0, %v2779
        %v2844 = vsub.f32 1.0, %v2780
        %v2845 = vsub.f32 1.0, %v2781
        %v2846 = vsub.f32 1.0, %v2782
        %v2847 = vsub.f32 1.0, %v2783
        %v2848 = vsub.f32 1.0, %v2784
        %v2849 = vsub.f32 1.0, %v2785
        %v2850 = vsub.f32 1.0, %v2786
        %v2851 = vsub.f32 1.0, %v2787
        %v2852 = vsub.f32 1.0, %v2788
        %v2853 = vsub.f32 1.0, %v2789
        %v2854 = vsub.f32 1.0, %v2790
        %v2855 = vsub.f32 1.0, %v2791
        %v2856 = vsub.f32 1.0, %v2792
        %v2857 = vsub.f32 1.0, %v2793
        %v2858 = vsub.f32 1.0, %v2794
        %v2859 = vsub.f32 1.0, %v2795
        %v2860 = vsub.f32 1.0, %v2796
        %v2861 = vsub.f32 1.0, %v2797
        %v2862 = vsub.f32 1.0, %v2798
        %v2863 = vsub.f32 1.0, %v2799
        %v2864 = vsub.f32 1.0, %v2800
        %v2865 = vsub.f32 1.0, %v2801
        %v2866 = vsub.f32 1.0, %v2802
        %v2867 = vsub.f32 1.0, %v2803
        %v2868 = vsub.f32 1.0, %v2804
        %v2869 = vsub.f32 1.0, %v2805
        %v2870 = vsub.f32 1.0, %v2806
        %v2871 = vsub.f32 1.0, %v2807
        %v2872 = vsub.f32 1.0, %v2808
        %v2873 = vsub.f32 1.0, %v2809
        %v2874 = vsub.f32 1.0, %v2810
        %v2875 = vsub.f32 1.0, %v2811
        %v2876 = vsub.f32 1.0, %v2812
        %v2877 = vsub.f32 1.0, %v2813
        %v2878 = vsub.f32 1.0, %v2814
        %v2879 = vsub.f32 1.0, %v2815
        %v2880 = vsub.f32 1.0, %v2816
        %v2881 = vsub.f32 1.0, %v2817
        %v2882 = vsub.f32 1.0, %v2818
        %v2883 = vsub.f32 1.0, %v2819
        %v2884 = vsub.f32 1.0, %v2820
        %v2885 = vsub.f32 1.0, %v2821
        %v2886 = vsub.f32 1.0, %v2822
        %v2887 = vsub.f32 1.0, %v2823
        %v2888 = vsub.f32 1.0, %v2824
        %v2889 = vsub.f32 1.0, %v2825
        %vm2890 = vcmp.ge.f32.partialorder %v714, 0.0
        %vm2891 = vcmp.ge.f32.partialorder %v715, 0.0
        %vm2892 = vcmp.ge.f32.partialorder %v716, 0.0
        %vm2893 = vcmp.ge.f32.partialorder %v717, 0.0
        %vm2894 = vcmp.ge.f32.partialorder %v718, 0.0
        %vm2895 = vcmp.ge.f32.partialorder %v719, 0.0
        %vm2896 = vcmp.ge.f32.partialorder %v720, 0.0
        %vm2897 = vcmp.ge.f32.partialorder %v721, 0.0
        %vm2898 = vcmp.ge.f32.partialorder %v722, 0.0
        %vm2899 = vcmp.ge.f32.partialorder %v723, 0.0
        %vm2900 = vcmp.ge.f32.partialorder %v724, 0.0
        %vm2901 = vcmp.ge.f32.partialorder %v725, 0.0
        %vm2902 = vcmp.ge.f32.partialorder %v726, 0.0
        %vm2903 = vcmp.ge.f32.partialorder %v727, 0.0
        %vm2904 = vcmp.ge.f32.partialorder %v728, 0.0
        %vm2905 = vcmp.ge.f32.partialorder %v729, 0.0
        %vm2906 = vcmp.ge.f32.partialorder %v730, 0.0
        %vm2907 = vcmp.ge.f32.partialorder %v731, 0.0
        %vm2908 = vcmp.ge.f32.partialorder %v732, 0.0
        %vm2909 = vcmp.ge.f32.partialorder %v733, 0.0
        %vm2910 = vcmp.ge.f32.partialorder %v734, 0.0
        %vm2911 = vcmp.ge.f32.partialorder %v735, 0.0
        %vm2912 = vcmp.ge.f32.partialorder %v736, 0.0
        %vm2913 = vcmp.ge.f32.partialorder %v737, 0.0
        %vm2914 = vcmp.ge.f32.partialorder %v738, 0.0
        %vm2915 = vcmp.ge.f32.partialorder %v739, 0.0
        %vm2916 = vcmp.ge.f32.partialorder %v740, 0.0
        %vm2917 = vcmp.ge.f32.partialorder %v741, 0.0
        %vm2918 = vcmp.ge.f32.partialorder %v742, 0.0
        %vm2919 = vcmp.ge.f32.partialorder %v743, 0.0
        %vm2920 = vcmp.ge.f32.partialorder %v744, 0.0
        %vm2921 = vcmp.ge.f32.partialorder %v745, 0.0
        %vm2922 = vcmp.ge.f32.partialorder %v746, 0.0
        %vm2923 = vcmp.ge.f32.partialorder %v747, 0.0
        %vm2924 = vcmp.ge.f32.partialorder %v748, 0.0
        %vm2925 = vcmp.ge.f32.partialorder %v749, 0.0
        %vm2926 = vcmp.ge.f32.partialorder %v750, 0.0
        %vm2927 = vcmp.ge.f32.partialorder %v751, 0.0
        %vm2928 = vcmp.ge.f32.partialorder %v752, 0.0
        %vm2929 = vcmp.ge.f32.partialorder %v753, 0.0
        %vm2930 = vcmp.ge.f32.partialorder %v754, 0.0
        %vm2931 = vcmp.ge.f32.partialorder %v755, 0.0
        %vm2932 = vcmp.ge.f32.partialorder %v756, 0.0
        %vm2933 = vcmp.ge.f32.partialorder %v757, 0.0
        %vm2934 = vcmp.ge.f32.partialorder %v758, 0.0
        %vm2935 = vcmp.ge.f32.partialorder %v759, 0.0
        %vm2936 = vcmp.ge.f32.partialorder %v760, 0.0
        %vm2937 = vcmp.ge.f32.partialorder %v761, 0.0
        %vm2938 = vcmp.ge.f32.partialorder %v762, 0.0
        %vm2939 = vcmp.ge.f32.partialorder %v763, 0.0
        %vm2940 = vcmp.ge.f32.partialorder %v764, 0.0
        %vm2941 = vcmp.ge.f32.partialorder %v765, 0.0
        %vm2942 = vcmp.ge.f32.partialorder %v766, 0.0
        %vm2943 = vcmp.ge.f32.partialorder %v767, 0.0
        %vm2944 = vcmp.ge.f32.partialorder %v768, 0.0
        %vm2945 = vcmp.ge.f32.partialorder %v769, 0.0
        %vm2946 = vcmp.ge.f32.partialorder %v770, 0.0
        %vm2947 = vcmp.ge.f32.partialorder %v771, 0.0
        %vm2948 = vcmp.ge.f32.partialorder %v772, 0.0
        %vm2949 = vcmp.ge.f32.partialorder %v773, 0.0
        %vm2950 = vcmp.ge.f32.partialorder %v774, 0.0
        %vm2951 = vcmp.ge.f32.partialorder %v775, 0.0
        %vm2952 = vcmp.ge.f32.partialorder %v776, 0.0
        %vm2953 = vcmp.ge.f32.partialorder %v777, 0.0
        %v2954 = vsub.f32 0.0, %v2826
        %v2955 = vsub.f32 0.0, %v2827
        %v2956 = vsub.f32 0.0, %v2828
        %v2957 = vsub.f32 0.0, %v2829
        %v2958 = vsub.f32 0.0, %v2830
        %v2959 = vsub.f32 0.0, %v2831
        %v2960 = vsub.f32 0.0, %v2832
        %v2961 = vsub.f32 0.0, %v2833
        %v2962 = vsub.f32 0.0, %v2834
        %v2963 = vsub.f32 0.0, %v2835
        %v2964 = vsub.f32 0.0, %v2836
        %v2965 = vsub.f32 0.0, %v2837
        %v2966 = vsub.f32 0.0, %v2838
        %v2967 = vsub.f32 0.0, %v2839
        %v2968 = vsub.f32 0.0, %v2840
        %v2969 = vsub.f32 0.0, %v2841
        %v2970 = vsub.f32 0.0, %v2842
        %v2971 = vsub.f32 0.0, %v2843
        %v2972 = vsub.f32 0.0, %v2844
        %v2973 = vsub.f32 0.0, %v2845
        %v2974 = vsub.f32 0.0, %v2846
        %v2975 = vsub.f32 0.0, %v2847
        %v2976 = vsub.f32 0.0, %v2848
        %v2977 = vsub.f32 0.0, %v2849
        %v2978 = vsub.f32 0.0, %v2850
        %v2979 = vsub.f32 0.0, %v2851
        %v2980 = vsub.f32 0.0, %v2852
        %v2981 = vsub.f32 0.0, %v2853
        %v2982 = vsub.f32 0.0, %v2854
        %v2983 = vsub.f32 0.0, %v2855
        %v2984 = vsub.f32 0.0, %v2856
        %v2985 = vsub.f32 0.0, %v2857
        %v2986 = vsub.f32 0.0, %v2858
        %v2987 = vsub.f32 0.0, %v2859
        %v2988 = vsub.f32 0.0, %v2860
        %v2989 = vsub.f32 0.0, %v2861
        %v2990 = vsub.f32 0.0, %v2862
        %v2991 = vsub.f32 0.0, %v2863
        %v2992 = vsub.f32 0.0, %v2864
        %v2993 = vsub.f32 0.0, %v2865
        %v2994 = vsub.f32 0.0, %v2866
        %v2995 = vsub.f32 0.0, %v2867
        %v2996 = vsub.f32 0.0, %v2868
        %v2997 = vsub.f32 0.0, %v2869
        %v2998 = vsub.f32 0.0, %v2870
        %v2999 = vsub.f32 0.0, %v2871
        %v3000 = vsub.f32 0.0, %v2872
        %v3001 = vsub.f32 0.0, %v2873
        %v3002 = vsub.f32 0.0, %v2874
        %v3003 = vsub.f32 0.0, %v2875
        %v3004 = vsub.f32 0.0, %v2876
        %v3005 = vsub.f32 0.0, %v2877
        %v3006 = vsub.f32 0.0, %v2878
        %v3007 = vsub.f32 0.0, %v2879
        %v3008 = vsub.f32 0.0, %v2880
        %v3009 = vsub.f32 0.0, %v2881
        %v3010 = vsub.f32 0.0, %v2882
        %v3011 = vsub.f32 0.0, %v2883
        %v3012 = vsub.f32 0.0, %v2884
        %v3013 = vsub.f32 0.0, %v2885
        %v3014 = vsub.f32 0.0, %v2886
        %v3015 = vsub.f32 0.0, %v2887
        %v3016 = vsub.f32 0.0, %v2888
        %v3017 = vsub.f32 0.0, %v2889
        %v3018 = vsel %vm2890, %v2826, %v2954
        %v3019 = vsel %vm2891, %v2827, %v2955
        %v3020 = vsel %vm2892, %v2828, %v2956
        %v3021 = vsel %vm2893, %v2829, %v2957
        %v3022 = vsel %vm2894, %v2830, %v2958
        %v3023 = vsel %vm2895, %v2831, %v2959
        %v3024 = vsel %vm2896, %v2832, %v2960
        %v3025 = vsel %vm2897, %v2833, %v2961
        %v3026 = vsel %vm2898, %v2834, %v2962
        %v3027 = vsel %vm2899, %v2835, %v2963
        %v3028 = vsel %vm2900, %v2836, %v2964
        %v3029 = vsel %vm2901, %v2837, %v2965
        %v3030 = vsel %vm2902, %v2838, %v2966
        %v3031 = vsel %vm2903, %v2839, %v2967
        %v3032 = vsel %vm2904, %v2840, %v2968
        %v3033 = vsel %vm2905, %v2841, %v2969
        %v3034 = vsel %vm2906, %v2842, %v2970
        %v3035 = vsel %vm2907, %v2843, %v2971
        %v3036 = vsel %vm2908, %v2844, %v2972
        %v3037 = vsel %vm2909, %v2845, %v2973
        %v3038 = vsel %vm2910, %v2846, %v2974
        %v3039 = vsel %vm2911, %v2847, %v2975
        %v3040 = vsel %vm2912, %v2848, %v2976
        %v3041 = vsel %vm2913, %v2849, %v2977
        %v3042 = vsel %vm2914, %v2850, %v2978
        %v3043 = vsel %vm2915, %v2851, %v2979
        %v3044 = vsel %vm2916, %v2852, %v2980
        %v3045 = vsel %vm2917, %v2853, %v2981
        %v3046 = vsel %vm2918, %v2854, %v2982
        %v3047 = vsel %vm2919, %v2855, %v2983
        %v3048 = vsel %vm2920, %v2856, %v2984
        %v3049 = vsel %vm2921, %v2857, %v2985
        %v3050 = vsel %vm2922, %v2858, %v2986
        %v3051 = vsel %vm2923, %v2859, %v2987
        %v3052 = vsel %vm2924, %v2860, %v2988
        %v3053 = vsel %vm2925, %v2861, %v2989
        %v3054 = vsel %vm2926, %v2862, %v2990
        %v3055 = vsel %vm2927, %v2863, %v2991
        %v3056 = vsel %vm2928, %v2864, %v2992
        %v3057 = vsel %vm2929, %v2865, %v2993
        %v3058 = vsel %vm2930, %v2866, %v2994
        %v3059 = vsel %vm2931, %v2867, %v2995
        %v3060 = vsel %vm2932, %v2868, %v2996
        %v3061 = vsel %vm2933, %v2869, %v2997
        %v3062 = vsel %vm2934, %v2870, %v2998
        %v3063 = vsel %vm2935, %v2871, %v2999
        %v3064 = vsel %vm2936, %v2872, %v3000
        %v3065 = vsel %vm2937, %v2873, %v3001
        %v3066 = vsel %vm2938, %v2874, %v3002
        %v3067 = vsel %vm2939, %v2875, %v3003
        %v3068 = vsel %vm2940, %v2876, %v3004
        %v3069 = vsel %vm2941, %v2877, %v3005
        %v3070 = vsel %vm2942, %v2878, %v3006
        %v3071 = vsel %vm2943, %v2879, %v3007
        %v3072 = vsel %vm2944, %v2880, %v3008
        %v3073 = vsel %vm2945, %v2881, %v3009
        %v3074 = vsel %vm2946, %v2882, %v3010
        %v3075 = vsel %vm2947, %v2883, %v3011
        %v3076 = vsel %vm2948, %v2884, %v3012
        %v3077 = vsel %vm2949, %v2885, %v3013
        %v3078 = vsel %vm2950, %v2886, %v3014
        %v3079 = vsel %vm2951, %v2887, %v3015
        %v3080 = vsel %vm2952, %v2888, %v3016
        %v3081 = vsel %vm2953, %v2889, %v3017
        %v3082 = vmul.f32 %v506, 0.5
        %v3083 = vmul.f32 %v619, 0.5
        %v3084 = vmul.f32 %v509, 0.5
        %v3085 = vmul.f32 %v622, 0.5
        %v3086 = vmul.f32 %v512, 0.5
        %v3087 = vmul.f32 %v625, 0.5
        %v3088 = vmul.f32 %v515, 0.5
        %v3089 = vmul.f32 %v628, 0.5
        %v3090 = vmul.f32 %v518, 0.5
        %v3091 = vmul.f32 %v631, 0.5
        %v3092 = vmul.f32 %v521, 0.5
        %v3093 = vmul.f32 %v634, 0.5
        %v3094 = vmul.f32 %v524, 0.5
        %v3095 = vmul.f32 %v637, 0.5
        %v3096 = vmul.f32 %v527, 0.5
        %v3097 = vmul.f32 %v640, 0.5
        %v3098 = vmul.f32 %v530, 0.5
        %v3099 = vmul.f32 %v643, 0.5
        %v3100 = vmul.f32 %v533, 0.5
        %v3101 = vmul.f32 %v646, 0.5
        %v3102 = vmul.f32 %v536, 0.5
        %v3103 = vmul.f32 %v649, 0.5
        %v3104 = vmul.f32 %v539, 0.5
        %v3105 = vmul.f32 %v652, 0.5
        %v3106 = vmul.f32 %v542, 0.5
        %v3107 = vmul.f32 %v655, 0.5
        %v3108 = vmul.f32 %v545, 0.5
        %v3109 = vmul.f32 %v658, 0.5
        %v3110 = vmul.f32 %v548, 0.5
        %v3111 = vmul.f32 %v661, 0.5
        %v3112 = vmul.f32 %v551, 0.5
        %v3113 = vmul.f32 %v664, 0.5
        %v3114 = vmul.f32 %v554, 0.5
        %v3115 = vmul.f32 %v667, 0.5
        %v3116 = vmul.f32 %v557, 0.5
        %v3117 = vmul.f32 %v670, 0.5
        %v3118 = vmul.f32 %v560, 0.5
        %v3119 = vmul.f32 %v673, 0.5
        %v3120 = vmul.f32 %v563, 0.5
        %v3121 = vmul.f32 %v676, 0.5
        %v3122 = vmul.f32 %v566, 0.5
        %v3123 = vmul.f32 %v679, 0.5
        %v3124 = vmul.f32 %v569, 0.5
        %v3125 = vmul.f32 %v682, 0.5
        %v3126 = vmul.f32 %v572, 0.5
        %v3127 = vmul.f32 %v685, 0.5
        %v3128 = vmul.f32 %v575, 0.5
        %v3129 = vmul.f32 %v688, 0.5
        %v3130 = vmul.f32 %v578, 0.5
        %v3131 = vmul.f32 %v691, 0.5
        %v3132 = vmul.f32 %v581, 0.5
        %v3133 = vmul.f32 %v694, 0.5
        %v3134 = vmul.f32 %v584, 0.5
        %v3135 = vmul.f32 %v697, 0.5
        %v3136 = vmul.f32 %v587, 0.5
        %v3137 = vmul.f32 %v700, 0.5
        %v3138 = vmul.f32 %v590, 0.5
        %v3139 = vmul.f32 %v703, 0.5
        %v3140 = vmul.f32 %v593, 0.5
        %v3141 = vmul.f32 %v706, 0.5
        %v3142 = vmul.f32 %v596, 0.5
        %v3143 = vmul.f32 %v709, 0.5
        %v3144 = vmul.f32 %v599, 0.5
        %v3145 = vmul.f32 %v712, 0.5
        %v3146 = vadd.f32 %v3018, 1.0
        %v3147 = vadd.f32 %v3019, 1.0
        %v3148 = vadd.f32 %v3020, 1.0
        %v3149 = vadd.f32 %v3021, 1.0
        %v3150 = vadd.f32 %v3022, 1.0
        %v3151 = vadd.f32 %v3023, 1.0
        %v3152 = vadd.f32 %v3024, 1.0
        %v3153 = vadd.f32 %v3025, 1.0
        %v3154 = vadd.f32 %v3026, 1.0
        %v3155 = vadd.f32 %v3027, 1.0
        %v3156 = vadd.f32 %v3028, 1.0
        %v3157 = vadd.f32 %v3029, 1.0
        %v3158 = vadd.f32 %v3030, 1.0
        %v3159 = vadd.f32 %v3031, 1.0
        %v3160 = vadd.f32 %v3032, 1.0
        %v3161 = vadd.f32 %v3033, 1.0
        %v3162 = vadd.f32 %v3034, 1.0
        %v3163 = vadd.f32 %v3035, 1.0
        %v3164 = vadd.f32 %v3036, 1.0
        %v3165 = vadd.f32 %v3037, 1.0
        %v3166 = vadd.f32 %v3038, 1.0
        %v3167 = vadd.f32 %v3039, 1.0
        %v3168 = vadd.f32 %v3040, 1.0
        %v3169 = vadd.f32 %v3041, 1.0
        %v3170 = vadd.f32 %v3042, 1.0
        %v3171 = vadd.f32 %v3043, 1.0
        %v3172 = vadd.f32 %v3044, 1.0
        %v3173 = vadd.f32 %v3045, 1.0
        %v3174 = vadd.f32 %v3046, 1.0
        %v3175 = vadd.f32 %v3047, 1.0
        %v3176 = vadd.f32 %v3048, 1.0
        %v3177 = vadd.f32 %v3049, 1.0
        %v3178 = vadd.f32 %v3050, 1.0
        %v3179 = vadd.f32 %v3051, 1.0
        %v3180 = vadd.f32 %v3052, 1.0
        %v3181 = vadd.f32 %v3053, 1.0
        %v3182 = vadd.f32 %v3054, 1.0
        %v3183 = vadd.f32 %v3055, 1.0
        %v3184 = vadd.f32 %v3056, 1.0
        %v3185 = vadd.f32 %v3057, 1.0
        %v3186 = vadd.f32 %v3058, 1.0
        %v3187 = vadd.f32 %v3059, 1.0
        %v3188 = vadd.f32 %v3060, 1.0
        %v3189 = vadd.f32 %v3061, 1.0
        %v3190 = vadd.f32 %v3062, 1.0
        %v3191 = vadd.f32 %v3063, 1.0
        %v3192 = vadd.f32 %v3064, 1.0
        %v3193 = vadd.f32 %v3065, 1.0
        %v3194 = vadd.f32 %v3066, 1.0
        %v3195 = vadd.f32 %v3067, 1.0
        %v3196 = vadd.f32 %v3068, 1.0
        %v3197 = vadd.f32 %v3069, 1.0
        %v3198 = vadd.f32 %v3070, 1.0
        %v3199 = vadd.f32 %v3071, 1.0
        %v3200 = vadd.f32 %v3072, 1.0
        %v3201 = vadd.f32 %v3073, 1.0
        %v3202 = vadd.f32 %v3074, 1.0
        %v3203 = vadd.f32 %v3075, 1.0
        %v3204 = vadd.f32 %v3076, 1.0
        %v3205 = vadd.f32 %v3077, 1.0
        %v3206 = vadd.f32 %v3078, 1.0
        %v3207 = vadd.f32 %v3079, 1.0
        %v3208 = vadd.f32 %v3080, 1.0
        %v3209 = vadd.f32 %v3081, 1.0
        %v3210 = vmul.f32 %v3082, %v3146
        %v3211 = vmul.f32 %v3083, %v3147
        %v3212 = vmul.f32 %v3084, %v3148
        %v3213 = vmul.f32 %v3085, %v3149
        %v3214 = vmul.f32 %v3086, %v3150
        %v3215 = vmul.f32 %v3087, %v3151
        %v3216 = vmul.f32 %v3088, %v3152
        %v3217 = vmul.f32 %v3089, %v3153
        %v3218 = vmul.f32 %v3090, %v3154
        %v3219 = vmul.f32 %v3091, %v3155
        %v3220 = vmul.f32 %v3092, %v3156
        %v3221 = vmul.f32 %v3093, %v3157
        %v3222 = vmul.f32 %v3094, %v3158
        %v3223 = vmul.f32 %v3095, %v3159
        %v3224 = vmul.f32 %v3096, %v3160
        %v3225 = vmul.f32 %v3097, %v3161
        %v3226 = vmul.f32 %v3098, %v3162
        %v3227 = vmul.f32 %v3099, %v3163
        %v3228 = vmul.f32 %v3100, %v3164
        %v3229 = vmul.f32 %v3101, %v3165
        %v3230 = vmul.f32 %v3102, %v3166
        %v3231 = vmul.f32 %v3103, %v3167
        %v3232 = vmul.f32 %v3104, %v3168
        %v3233 = vmul.f32 %v3105, %v3169
        %v3234 = vmul.f32 %v3106, %v3170
        %v3235 = vmul.f32 %v3107, %v3171
        %v3236 = vmul.f32 %v3108, %v3172
        %v3237 = vmul.f32 %v3109, %v3173
        %v3238 = vmul.f32 %v3110, %v3174
        %v3239 = vmul.f32 %v3111, %v3175
        %v3240 = vmul.f32 %v3112, %v3176
        %v3241 = vmul.f32 %v3113, %v3177
        %v3242 = vmul.f32 %v3114, %v3178
        %v3243 = vmul.f32 %v3115, %v3179
        %v3244 = vmul.f32 %v3116, %v3180
        %v3245 = vmul.f32 %v3117, %v3181
        %v3246 = vmul.f32 %v3118, %v3182
        %v3247 = vmul.f32 %v3119, %v3183
        %v3248 = vmul.f32 %v3120, %v3184
        %v3249 = vmul.f32 %v3121, %v3185
        %v3250 = vmul.f32 %v3122, %v3186
        %v3251 = vmul.f32 %v3123, %v3187
        %v3252 = vmul.f32 %v3124, %v3188
        %v3253 = vmul.f32 %v3125, %v3189
        %v3254 = vmul.f32 %v3126, %v3190
        %v3255 = vmul.f32 %v3127, %v3191
        %v3256 = vmul.f32 %v3128, %v3192
        %v3257 = vmul.f32 %v3129, %v3193
        %v3258 = vmul.f32 %v3130, %v3194
        %v3259 = vmul.f32 %v3131, %v3195
        %v3260 = vmul.f32 %v3132, %v3196
        %v3261 = vmul.f32 %v3133, %v3197
        %v3262 = vmul.f32 %v3134, %v3198
        %v3263 = vmul.f32 %v3135, %v3199
        %v3264 = vmul.f32 %v3136, %v3200
        %v3265 = vmul.f32 %v3137, %v3201
        %v3266 = vmul.f32 %v3138, %v3202
        %v3267 = vmul.f32 %v3139, %v3203
        %v3268 = vmul.f32 %v3140, %v3204
        %v3269 = vmul.f32 %v3141, %v3205
        %v3270 = vmul.f32 %v3142, %v3206
        %v3271 = vmul.f32 %v3143, %v3207
        %v3272 = vmul.f32 %v3144, %v3208
        %v3273 = vmul.f32 %v3145, %v3209
        %v3274 = vld [vmem:[#allocation2] sm:$0xff]
        %v3275 = vld [vmem:[#allocation2 + $0x8] sm:$0xff]
        %v3276 = vld [vmem:[#allocation2 + $0x10] sm:$0xff]
        %v3277 = vld [vmem:[#allocation2 + $0x18] sm:$0xff]
        %v3278 = vld [vmem:[#allocation2 + $0x20] sm:$0xff]
        %v3279 = vld [vmem:[#allocation2 + $0x28] sm:$0xff]
        %v3280 = vld [vmem:[#allocation2 + $0x30] sm:$0xff]
        %v3281 = vld [vmem:[#allocation2 + $0x38] sm:$0xff]
        %v3282 = vld [vmem:[#allocation2 + $0x40] sm:$0xff]
        %v3283 = vld [vmem:[#allocation2 + $0x48] sm:$0xff]
        %v3284 = vld [vmem:[#allocation2 + $0x50] sm:$0xff]
        %v3285 = vld [vmem:[#allocation2 + $0x58] sm:$0xff]
        %v3286 = vld [vmem:[#allocation2 + $0x60] sm:$0xff]
        %v3287 = vld [vmem:[#allocation2 + $0x68] sm:$0xff]
        %v3288 = vld [vmem:[#allocation2 + $0x70] sm:$0xff]
        %v3289 = vld [vmem:[#allocation2 + $0x78] sm:$0xff]
        %v3290 = vld [vmem:[#allocation2 + $0x80] sm:$0xff]
        %v3291 = vld [vmem:[#allocation2 + $0x88] sm:$0xff]
        %v3292 = vld [vmem:[#allocation2 + $0x90] sm:$0xff]
        %v3293 = vld [vmem:[#allocation2 + $0x98] sm:$0xff]
        %v3294 = vld [vmem:[#allocation2 + $0xa0] sm:$0xff]
        %v3295 = vld [vmem:[#allocation2 + $0xa8] sm:$0xff]
        %v3296 = vld [vmem:[#allocation2 + $0xb0] sm:$0xff]
        %v3297 = vld [vmem:[#allocation2 + $0xb8] sm:$0xff]
        %v3298 = vld [vmem:[#allocation2 + $0xc0] sm:$0xff]
        %v3299 = vld [vmem:[#allocation2 + $0xc8] sm:$0xff]
        %v3300 = vld [vmem:[#allocation2 + $0xd0] sm:$0xff]
        %v3301 = vld [vmem:[#allocation2 + $0xd8] sm:$0xff]
        %v3302 = vld [vmem:[#allocation2 + $0xe0] sm:$0xff]
        %v3303 = vld [vmem:[#allocation2 + $0xe8] sm:$0xff]
        %v3304 = vld [vmem:[#allocation2 + $0xf0] sm:$0xff]
        %v3305 = vld [vmem:[#allocation2 + $0xf8] sm:$0xff]
        %v3306 = vld [vmem:[%s334] sm:$0xff]
        %v3307 = vld [vmem:[%s334 + $0x8] sm:$0xff]
        %v3308 = vld [vmem:[%s334 + $0x10] sm:$0xff]
        %v3309 = vld [vmem:[%s334 + $0x18] sm:$0xff]
        %v3310 = vld [vmem:[%s334 + $0x20] sm:$0xff]
        %v3311 = vld [vmem:[%s334 + $0x28] sm:$0xff]
        %v3312 = vld [vmem:[%s334 + $0x30] sm:$0xff]
        %v3313 = vld [vmem:[%s334 + $0x38] sm:$0xff]
        %v3314 = vld [vmem:[%s334 + $0x40] sm:$0xff]
        %v3315 = vld [vmem:[%s334 + $0x48] sm:$0xff]
        %v3316 = vld [vmem:[%s334 + $0x50] sm:$0xff]
        %v3317 = vld [vmem:[%s334 + $0x58] sm:$0xff]
        %v3318 = vld [vmem:[%s334 + $0x60] sm:$0xff]
        %v3319 = vld [vmem:[%s334 + $0x68] sm:$0xff]
        %v3320 = vld [vmem:[%s334 + $0x70] sm:$0xff]
        %v3321 = vld [vmem:[%s334 + $0x78] sm:$0xff]
        %v3322 = vld [vmem:[%s334 + $0x80] sm:$0xff]
        %v3323 = vld [vmem:[%s334 + $0x88] sm:$0xff]
        %v3324 = vld [vmem:[%s334 + $0x90] sm:$0xff]
        %v3325 = vld [vmem:[%s334 + $0x98] sm:$0xff]
        %v3326 = vld [vmem:[%s334 + $0xa0] sm:$0xff]
        %v3327 = vld [vmem:[%s334 + $0xa8] sm:$0xff]
        %v3328 = vld [vmem:[%s334 + $0xb0] sm:$0xff]
        %v3329 = vld [vmem:[%s334 + $0xb8] sm:$0xff]
        %v3330 = vld [vmem:[%s334 + $0xc0] sm:$0xff]
        %v3331 = vld [vmem:[%s334 + $0xc8] sm:$0xff]
        %v3332 = vld [vmem:[%s334 + $0xd0] sm:$0xff]
        %v3333 = vld [vmem:[%s334 + $0xd8] sm:$0xff]
        %v3334 = vld [vmem:[%s334 + $0xe0] sm:$0xff]
        %v3335 = vld [vmem:[%s334 + $0xe8] sm:$0xff]
        %v3336 = vld [vmem:[%s334 + $0xf0] sm:$0xff]
        %v3337 = vld [vmem:[%s334 + $0xf8] sm:$0xff]
        %3338 = vmatpush.msra.mxu0 %v3321
        %3339 = vmatpush.msra.mxu0 %v3320
        %3340 = vmatpush.msra.mxu0 %v3319
        %3341 = vmatpush.msra.mxu0 %v3318
        %3342 = vmatpush.msra.mxu0 %v3317
        %3343 = vmatpush.msra.mxu0 %v3316
        %3344 = vmatpush.msra.mxu0 %v3315
        %3345 = vmatpush.msra.mxu0 %v3314
        %3346 = vmatpush.msra.mxu0 %v3313
        %3347 = vmatpush.msra.mxu0 %v3312
        %3348 = vmatpush.msra.mxu0 %v3311
        %3349 = vmatpush.msra.mxu0 %v3310
        %3350 = vmatpush.msra.mxu0 %v3309
        %3351 = vmatpush.msra.mxu0 %v3308
        %3352 = vmatpush.msra.mxu0 %v3307
        %3353 = vmatpush.msra.mxu0 %v3306
        %3354 = vmatmul.f32.gmra.mxu0 %v3210
        %v3355 = vpop.f32.mrf.mxu0
        %v3356 = vadd.f32 0.0, %v3355
        %3357 = vmatmul.f32.gmra.mxu0 %v3212
        %v3358 = vpop.f32.mrf.mxu0
        %v3359 = vadd.f32 0.0, %v3358
        %3360 = vmatmul.f32.gmra.mxu0 %v3214
        %v3361 = vpop.f32.mrf.mxu0
        %v3362 = vadd.f32 0.0, %v3361
        %3363 = vmatmul.f32.gmra.mxu0 %v3216
        %v3364 = vpop.f32.mrf.mxu0
        %v3365 = vadd.f32 0.0, %v3364
        %3366 = vmatmul.f32.gmra.mxu0 %v3218
        %v3367 = vpop.f32.mrf.mxu0
        %v3368 = vadd.f32 0.0, %v3367
        %3369 = vmatmul.f32.gmra.mxu0 %v3220
        %v3370 = vpop.f32.mrf.mxu0
        %v3371 = vadd.f32 0.0, %v3370
        %3372 = vmatmul.f32.gmra.mxu0 %v3222
        %v3373 = vpop.f32.mrf.mxu0
        %v3374 = vadd.f32 0.0, %v3373
        %3375 = vmatmul.f32.gmra.mxu0 %v3224
        %v3376 = vpop.f32.mrf.mxu0
        %v3377 = vadd.f32 0.0, %v3376
        %3378 = vmatmul.f32.gmra.mxu0 %v3226
        %v3379 = vpop.f32.mrf.mxu0
        %v3380 = vadd.f32 0.0, %v3379
        %3381 = vmatmul.f32.gmra.mxu0 %v3228
        %v3382 = vpop.f32.mrf.mxu0
        %v3383 = vadd.f32 0.0, %v3382
        %3384 = vmatmul.f32.gmra.mxu0 %v3230
        %v3385 = vpop.f32.mrf.mxu0
        %v3386 = vadd.f32 0.0, %v3385
        %3387 = vmatmul.f32.gmra.mxu0 %v3232
        %v3388 = vpop.f32.mrf.mxu0
        %v3389 = vadd.f32 0.0, %v3388
        %3390 = vmatmul.f32.gmra.mxu0 %v3234
        %v3391 = vpop.f32.mrf.mxu0
        %v3392 = vadd.f32 0.0, %v3391
        %3393 = vmatmul.f32.gmra.mxu0 %v3236
        %v3394 = vpop.f32.mrf.mxu0
        %v3395 = vadd.f32 0.0, %v3394
        %3396 = vmatmul.f32.gmra.mxu0 %v3238
        %v3397 = vpop.f32.mrf.mxu0
        %v3398 = vadd.f32 0.0, %v3397
        %3399 = vmatmul.f32.gmra.mxu0 %v3240
        %v3400 = vpop.f32.mrf.mxu0
        %v3401 = vadd.f32 0.0, %v3400
        %3402 = vmatmul.f32.gmra.mxu0 %v3242
        %v3403 = vpop.f32.mrf.mxu0
        %v3404 = vadd.f32 0.0, %v3403
        %3405 = vmatmul.f32.gmra.mxu0 %v3244
        %v3406 = vpop.f32.mrf.mxu0
        %v3407 = vadd.f32 0.0, %v3406
        %3408 = vmatmul.f32.gmra.mxu0 %v3246
        %v3409 = vpop.f32.mrf.mxu0
        %v3410 = vadd.f32 0.0, %v3409
        %3411 = vmatmul.f32.gmra.mxu0 %v3248
        %v3412 = vpop.f32.mrf.mxu0
        %v3413 = vadd.f32 0.0, %v3412
        %3414 = vmatmul.f32.gmra.mxu0 %v3250
        %v3415 = vpop.f32.mrf.mxu0
        %v3416 = vadd.f32 0.0, %v3415
        %3417 = vmatmul.f32.gmra.mxu0 %v3252
        %v3418 = vpop.f32.mrf.mxu0
        %v3419 = vadd.f32 0.0, %v3418
        %3420 = vmatmul.f32.gmra.mxu0 %v3254
        %v3421 = vpop.f32.mrf.mxu0
        %v3422 = vadd.f32 0.0, %v3421
        %3423 = vmatmul.f32.gmra.mxu0 %v3256
        %v3424 = vpop.f32.mrf.mxu0
        %v3425 = vadd.f32 0.0, %v3424
        %3426 = vmatmul.f32.gmra.mxu0 %v3258
        %v3427 = vpop.f32.mrf.mxu0
        %v3428 = vadd.f32 0.0, %v3427
        %3429 = vmatmul.f32.gmra.mxu0 %v3260
        %v3430 = vpop.f32.mrf.mxu0
        %v3431 = vadd.f32 0.0, %v3430
        %3432 = vmatmul.f32.gmra.mxu0 %v3262
        %v3433 = vpop.f32.mrf.mxu0
        %v3434 = vadd.f32 0.0, %v3433
        %3435 = vmatmul.f32.gmra.mxu0 %v3264
        %v3436 = vpop.f32.mrf.mxu0
        %v3437 = vadd.f32 0.0, %v3436
        %3438 = vmatmul.f32.gmra.mxu0 %v3266
        %v3439 = vpop.f32.mrf.mxu0
        %v3440 = vadd.f32 0.0, %v3439
        %3441 = vmatmul.f32.gmra.mxu0 %v3268
        %v3442 = vpop.f32.mrf.mxu0
        %v3443 = vadd.f32 0.0, %v3442
        %3444 = vmatmul.f32.gmra.mxu0 %v3270
        %v3445 = vpop.f32.mrf.mxu0
        %v3446 = vadd.f32 0.0, %v3445
        %3447 = vmatmul.f32.gmra.mxu0 %v3272
        %v3448 = vpop.f32.mrf.mxu0
        %v3449 = vadd.f32 0.0, %v3448
        %3450 = vdwg.mxu0
        %3451 = vmatpush.msra.mxu0 %v3337
        %3452 = vmatpush.msra.mxu0 %v3336
        %3453 = vmatpush.msra.mxu0 %v3335
        %3454 = vmatpush.msra.mxu0 %v3334
        %3455 = vmatpush.msra.mxu0 %v3333
        %3456 = vmatpush.msra.mxu0 %v3332
        %3457 = vmatpush.msra.mxu0 %v3331
        %3458 = vmatpush.msra.mxu0 %v3330
        %3459 = vmatpush.msra.mxu0 %v3329
        %3460 = vmatpush.msra.mxu0 %v3328
        %3461 = vmatpush.msra.mxu0 %v3327
        %3462 = vmatpush.msra.mxu0 %v3326
        %3463 = vmatpush.msra.mxu0 %v3325
        %3464 = vmatpush.msra.mxu0 %v3324
        %3465 = vmatpush.msra.mxu0 %v3323
        %3466 = vmatpush.msra.mxu0 %v3322
        %3467 = vmatmul.f32.gmra.mxu0 %v3211
        %v3468 = vpop.f32.mrf.mxu0
        %v3469 = vadd.f32 %v3356, %v3468
        %3470 = vmatmul.f32.gmra.mxu0 %v3213
        %v3471 = vpop.f32.mrf.mxu0
        %v3472 = vadd.f32 %v3359, %v3471
        %3473 = vmatmul.f32.gmra.mxu0 %v3215
        %v3474 = vpop.f32.mrf.mxu0
        %v3475 = vadd.f32 %v3362, %v3474
        %3476 = vmatmul.f32.gmra.mxu0 %v3217
        %v3477 = vpop.f32.mrf.mxu0
        %v3478 = vadd.f32 %v3365, %v3477
        %3479 = vmatmul.f32.gmra.mxu0 %v3219
        %v3480 = vpop.f32.mrf.mxu0
        %v3481 = vadd.f32 %v3368, %v3480
        %3482 = vmatmul.f32.gmra.mxu0 %v3221
        %v3483 = vpop.f32.mrf.mxu0
        %v3484 = vadd.f32 %v3371, %v3483
        %3485 = vmatmul.f32.gmra.mxu0 %v3223
        %v3486 = vpop.f32.mrf.mxu0
        %v3487 = vadd.f32 %v3374, %v3486
        %3488 = vmatmul.f32.gmra.mxu0 %v3225
        %v3489 = vpop.f32.mrf.mxu0
        %v3490 = vadd.f32 %v3377, %v3489
        %3491 = vmatmul.f32.gmra.mxu0 %v3227
        %v3492 = vpop.f32.mrf.mxu0
        %v3493 = vadd.f32 %v3380, %v3492
        %3494 = vmatmul.f32.gmra.mxu0 %v3229
        %v3495 = vpop.f32.mrf.mxu0
        %v3496 = vadd.f32 %v3383, %v3495
        %3497 = vmatmul.f32.gmra.mxu0 %v3231
        %v3498 = vpop.f32.mrf.mxu0
        %v3499 = vadd.f32 %v3386, %v3498
        %3500 = vmatmul.f32.gmra.mxu0 %v3233
        %v3501 = vpop.f32.mrf.mxu0
        %v3502 = vadd.f32 %v3389, %v3501
        %3503 = vmatmul.f32.gmra.mxu0 %v3235
        %v3504 = vpop.f32.mrf.mxu0
        %v3505 = vadd.f32 %v3392, %v3504
        %3506 = vmatmul.f32.gmra.mxu0 %v3237
        %v3507 = vpop.f32.mrf.mxu0
        %v3508 = vadd.f32 %v3395, %v3507
        %3509 = vmatmul.f32.gmra.mxu0 %v3239
        %v3510 = vpop.f32.mrf.mxu0
        %v3511 = vadd.f32 %v3398, %v3510
        %3512 = vmatmul.f32.gmra.mxu0 %v3241
        %v3513 = vpop.f32.mrf.mxu0
        %v3514 = vadd.f32 %v3401, %v3513
        %3515 = vmatmul.f32.gmra.mxu0 %v3243
        %v3516 = vpop.f32.mrf.mxu0
        %v3517 = vadd.f32 %v3404, %v3516
        %3518 = vmatmul.f32.gmra.mxu0 %v3245
        %v3519 = vpop.f32.mrf.mxu0
        %v3520 = vadd.f32 %v3407, %v3519
        %3521 = vmatmul.f32.gmra.mxu0 %v3247
        %v3522 = vpop.f32.mrf.mxu0
        %v3523 = vadd.f32 %v3410, %v3522
        %3524 = vmatmul.f32.gmra.mxu0 %v3249
        %v3525 = vpop.f32.mrf.mxu0
        %v3526 = vadd.f32 %v3413, %v3525
        %3527 = vmatmul.f32.gmra.mxu0 %v3251
        %v3528 = vpop.f32.mrf.mxu0
        %v3529 = vadd.f32 %v3416, %v3528
        %3530 = vmatmul.f32.gmra.mxu0 %v3253
        %v3531 = vpop.f32.mrf.mxu0
        %v3532 = vadd.f32 %v3419, %v3531
        %3533 = vmatmul.f32.gmra.mxu0 %v3255
        %v3534 = vpop.f32.mrf.mxu0
        %v3535 = vadd.f32 %v3422, %v3534
        %3536 = vmatmul.f32.gmra.mxu0 %v3257
        %v3537 = vpop.f32.mrf.mxu0
        %v3538 = vadd.f32 %v3425, %v3537
        %3539 = vmatmul.f32.gmra.mxu0 %v3259
        %v3540 = vpop.f32.mrf.mxu0
        %v3541 = vadd.f32 %v3428, %v3540
        %3542 = vmatmul.f32.gmra.mxu0 %v3261
        %v3543 = vpop.f32.mrf.mxu0
        %v3544 = vadd.f32 %v3431, %v3543
        %3545 = vmatmul.f32.gmra.mxu0 %v3263
        %v3546 = vpop.f32.mrf.mxu0
        %v3547 = vadd.f32 %v3434, %v3546
        %3548 = vmatmul.f32.gmra.mxu0 %v3265
        %v3549 = vpop.f32.mrf.mxu0
        %v3550 = vadd.f32 %v3437, %v3549
        %3551 = vmatmul.f32.gmra.mxu0 %v3267
        %v3552 = vpop.f32.mrf.mxu0
        %v3553 = vadd.f32 %v3440, %v3552
        %3554 = vmatmul.f32.gmra.mxu0 %v3269
        %v3555 = vpop.f32.mrf.mxu0
        %v3556 = vadd.f32 %v3443, %v3555
        %3557 = vmatmul.f32.gmra.mxu0 %v3271
        %v3558 = vpop.f32.mrf.mxu0
        %v3559 = vadd.f32 %v3446, %v3558
        %3560 = vmatmul.f32.gmra.mxu0 %v3273
        %v3561 = vpop.f32.mrf.mxu0
        %v3562 = vadd.f32 %v3449, %v3561
        %3563 = vdwg.mxu0
        %v3564 = vadd.f32 %v3274, %v3469
        %v3565 = vadd.f32 %v3275, %v3472
        %v3566 = vadd.f32 %v3276, %v3475
        %v3567 = vadd.f32 %v3277, %v3478
        %v3568 = vadd.f32 %v3278, %v3481
        %v3569 = vadd.f32 %v3279, %v3484
        %v3570 = vadd.f32 %v3280, %v3487
        %v3571 = vadd.f32 %v3281, %v3490
        %v3572 = vadd.f32 %v3282, %v3493
        %v3573 = vadd.f32 %v3283, %v3496
        %v3574 = vadd.f32 %v3284, %v3499
        %v3575 = vadd.f32 %v3285, %v3502
        %v3576 = vadd.f32 %v3286, %v3505
        %v3577 = vadd.f32 %v3287, %v3508
        %v3578 = vadd.f32 %v3288, %v3511
        %v3579 = vadd.f32 %v3289, %v3514
        %v3580 = vadd.f32 %v3290, %v3517
        %v3581 = vadd.f32 %v3291, %v3520
        %v3582 = vadd.f32 %v3292, %v3523
        %v3583 = vadd.f32 %v3293, %v3526
        %v3584 = vadd.f32 %v3294, %v3529
        %v3585 = vadd.f32 %v3295, %v3532
        %v3586 = vadd.f32 %v3296, %v3535
        %v3587 = vadd.f32 %v3297, %v3538
        %v3588 = vadd.f32 %v3298, %v3541
        %v3589 = vadd.f32 %v3299, %v3544
        %v3590 = vadd.f32 %v3300, %v3547
        %v3591 = vadd.f32 %v3301, %v3550
        %v3592 = vadd.f32 %v3302, %v3553
        %v3593 = vadd.f32 %v3303, %v3556
        %v3594 = vadd.f32 %v3304, %v3559
        %v3595 = vadd.f32 %v3305, %v3562
        %3596 = vst [vmem:[#allocation2] sm:$0xff] %v3564
        %3597 = vst [vmem:[#allocation2 + $0x8] sm:$0xff] %v3565
        %3598 = vst [vmem:[#allocation2 + $0x10] sm:$0xff] %v3566
        %3599 = vst [vmem:[#allocation2 + $0x18] sm:$0xff] %v3567
        %3600 = vst [vmem:[#allocation2 + $0x20] sm:$0xff] %v3568
        %3601 = vst [vmem:[#allocation2 + $0x28] sm:$0xff] %v3569
        %3602 = vst [vmem:[#allocation2 + $0x30] sm:$0xff] %v3570
        %3603 = vst [vmem:[#allocation2 + $0x38] sm:$0xff] %v3571
        %3604 = vst [vmem:[#allocation2 + $0x40] sm:$0xff] %v3572
        %3605 = vst [vmem:[#allocation2 + $0x48] sm:$0xff] %v3573
        %3606 = vst [vmem:[#allocation2 + $0x50] sm:$0xff] %v3574
        %3607 = vst [vmem:[#allocation2 + $0x58] sm:$0xff] %v3575
        %3608 = vst [vmem:[#allocation2 + $0x60] sm:$0xff] %v3576
        %3609 = vst [vmem:[#allocation2 + $0x68] sm:$0xff] %v3577
        %3610 = vst [vmem:[#allocation2 + $0x70] sm:$0xff] %v3578
        %3611 = vst [vmem:[#allocation2 + $0x78] sm:$0xff] %v3579
        %3612 = vst [vmem:[#allocation2 + $0x80] sm:$0xff] %v3580
        %3613 = vst [vmem:[#allocation2 + $0x88] sm:$0xff] %v3581
        %3614 = vst [vmem:[#allocation2 + $0x90] sm:$0xff] %v3582
        %3615 = vst [vmem:[#allocation2 + $0x98] sm:$0xff] %v3583
        %3616 = vst [vmem:[#allocation2 + $0xa0] sm:$0xff] %v3584
        %3617 = vst [vmem:[#allocation2 + $0xa8] sm:$0xff] %v3585
        %3618 = vst [vmem:[#allocation2 + $0xb0] sm:$0xff] %v3586
        %3619 = vst [vmem:[#allocation2 + $0xb8] sm:$0xff] %v3587
        %3620 = vst [vmem:[#allocation2 + $0xc0] sm:$0xff] %v3588
        %3621 = vst [vmem:[#allocation2 + $0xc8] sm:$0xff] %v3589
        %3622 = vst [vmem:[#allocation2 + $0xd0] sm:$0xff] %v3590
        %3623 = vst [vmem:[#allocation2 + $0xd8] sm:$0xff] %v3591
        %3624 = vst [vmem:[#allocation2 + $0xe0] sm:$0xff] %v3592
        %3625 = vst [vmem:[#allocation2 + $0xe8] sm:$0xff] %v3593
        %3626 = vst [vmem:[#allocation2 + $0xf0] sm:$0xff] %v3594
        %3627 = vst [vmem:[#allocation2 + $0xf8] sm:$0xff] %v3595
        %p3628 = scmp.eq.s32.totalorder %s33, 1
        // Predicated region
        $region61: #{tpu_custom_call.1} parent=39 // pred_check
          %p3629 = pneg %p3628
        $region62: #{tpu_custom_call.1} parent=39 // pred_check_branch
          %3631 = sbr.rel (%p3629) target = $region64
        $region63: #{tpu_custom_call.1} parent=39 // pred_region
          %v3632 = vld [vmem:[#allocation2] sm:$0xff]
          %v3633 = vld [vmem:[#allocation2 + $0x8] sm:$0xff]
          %v3634 = vld [vmem:[#allocation2 + $0x10] sm:$0xff]
          %v3635 = vld [vmem:[#allocation2 + $0x18] sm:$0xff]
          %v3636 = vld [vmem:[#allocation2 + $0x20] sm:$0xff]
          %v3637 = vld [vmem:[#allocation2 + $0x28] sm:$0xff]
          %v3638 = vld [vmem:[#allocation2 + $0x30] sm:$0xff]
          %v3639 = vld [vmem:[#allocation2 + $0x38] sm:$0xff]
          %v3640 = vld [vmem:[#allocation2 + $0x40] sm:$0xff]
          %v3641 = vld [vmem:[#allocation2 + $0x48] sm:$0xff]
          %v3642 = vld [vmem:[#allocation2 + $0x50] sm:$0xff]
          %v3643 = vld [vmem:[#allocation2 + $0x58] sm:$0xff]
          %v3644 = vld [vmem:[#allocation2 + $0x60] sm:$0xff]
          %v3645 = vld [vmem:[#allocation2 + $0x68] sm:$0xff]
          %v3646 = vld [vmem:[#allocation2 + $0x70] sm:$0xff]
          %v3647 = vld [vmem:[#allocation2 + $0x78] sm:$0xff]
          %v3648 = vld [vmem:[#allocation2 + $0x80] sm:$0xff]
          %v3649 = vld [vmem:[#allocation2 + $0x88] sm:$0xff]
          %v3650 = vld [vmem:[#allocation2 + $0x90] sm:$0xff]
          %v3651 = vld [vmem:[#allocation2 + $0x98] sm:$0xff]
          %v3652 = vld [vmem:[#allocation2 + $0xa0] sm:$0xff]
          %v3653 = vld [vmem:[#allocation2 + $0xa8] sm:$0xff]
          %v3654 = vld [vmem:[#allocation2 + $0xb0] sm:$0xff]
          %v3655 = vld [vmem:[#allocation2 + $0xb8] sm:$0xff]
          %v3656 = vld [vmem:[#allocation2 + $0xc0] sm:$0xff]
          %v3657 = vld [vmem:[#allocation2 + $0xc8] sm:$0xff]
          %v3658 = vld [vmem:[#allocation2 + $0xd0] sm:$0xff]
          %v3659 = vld [vmem:[#allocation2 + $0xd8] sm:$0xff]
          %v3660 = vld [vmem:[#allocation2 + $0xe0] sm:$0xff]
          %v3661 = vld [vmem:[#allocation2 + $0xe8] sm:$0xff]
          %v3662 = vld [vmem:[#allocation2 + $0xf0] sm:$0xff]
          %v3663 = vld [vmem:[#allocation2 + $0xf8] sm:$0xff]
          %v3664 = vld [vmem:[%s4] sm:$0x1]
          %v3666 = vperm.slane %v3664, 0
          %v3668 = vadd.f32 %v3632, %v3666
          %v3669 = vadd.f32 %v3633, %v3666
          %v3670 = vadd.f32 %v3634, %v3666
          %v3671 = vadd.f32 %v3635, %v3666
          %v3672 = vadd.f32 %v3636, %v3666
          %v3673 = vadd.f32 %v3637, %v3666
          %v3674 = vadd.f32 %v3638, %v3666
          %v3675 = vadd.f32 %v3639, %v3666
          %v3676 = vadd.f32 %v3640, %v3666
          %v3677 = vadd.f32 %v3641, %v3666
          %v3678 = vadd.f32 %v3642, %v3666
          %v3679 = vadd.f32 %v3643, %v3666
          %v3680 = vadd.f32 %v3644, %v3666
          %v3681 = vadd.f32 %v3645, %v3666
          %v3682 = vadd.f32 %v3646, %v3666
          %v3683 = vadd.f32 %v3647, %v3666
          %v3684 = vadd.f32 %v3648, %v3666
          %v3685 = vadd.f32 %v3649, %v3666
          %v3686 = vadd.f32 %v3650, %v3666
          %v3687 = vadd.f32 %v3651, %v3666
          %v3688 = vadd.f32 %v3652, %v3666
          %v3689 = vadd.f32 %v3653, %v3666
          %v3690 = vadd.f32 %v3654, %v3666
          %v3691 = vadd.f32 %v3655, %v3666
          %v3692 = vadd.f32 %v3656, %v3666
          %v3693 = vadd.f32 %v3657, %v3666
          %v3694 = vadd.f32 %v3658, %v3666
          %v3695 = vadd.f32 %v3659, %v3666
          %v3696 = vadd.f32 %v3660, %v3666
          %v3697 = vadd.f32 %v3661, %v3666
          %v3698 = vadd.f32 %v3662, %v3666
          %v3699 = vadd.f32 %v3663, %v3666
          %3700 = vst [vmem:[%s376] sm:$0xff] %v3668
          %3701 = vst [vmem:[%s376 + $0x8] sm:$0xff] %v3669
          %3702 = vst [vmem:[%s376 + $0x10] sm:$0xff] %v3670
          %3703 = vst [vmem:[%s376 + $0x18] sm:$0xff] %v3671
          %3704 = vst [vmem:[%s376 + $0x20] sm:$0xff] %v3672
          %3705 = vst [vmem:[%s376 + $0x28] sm:$0xff] %v3673
          %3706 = vst [vmem:[%s376 + $0x30] sm:$0xff] %v3674
          %3707 = vst [vmem:[%s376 + $0x38] sm:$0xff] %v3675
          %3708 = vst [vmem:[%s376 + $0x40] sm:$0xff] %v3676
          %3709 = vst [vmem:[%s376 + $0x48] sm:$0xff] %v3677
          %3710 = vst [vmem:[%s376 + $0x50] sm:$0xff] %v3678
          %3711 = vst [vmem:[%s376 + $0x58] sm:$0xff] %v3679
          %3712 = vst [vmem:[%s376 + $0x60] sm:$0xff] %v3680
          %3713 = vst [vmem:[%s376 + $0x68] sm:$0xff] %v3681
          %3714 = vst [vmem:[%s376 + $0x70] sm:$0xff] %v3682
          %3715 = vst [vmem:[%s376 + $0x78] sm:$0xff] %v3683
          %3716 = vst [vmem:[%s376 + $0x80] sm:$0xff] %v3684
          %3717 = vst [vmem:[%s376 + $0x88] sm:$0xff] %v3685
          %3718 = vst [vmem:[%s376 + $0x90] sm:$0xff] %v3686
          %3719 = vst [vmem:[%s376 + $0x98] sm:$0xff] %v3687
          %3720 = vst [vmem:[%s376 + $0xa0] sm:$0xff] %v3688
          %3721 = vst [vmem:[%s376 + $0xa8] sm:$0xff] %v3689
          %3722 = vst [vmem:[%s376 + $0xb0] sm:$0xff] %v3690
          %3723 = vst [vmem:[%s376 + $0xb8] sm:$0xff] %v3691
          %3724 = vst [vmem:[%s376 + $0xc0] sm:$0xff] %v3692
          %3725 = vst [vmem:[%s376 + $0xc8] sm:$0xff] %v3693
          %3726 = vst [vmem:[%s376 + $0xd0] sm:$0xff] %v3694
          %3727 = vst [vmem:[%s376 + $0xd8] sm:$0xff] %v3695
          %3728 = vst [vmem:[%s376 + $0xe0] sm:$0xff] %v3696
          %3729 = vst [vmem:[%s376 + $0xe8] sm:$0xff] %v3697
          %3730 = vst [vmem:[%s376 + $0xf0] sm:$0xff] %v3698
          %3731 = vst [vmem:[%s376 + $0xf8] sm:$0xff] %v3699
        $region64: #{tpu_custom_call.1} parent=39 // pred_fallthru
          _
        %s3732 = sand.u32 %s173, 1
        %s3733 = scalar_lea.sflag [#allocation5], %s3732
        %s3734 = sand.u32 %s173, 1
        %s3735 = smul.addr %s3734, 256
        %s3736 = scalar_lea.vmem [#allocation11], %s3735
        // Predicated region
        $region65: #{tpu_custom_call.1} parent=39 // pred_check
          %p3737 = pneg %p183
        $region66: #{tpu_custom_call.1} parent=39 // pred_check_branch
          %3739 = sbr.rel (%p3737) target = $region68
        $region67: #{tpu_custom_call.1} parent=39 // pred_region
          %s3740 = smul.u32 32, %s32
          %3742 = vsyncadd %s3733, 0
          %s3743 = smul.addr %s3740, 8
          %s3744 = scalar_lea.hbm %s5, %s3743
          %s3745 = sshll.u32 %s3736, 4
          %s3746 = int_to_ptr.vmem [resolvable:$true] %s3745
          %s3747 = sshll.u32 %s3744, 4
          %s3748 = int_to_ptr.hbm [resolvable:$true] %s3747
          %3753 = dma.vmem_to_hbm [thread:$0]  %s3746, 4096, %s3748, %s3733, 128, 128, 8
        $region68: #{tpu_custom_call.1} parent=39 // pred_fallthru
          _
      $region40: #{tpu_custom_call.1} parent=5 // pred_fallthru
        _
      %p3754 = scmp.le.s32.totalorder 2, %s23
      // Predicated region
      $region69: #{tpu_custom_call.1} parent=5 // pred_check
        %p3755 = pneg %p3754
      $region70: #{tpu_custom_call.1} parent=5 // pred_check_branch
        %3757 = sbr.rel (%p3755) target = $region72
      $region71: #{tpu_custom_call.1} parent=5 // pred_region
        %s3758 = ssub.s32 %s23, 2
        // Predicated region
        $region73: #{tpu_custom_call.1} parent=71 // pred_check
          %p3759 = pneg %p189
        $region74: #{tpu_custom_call.1} parent=71 // pred_check_branch
          %3761 = sbr.rel (%p3759) target = $region76
        $region75: #{tpu_custom_call.1} parent=71 // pred_region
          %s3762 = sand.u32 %s174, 1
          %s3763 = scalar_lea.sflag [#allocation5], %s3762
          %s3764 = sand.u32 %s174, 1
          %s3765 = smul.addr %s3764, 256
          %s3766 = scalar_lea.vmem [#allocation11], %s3765
          %3768 = dma.done %s3763, 4096
        $region76: #{tpu_custom_call.1} parent=71 // pred_fallthru
          _
      $region72: #{tpu_custom_call.1} parent=5 // pred_fallthru
        _
    $region6: #{tpu_custom_call.1} parent=1 // loop_footer
      %s27 = sadd.s32 1, %s23
    $region7: #{tpu_custom_call.1} parent=1 // loop_footer_branch
      %22 = sbr.rel target = $region3
    $region8: #{tpu_custom_call.1} parent=1 // loop_exit
      _
    %3769 = vsyncpa [#allocation4], 1
    %s3770 = scalar_lea.sflag [#allocation4], 1
    %3771 = vsyncpa %s3770, 1
    %3772 = vsyncpa [#allocation7], 1
    %s3773 = scalar_lea.sflag [#allocation7], 1
    %3774 = vsyncpa %s3773, 1
    %3775 = vsyncpa [#allocation10], 1
    %s3776 = scalar_lea.sflag [#allocation10], 1
    %3777 = vsyncpa %s3776, 1
    %3778 = vsyncpa [#allocation5], 1
    %s3779 = scalar_lea.sflag [#allocation5], 1
    %3780 = vsyncpa %s3779, 1

</llo_original>
